<compile_context>
chip_gen: v7x
topology: tpu7x:2x2x1
jax: 0.10.0
libtpu: 0.0.40
codegen_flags: <defaults>
</compile_context>

<pallas_src>
import math
from functools import partial

import jax
import jax.numpy as jnp
from jax.experimental import pallas as pl
from jax.experimental.pallas import tpu as pltpu

# MXU operand dtype; accumulation is always f32 via preferred_element_type.
MATMUL_DTYPE = jnp.bfloat16


# ----------------------------------------------------------------------------
# In-kernel helpers
# ----------------------------------------------------------------------------

def _mm(a_bf16, w_bf16):
    """Matmul with bf16 operands, f32 accumulation."""
    return jnp.dot(a_bf16, w_bf16, preferred_element_type=jnp.float32)


def _layernorm(x, g, b, eps=1e-5):
    mu = jnp.mean(x, axis=-1, keepdims=True)
    var = jnp.mean((x - mu) ** 2, axis=-1, keepdims=True)
    return (x - mu) * jax.lax.rsqrt(var + eps) * g + b


def _mha(q_in, k_in, v_in, wq, wk, wv, wo, bq, bk, bv, bo, *, nhead, scale):
    """PyTorch nn.MultiheadAttention (no mask, eval mode).

    q_in: (L, D) f32; k_in/v_in: (S, D) f32.
    wq/wk/wv/wo: (D, D) bf16 (pre-transposed).  bq/bk/bv/bo: (1, D) f32.
    Full-width projections; per-head score/context via static lane slices.
    """
    # Cast activations to bf16 once (hoisted; avoid re-casting shared inputs).
    q_c = q_in.astype(MATMUL_DTYPE)
    k_c = q_c if (k_in is q_in) else k_in.astype(MATMUL_DTYPE)
    if v_in is q_in:
        v_c = q_c
    elif v_in is k_in:
        v_c = k_c
    else:
        v_c = v_in.astype(MATMUL_DTYPE)

    # Full (D, D) projections -> f32, scale applied in f32 (PyTorch: (xWq+b)*s).
    q = (_mm(q_c, wq) + bq) * scale
    k = _mm(k_c, wk) + bk
    v = _mm(v_c, wv) + bv
    q = q.astype(MATMUL_DTYPE)
    k = k.astype(MATMUL_DTYPE)
    v = v.astype(MATMUL_DTYPE)

    d_model = q.shape[-1]
    hd = d_model // nhead
    ctx_heads = []
    for h in range(nhead):                      # short static loop (tiny ops)
        sl = slice(h * hd, (h + 1) * hd)
        # scores = q_h @ k_h^T  (contract head dim directly; no transpose)
        s = jax.lax.dot_general(q[:, sl], k[:, sl],
                                (((1,), (1,)), ((), ())),
                                preferred_element_type=jnp.float32)
        s = s - jnp.max(s, axis=-1, keepdims=True)
        p = jnp.exp(s)
        p = p * pl.reciprocal(jnp.sum(p, axis=-1, keepdims=True), approx=True)
        ctx_heads.append(_mm(p.astype(MATMUL_DTYPE), v[:, sl]))   # (L, hd) f32

    ctx = jnp.concatenate(ctx_heads, axis=-1)                      # (L, D)
    return _mm(ctx.astype(MATMUL_DTYPE), wo) + bo


# ----------------------------------------------------------------------------
# Fused stack kernels (ONE pallas_call per encoder / decoder stack)
# ----------------------------------------------------------------------------
# Encoder per-layer coalesced vectors (rows of `vecs`):
#   0..3: bq, bk, bv, bo   4: b2   5..10: ln1g, ln1b, ln2g, ln2b, ln3g, ln3b
# Decoder per-layer coalesced vectors:
#   0..3: self  bq,bk,bv,bo   4..7: cross bq,bk,bv,bo   8: b2
#   9..14: ln1g, ln1b, ln2g, ln2b, ln3g, ln3b

def _encoder_stack_kernel(curr_ref, hist_ref, pos_ref,
                          attn_w_ref, vecs_ref, w1_ref, b1_ref, w2_ref,
                          out_ref, *, nhead, scale):
    layer = pl.program_id(1)

    @pl.when(layer == 0)
    def _():
        out_ref[0] = curr_ref[0]          # seed the carried activation state

    x = out_ref[0]                        # (L, D) f32, resident across layers
    hist = hist_ref[0]
    pos = pos_ref[0]

    wq = attn_w_ref[0, 0]
    wk = attn_w_ref[0, 1]
    wv = attn_w_ref[0, 2]
    wo = attn_w_ref[0, 3]
    vec = vecs_ref[0]                     # (11, D) f32
    bq, bk, bv, bo = vec[0:1], vec[1:2], vec[2:3], vec[3:4]
    b2 = vec[4:5]
    ln1g, ln1b = vec[5:6], vec[6:7]
    ln2g, ln2b = vec[7:8], vec[8:9]
    ln3g, ln3b = vec[9:10], vec[10:11]

    # attention 1: q = x + pos, k = hist + pos, v = hist  (shared self_attn w)
    attn = _mha(x + pos, hist + pos, hist, wq, wk, wv, wo, bq, bk, bv, bo,
                nhead=nhead, scale=scale)
    x = _layernorm(x + attn, ln1g, ln1b)

    # attention 2: q = k = x + pos, v = x
    qk = x + pos
    attn = _mha(qk, qk, x, wq, wk, wv, wo, bq, bk, bv, bo,
                nhead=nhead, scale=scale)
    x = _layernorm(x + attn, ln2g, ln2b)

    # FFN: linear1 -> ReLU -> linear2 -> +residual -> LN
    h = jnp.maximum(_mm(x.astype(MATMUL_DTYPE), w1_ref[0]) + b1_ref[0], 0.0)
    r = _mm(h.astype(MATMUL_DTYPE), w2_ref[0]) + b2
    x = _layernorm(x + r, ln3g, ln3b)

    out_ref[0] = x


def _decoder_stack_kernel(mem_ref, pos_ref, qpos_ref,
                          sattn_w_ref, cattn_w_ref, vecs_ref,
                          w1_ref, b1_ref, w2_ref, norm_ref,
                          out_ref, *, nhead, scale):
    layer = pl.program_id(1)
    n_layers = pl.num_programs(1)

    @pl.when(layer == 0)
    def _():
        out_ref[...] = jnp.zeros(out_ref.shape, out_ref.dtype)   # tgt = zeros

    tgt = out_ref[0]                      # (Q, D) f32, resident across layers
    mem = mem_ref[0]                      # (S, D)
    pos = pos_ref[0]
    qpos = qpos_ref[...]                  # (Q, D), same for every batch

    vec = vecs_ref[0]                     # (15, D) f32
    s_bq, s_bk, s_bv, s_bo = vec[0:1], vec[1:2], vec[2:3], vec[3:4]
    c_bq, c_bk, c_bv, c_bo = vec[4:5], vec[5:6], vec[6:7], vec[7:8]
    b2 = vec[8:9]
    ln1g, ln1b = vec[9:10], vec[10:11]
    ln2g, ln2b = vec[11:12], vec[12:13]
    ln3g, ln3b = vec[13:14], vec[14:15]

    # self-attention: q = k = tgt + qpos, v = tgt
    qk = tgt + qpos
    t2 = _mha(qk, qk, tgt,
              sattn_w_ref[0, 0], sattn_w_ref[0, 1],
              sattn_w_ref[0, 2], sattn_w_ref[0, 3],
              s_bq, s_bk, s_bv, s_bo, nhead=nhead, scale=scale)
    tgt = _layernorm(tgt + t2, ln1g, ln1b)

    # cross-attention: q = tgt + qpos, k = mem + pos, v = mem
    t2 = _mha(tgt + qpos, mem + pos, mem,
              cattn_w_ref[0, 0], cattn_w_ref[0, 1],
              cattn_w_ref[0, 2], cattn_w_ref[0, 3],
              c_bq, c_bk, c_bv, c_bo, nhead=nhead, scale=scale)
    tgt = _layernorm(tgt + t2, ln2g, ln2b)

    # FFN
    h = jnp.maximum(_mm(tgt.astype(MATMUL_DTYPE), w1_ref[0]) + b1_ref[0], 0.0)
    r = _mm(h.astype(MATMUL_DTYPE), w2_ref[0]) + b2
    tgt = _layernorm(tgt + r, ln3g, ln3b)

    @pl.when(layer < n_layers - 1)
    def _():
        out_ref[0] = tgt

    @pl.when(layer == n_layers - 1)       # fused final decoder LayerNorm
    def _():
        nrm = norm_ref[...]               # (2, D): [gain; offset]
        out_ref[0] = _layernorm(tgt, nrm[0:1], nrm[1:2])


# ----------------------------------------------------------------------------
# pallas_call wrappers
# ----------------------------------------------------------------------------

def encoder_stack_fwd(curr, hist, pos, ep, nhead):
    """curr/hist/pos: (B, L, D) f32 -> encoder memory (B, L, D) f32."""
    B, L, D = curr.shape
    n_layers = ep["attn_w"].shape[0]
    dim_ff = ep["w1"].shape[-1]
    scale = 1.0 / math.sqrt(D // nhead)
    act_spec = pl.BlockSpec((1, L, D), lambda b, l: (b, 0, 0))
    return pl.pallas_call(
        partial(_encoder_stack_kernel, nhead=nhead, scale=scale),
        out_shape=jax.ShapeDtypeStruct((B, L, D), jnp.float32),
        grid=(B, n_layers),
        in_specs=[
            act_spec, act_spec, act_spec,
            pl.BlockSpec((1, 4, D, D), lambda b, l: (l, 0, 0, 0)),
            pl.BlockSpec((1, 11, D), lambda b, l: (l, 0, 0)),
            pl.BlockSpec((1, D, dim_ff), lambda b, l: (l, 0, 0)),
            pl.BlockSpec((1, 1, dim_ff), lambda b, l: (l, 0, 0)),
            pl.BlockSpec((1, dim_ff, D), lambda b, l: (l, 0, 0)),
        ],
        out_specs=pl.BlockSpec((1, L, D), lambda b, l: (b, 0, 0)),
        compiler_params=pltpu.CompilerParams(
            dimension_semantics=("parallel", "arbitrary")),
    )(curr, hist, pos, ep["attn_w"], ep["vecs"], ep["w1"], ep["b1"], ep["w2"])


def decoder_stack_fwd(memory, pos, query_embed, dp, dec_norm, nhead):
    """memory/pos: (B, S, D); query_embed: (Q, D) -> hs (B, Q, D) (final LN applied)."""
    B, S, D = memory.shape
    Q = query_embed.shape[0]
    n_layers = dp["sattn_w"].shape[0]
    dim_ff = dp["w1"].shape[-1]
    scale = 1.0 / math.sqrt(D // nhead)
    mem_spec = pl.BlockSpec((1, S, D), lambda b, l: (b, 0, 0))
    return pl.pallas_call(
        partial(_decoder_stack_kernel, nhead=nhead, scale=scale),
        out_shape=jax.ShapeDtypeStruct((B, Q, D), jnp.float32),
        grid=(B, n_layers),
        in_specs=[
            mem_spec, mem_spec,
            pl.BlockSpec((Q, D), lambda b, l: (0, 0)),
            pl.BlockSpec((1, 4, D, D), lambda b, l: (l, 0, 0, 0)),
            pl.BlockSpec((1, 4, D, D), lambda b, l: (l, 0, 0, 0)),
            pl.BlockSpec((1, 15, D), lambda b, l: (l, 0, 0)),
            pl.BlockSpec((1, D, dim_ff), lambda b, l: (l, 0, 0)),
            pl.BlockSpec((1, 1, dim_ff), lambda b, l: (l, 0, 0)),
            pl.BlockSpec((1, dim_ff, D), lambda b, l: (l, 0, 0)),
            pl.BlockSpec((2, D), lambda b, l: (0, 0)),
        ],
        out_specs=pl.BlockSpec((1, Q, D), lambda b, l: (b, 0, 0)),
        compiler_params=pltpu.CompilerParams(
            dimension_semantics=("parallel", "arbitrary")),
    )(memory, pos, query_embed, dp["sattn_w"], dp["cattn_w"], dp["vecs"],
      dp["w1"], dp["b1"], dp["w2"], dec_norm)


# ----------------------------------------------------------------------------
# Model orchestration (batch-first; equivalent to the reference permute dance)
# ----------------------------------------------------------------------------

def transformer_forward(params, curr_echo, hist_echo, query_embed, pos_embed, nhead):
    memory = encoder_stack_fwd(curr_echo, hist_echo, pos_embed, params["enc"], nhead)
    hs = decoder_stack_fwd(memory, pos_embed, query_embed, params["dec"],
                           params["dec_norm"], nhead)
    # reference: hs.unsqueeze(0).permute(0, 2, 1, 3) -> (1, B, Q, D)
    return hs[None]


# ----------------------------------------------------------------------------
# Parameter construction (xavier-uniform matrices; matmul weights stored
# pre-transposed in bf16; per-layer params stacked along a leading layer axis;
# small vectors coalesced)
# ----------------------------------------------------------------------------

def _xavier(key, shape):
    fan_out, fan_in = shape
    a = math.sqrt(6.0 / (fan_in + fan_out))
    return jax.random.uniform(key, shape, jnp.float32, -a, a)


def _attn_params(key, d_model):
    k1, k2 = jax.random.split(key)
    in_w = _xavier(k1, (3 * d_model, d_model))          # PyTorch layout (3D, D)
    out_w = _xavier(k2, (d_model, d_model))
    w = jnp.stack([in_w[:d_model].T,
                   in_w[d_model:2 * d_model].T,
                   in_w[2 * d_model:].T,
                   out_w.T]).astype(MATMUL_DTYPE)       # (4, D, D): wq,wk,wv,wo
    b = jnp.zeros((4, d_model), jnp.float32)            # PyTorch zero-init biases
    return w, b


def _ln_rows(d_model):
    g = jnp.ones((d_model,), jnp.float32)
    z = jnp.zeros((d_model,), jnp.float32)
    return jnp.stack([g, z, g, z, g, z])                # (6, D): ln1g..ln3b


def _encoder_layer_params(key, d_model, dim_ff):
    k0, k1, k2 = jax.random.split(key, 3)
    attn_w, attn_b = _attn_params(k0, d_model)
    w1 = _xavier(k1, (dim_ff, d_model)).T.astype(MATMUL_DTYPE)   # (D, F)
    w2 = _xavier(k2, (d_model, dim_ff)).T.astype(MATMUL_DTYPE)   # (F, D)
    b1 = jnp.zeros((1, dim_ff), jnp.float32)
    b2 = jnp.zeros((1, d_model), jnp.float32)
    vecs = jnp.concatenate([attn_b, b2, _ln_rows(d_model)], axis=0)  # (11, D)
    return attn_w, vecs, w1, b1, w2


def _decoder_layer_params(key, d_model, dim_ff):
    k0, k1, k2, k3 = jax.random.split(key, 4)
    s_w, s_b = _attn_params(k0, d_model)
    c_w, c_b = _attn_params(k1, d_model)
    w1 = _xavier(k2, (dim_ff, d_model)).T.astype(MATMUL_DTYPE)
    w2 = _xavier(k3, (d_model, dim_ff)).T.astype(MATMUL_DTYPE)
    b1 = jnp.zeros((1, dim_ff), jnp.float32)
    b2 = jnp.zeros((1, d_model), jnp.float32)
    vecs = jnp.concatenate([s_b, c_b, b2, _ln_rows(d_model)], axis=0)  # (15, D)
    return s_w, c_w, vecs, w1, b1, w2


def make_params(key, d_model, dim_ff, num_enc, num_dec):
    keys = jax.random.split(key, num_enc + num_dec)
    enc_layers = [_encoder_layer_params(keys[i], d_model, dim_ff)
                  for i in range(num_enc)]
    dec_layers = [_decoder_layer_params(keys[num_enc + i], d_model, dim_ff)
                  for i in range(num_dec)]
    enc = {"attn_w": jnp.stack([l[0] for l in enc_layers]),
           "vecs":   jnp.stack([l[1] for l in enc_layers]),
           "w1":     jnp.stack([l[2] for l in enc_layers]),
           "b1":     jnp.stack([l[3] for l in enc_layers]),
           "w2":     jnp.stack([l[4] for l in enc_layers])}
    dec = {"sattn_w": jnp.stack([l[0] for l in dec_layers]),
           "cattn_w": jnp.stack([l[1] for l in dec_layers]),
           "vecs":    jnp.stack([l[2] for l in dec_layers]),
           "w1":      jnp.stack([l[3] for l in dec_layers]),
           "b1":      jnp.stack([l[4] for l in dec_layers]),
           "w2":      jnp.stack([l[5] for l in dec_layers])}
    dec_norm = jnp.stack([jnp.ones((d_model,), jnp.float32),
                          jnp.zeros((d_model,), jnp.float32)])   # (2, D)
    return {"enc": enc, "dec": dec, "dec_norm": dec_norm}


# ----------------------------------------------------------------------------
# Main
# ----------------------------------------------------------------------------

if __name__ == "__main__":
    # Small config consistent with the module (d_model divisible by nhead).
    d_model, nhead, dim_ff = 32, 4, 64
    num_enc, num_dec = 2, 2
    bs, seq_len, num_queries = 2, 8, 8

    root = jax.random.PRNGKey(0)
    kp, k1, k2, k3, k4 = jax.random.split(root, 5)
    params = make_params(kp, d_model, dim_ff, num_enc, num_dec)

    curr_echo = jax.random.normal(k1, (bs, seq_len, d_model), jnp.float32)
    hist_echo = jax.random.normal(k2, (bs, seq_len, d_model), jnp.float32)
    query_embed = jax.random.normal(k3, (num_queries, d_model), jnp.float32)
    pos_embed = jax.random.normal(k4, (bs, seq_len, d_model), jnp.float32)

    # TODO(synk): dropout layers are identity (eval mode); no attention-mask path
    # (reference forward never passes masks).
    fwd = jax.jit(partial(transformer_forward, nhead=nhead))
    hs = fwd(params, curr_echo, hist_echo, query_embed, pos_embed)
    jax.block_until_ready(hs)

    assert hs.shape == (1, bs, num_queries, d_model), hs.shape
    assert bool(jnp.all(jnp.isfinite(hs)))
    print("KERNEL_OK")
</pallas_src>

<mosaic_0001>
module attributes {stable_mosaic.version = 11 : i64} {
  func.func @_encoder_stack_kernel(%arg0: i32, %arg1: i32, %arg2: memref<1x8x32xf32, #tpu.memory_space<vmem>>, %arg3: memref<1x8x32xf32, #tpu.memory_space<vmem>>, %arg4: memref<1x8x32xf32, #tpu.memory_space<vmem>>, %arg5: memref<1x4x32x32xbf16, #tpu.memory_space<vmem>>, %arg6: memref<1x11x32xf32, #tpu.memory_space<vmem>>, %arg7: memref<1x32x64xbf16, #tpu.memory_space<vmem>>, %arg8: memref<1x1x64xf32, #tpu.memory_space<vmem>>, %arg9: memref<1x64x32xbf16, #tpu.memory_space<vmem>>, %arg10: memref<1x8x32xf32, #tpu.memory_space<vmem>>) attributes {dimension_semantics = [#tpu.dimension_semantics<parallel>, #tpu.dimension_semantics<arbitrary>], iteration_bounds = array<i64: 2, 2>, scalar_prefetch = 0 : i64, scratch_operands = 0 : i64, tpu.core_type = #tpu.core_type<tc>, window_params = [{transform_indices = @transform_0, window_bounds = array<i64: 1, 8, 32>}, {transform_indices = @transform_1, window_bounds = array<i64: 1, 8, 32>}, {transform_indices = @transform_2, window_bounds = array<i64: 1, 8, 32>}, {transform_indices = @transform_3, window_bounds = array<i64: 1, 4, 32, 32>}, {transform_indices = @transform_4, window_bounds = array<i64: 1, 11, 32>}, {transform_indices = @transform_5, window_bounds = array<i64: 1, 32, 64>}, {transform_indices = @transform_6, window_bounds = array<i64: 1, 1, 64>}, {transform_indices = @transform_7, window_bounds = array<i64: 1, 64, 32>}, {transform_indices = @transform_8, window_bounds = array<i64: 1, 8, 32>}]} {
    %c0_i32 = arith.constant 0 : i32
    %0 = arith.cmpi eq, %arg1, %c0_i32 : i32
    %1 = arith.extui %0 : i1 to i32
    %c0_i32_0 = arith.constant 0 : i32
    %2 = arith.cmpi ne, %1, %c0_i32_0 : i32
    scf.if %2 {
      %c0_96 = arith.constant 0 : index
      %c0_97 = arith.constant 0 : index
      %c0_98 = arith.constant 0 : index
      %292 = vector.load %arg2[%c0_96, %c0_97, %c0_98] : memref<1x8x32xf32, #tpu.memory_space<vmem>>, vector<1x8x32xf32>
      %293 = vector.shape_cast %292 : vector<1x8x32xf32> to vector<8x32xf32>
      %c0_99 = arith.constant 0 : index
      %c0_100 = arith.constant 0 : index
      %c0_101 = arith.constant 0 : index
      %294 = vector.load %arg10[%c0_99, %c0_100, %c0_101] : memref<1x8x32xf32, #tpu.memory_space<vmem>>, vector<1x8x32xf32>
      %295 = vector.shape_cast %294 : vector<1x8x32xf32> to vector<8x32xf32>
      %296 = vector.shape_cast %293 : vector<8x32xf32> to vector<1x8x32xf32>
      tpu.vector_store %arg10[%c0_99, %c0_100, %c0_101], %296 {strides = array<i32>} : memref<1x8x32xf32, #tpu.memory_space<vmem>>, vector<1x8x32xf32>,
    } else {
    }
    %c0 = arith.constant 0 : index
    %c0_1 = arith.constant 0 : index
    %c0_2 = arith.constant 0 : index
    %3 = vector.load %arg10[%c0, %c0_1, %c0_2] : memref<1x8x32xf32, #tpu.memory_space<vmem>>, vector<1x8x32xf32>
    %4 = vector.shape_cast %3 : vector<1x8x32xf32> to vector<8x32xf32>
    %c0_3 = arith.constant 0 : index
    %c0_4 = arith.constant 0 : index
    %c0_5 = arith.constant 0 : index
    %5 = vector.load %arg3[%c0_3, %c0_4, %c0_5] : memref<1x8x32xf32, #tpu.memory_space<vmem>>, vector<1x8x32xf32>
    %6 = vector.shape_cast %5 : vector<1x8x32xf32> to vector<8x32xf32>
    %c0_6 = arith.constant 0 : index
    %c0_7 = arith.constant 0 : index
    %c0_8 = arith.constant 0 : index
    %7 = vector.load %arg4[%c0_6, %c0_7, %c0_8] : memref<1x8x32xf32, #tpu.memory_space<vmem>>, vector<1x8x32xf32>
    %8 = vector.shape_cast %7 : vector<1x8x32xf32> to vector<8x32xf32>
    %c0_9 = arith.constant 0 : index
    %c0_10 = arith.constant 0 : index
    %c0_11 = arith.constant 0 : index
    %c0_12 = arith.constant 0 : index
    %9 = vector.load %arg5[%c0_9, %c0_10, %c0_11, %c0_12] : memref<1x4x32x32xbf16, #tpu.memory_space<vmem>>, vector<1x1x32x32xbf16>
    %10 = vector.shape_cast %9 : vector<1x1x32x32xbf16> to vector<32x32xbf16>
    %c0_13 = arith.constant 0 : index
    %c1 = arith.constant 1 : index
    %c0_14 = arith.constant 0 : index
    %c0_15 = arith.constant 0 : index
    %11 = vector.load %arg5[%c0_13, %c1, %c0_14, %c0_15] : memref<1x4x32x32xbf16, #tpu.memory_space<vmem>>, vector<1x1x32x32xbf16>
    %12 = vector.shape_cast %11 : vector<1x1x32x32xbf16> to vector<32x32xbf16>
    %c0_16 = arith.constant 0 : index
    %c2 = arith.constant 2 : index
    %c0_17 = arith.constant 0 : index
    %c0_18 = arith.constant 0 : index
    %13 = vector.load %arg5[%c0_16, %c2, %c0_17, %c0_18] : memref<1x4x32x32xbf16, #tpu.memory_space<vmem>>, vector<1x1x32x32xbf16>
    %14 = vector.shape_cast %13 : vector<1x1x32x32xbf16> to vector<32x32xbf16>
    %c0_19 = arith.constant 0 : index
    %c3 = arith.constant 3 : index
    %c0_20 = arith.constant 0 : index
    %c0_21 = arith.constant 0 : index
    %15 = vector.load %arg5[%c0_19, %c3, %c0_20, %c0_21] : memref<1x4x32x32xbf16, #tpu.memory_space<vmem>>, vector<1x1x32x32xbf16>
    %16 = vector.shape_cast %15 : vector<1x1x32x32xbf16> to vector<32x32xbf16>
    %c0_22 = arith.constant 0 : index
    %c0_23 = arith.constant 0 : index
    %c0_24 = arith.constant 0 : index
    %17 = vector.load %arg6[%c0_22, %c0_23, %c0_24] : memref<1x11x32xf32, #tpu.memory_space<vmem>>, vector<1x11x32xf32>
    %18 = vector.shape_cast %17 : vector<1x11x32xf32> to vector<11x32xf32>
    %19 = vector.extract_strided_slice %18 {offsets = [0, 0], sizes = [1, 32], strides = [1, 1]} : vector<11x32xf32> to vector<1x32xf32>
    %20 = vector.extract_strided_slice %18 {offsets = [1, 0], sizes = [1, 32], strides = [1, 1]} : vector<11x32xf32> to vector<1x32xf32>
    %21 = vector.extract_strided_slice %18 {offsets = [2, 0], sizes = [1, 32], strides = [1, 1]} : vector<11x32xf32> to vector<1x32xf32>
    %22 = vector.extract_strided_slice %18 {offsets = [3, 0], sizes = [1, 32], strides = [1, 1]} : vector<11x32xf32> to vector<1x32xf32>
    %23 = vector.extract_strided_slice %18 {offsets = [4, 0], sizes = [1, 32], strides = [1, 1]} : vector<11x32xf32> to vector<1x32xf32>
    %24 = vector.extract_strided_slice %18 {offsets = [5, 0], sizes = [1, 32], strides = [1, 1]} : vector<11x32xf32> to vector<1x32xf32>
    %25 = vector.extract_strided_slice %18 {offsets = [6, 0], sizes = [1, 32], strides = [1, 1]} : vector<11x32xf32> to vector<1x32xf32>
    %26 = vector.extract_strided_slice %18 {offsets = [7, 0], sizes = [1, 32], strides = [1, 1]} : vector<11x32xf32> to vector<1x32xf32>
    %27 = vector.extract_strided_slice %18 {offsets = [8, 0], sizes = [1, 32], strides = [1, 1]} : vector<11x32xf32> to vector<1x32xf32>
    %28 = vector.extract_strided_slice %18 {offsets = [9, 0], sizes = [1, 32], strides = [1, 1]} : vector<11x32xf32> to vector<1x32xf32>
    %29 = vector.extract_strided_slice %18 {offsets = [10, 0], sizes = [1, 32], strides = [1, 1]} : vector<11x32xf32> to vector<1x32xf32>
    %30 = arith.addf %4, %8 : vector<8x32xf32>
    %31 = arith.addf %6, %8 : vector<8x32xf32>
    %32 = arith.truncf %30 : vector<8x32xf32> to vector<8x32xbf16>
    %33 = arith.truncf %31 : vector<8x32xf32> to vector<8x32xbf16>
    %34 = arith.truncf %6 : vector<8x32xf32> to vector<8x32xbf16>
    %cst = arith.constant dense<0.000000e+00> : vector<8x32xf32>
    %35 = tpu.matmul %32, %10, %cst {dimension_numbers = #tpu.dot_dimension_numbers<[1], [0], [0], [1], [0, 0, 1, 1], [], []>} : vector<8x32xbf16>, vector<32x32xbf16>, vector<8x32xf32> -> vector<8x32xf32>
    %36 = vector.broadcast %19 : vector<1x32xf32> to vector<8x32xf32>
    %37 = arith.addf %35, %36 : vector<8x32xf32>
    %cst_25 = arith.constant 0.353553385 : f32
    %38 = vector.broadcast %cst_25 : f32 to vector<8x32xf32>
    %39 = arith.mulf %37, %38 : vector<8x32xf32>
    %cst_26 = arith.constant dense<0.000000e+00> : vector<8x32xf32>
    %40 = tpu.matmul %33, %12, %cst_26 {dimension_numbers = #tpu.dot_dimension_numbers<[1], [0], [0], [1], [0, 0, 1, 1], [], []>} : vector<8x32xbf16>, vector<32x32xbf16>, vector<8x32xf32> -> vector<8x32xf32>
    %41 = vector.broadcast %20 : vector<1x32xf32> to vector<8x32xf32>
    %42 = arith.addf %40, %41 : vector<8x32xf32>
    %cst_27 = arith.constant dense<0.000000e+00> : vector<8x32xf32>
    %43 = tpu.matmul %34, %14, %cst_27 {dimension_numbers = #tpu.dot_dimension_numbers<[1], [0], [0], [1], [0, 0, 1, 1], [], []>} : vector<8x32xbf16>, vector<32x32xbf16>, vector<8x32xf32> -> vector<8x32xf32>
    %44 = vector.broadcast %21 : vector<1x32xf32> to vector<8x32xf32>
    %45 = arith.addf %43, %44 : vector<8x32xf32>
    %46 = arith.truncf %39 : vector<8x32xf32> to vector<8x32xbf16>
    %47 = arith.truncf %42 : vector<8x32xf32> to vector<8x32xbf16>
    %48 = arith.truncf %45 : vector<8x32xf32> to vector<8x32xbf16>
    %49 = vector.extract_strided_slice %46 {offsets = [0, 0], sizes = [8, 8], strides = [1, 1]} : vector<8x32xbf16> to vector<8x8xbf16>
    %50 = vector.extract_strided_slice %47 {offsets = [0, 0], sizes = [8, 8], strides = [1, 1]} : vector<8x32xbf16> to vector<8x8xbf16>
    %cst_28 = arith.constant dense<0.000000e+00> : vector<8x8xf32>
    %51 = tpu.matmul %49, %50, %cst_28 {dimension_numbers = #tpu.dot_dimension_numbers<[1], [1], [0], [0], [0, 0, 1, 0], [], []>} : vector<8x8xbf16>, vector<8x8xbf16>, vector<8x8xf32> -> vector<8x8xf32>
    %cst_29 = arith.constant dense<0xFF800000> : vector<8xf32>
    %52 = vector.multi_reduction <maximumf>, %51, %cst_29 [1] : vector<8x8xf32> to vector<8xf32>
    %53 = vector.shape_cast %52 : vector<8xf32> to vector<8x1xf32>
    %54 = vector.broadcast %53 : vector<8x1xf32> to vector<8x8xf32>
    %55 = arith.subf %51, %54 : vector<8x8xf32>
    %56 = math.exp %55 : vector<8x8xf32>
    %cst_30 = arith.constant dense<0.000000e+00> : vector<8xf32>
    %57 = vector.multi_reduction <add>, %56, %cst_30 [1] : vector<8x8xf32> to vector<8xf32>
    %58 = vector.shape_cast %57 : vector<8xf32> to vector<8x1xf32>
    %59 = tpu.reciprocal %58 {approx = true} : vector<8x1xf32> -> vector<8x1xf32>
    %60 = vector.broadcast %59 : vector<8x1xf32> to vector<8x8xf32>
    %61 = arith.mulf %56, %60 : vector<8x8xf32>
    %62 = arith.truncf %61 : vector<8x8xf32> to vector<8x8xbf16>
    %63 = vector.extract_strided_slice %48 {offsets = [0, 0], sizes = [8, 8], strides = [1, 1]} : vector<8x32xbf16> to vector<8x8xbf16>
    %cst_31 = arith.constant dense<0.000000e+00> : vector<8x8xf32>
    %64 = tpu.matmul %62, %63, %cst_31 {dimension_numbers = #tpu.dot_dimension_numbers<[1], [0], [0], [1], [0, 0, 1, 1], [], []>} : vector<8x8xbf16>, vector<8x8xbf16>, vector<8x8xf32> -> vector<8x8xf32>
    %65 = vector.extract_strided_slice %46 {offsets = [0, 8], sizes = [8, 8], strides = [1, 1]} : vector<8x32xbf16> to vector<8x8xbf16>
    %66 = vector.extract_strided_slice %47 {offsets = [0, 8], sizes = [8, 8], strides = [1, 1]} : vector<8x32xbf16> to vector<8x8xbf16>
    %cst_32 = arith.constant dense<0.000000e+00> : vector<8x8xf32>
    %67 = tpu.matmul %65, %66, %cst_32 {dimension_numbers = #tpu.dot_dimension_numbers<[1], [1], [0], [0], [0, 0, 1, 0], [], []>} : vector<8x8xbf16>, vector<8x8xbf16>, vector<8x8xf32> -> vector<8x8xf32>
    %cst_33 = arith.constant dense<0xFF800000> : vector<8xf32>
    %68 = vector.multi_reduction <maximumf>, %67, %cst_33 [1] : vector<8x8xf32> to vector<8xf32>
    %69 = vector.shape_cast %68 : vector<8xf32> to vector<8x1xf32>
    %70 = vector.broadcast %69 : vector<8x1xf32> to vector<8x8xf32>
    %71 = arith.subf %67, %70 : vector<8x8xf32>
    %72 = math.exp %71 : vector<8x8xf32>
    %cst_34 = arith.constant dense<0.000000e+00> : vector<8xf32>
    %73 = vector.multi_reduction <add>, %72, %cst_34 [1] : vector<8x8xf32> to vector<8xf32>
    %74 = vector.shape_cast %73 : vector<8xf32> to vector<8x1xf32>
    %75 = tpu.reciprocal %74 {approx = true} : vector<8x1xf32> -> vector<8x1xf32>
    %76 = vector.broadcast %75 : vector<8x1xf32> to vector<8x8xf32>
    %77 = arith.mulf %72, %76 : vector<8x8xf32>
    %78 = arith.truncf %77 : vector<8x8xf32> to vector<8x8xbf16>
    %79 = vector.extract_strided_slice %48 {offsets = [0, 8], sizes = [8, 8], strides = [1, 1]} : vector<8x32xbf16> to vector<8x8xbf16>
    %cst_35 = arith.constant dense<0.000000e+00> : vector<8x8xf32>
    %80 = tpu.matmul %78, %79, %cst_35 {dimension_numbers = #tpu.dot_dimension_numbers<[1], [0], [0], [1], [0, 0, 1, 1], [], []>} : vector<8x8xbf16>, vector<8x8xbf16>, vector<8x8xf32> -> vector<8x8xf32>
    %81 = vector.extract_strided_slice %46 {offsets = [0, 16], sizes = [8, 8], strides = [1, 1]} : vector<8x32xbf16> to vector<8x8xbf16>
    %82 = vector.extract_strided_slice %47 {offsets = [0, 16], sizes = [8, 8], strides = [1, 1]} : vector<8x32xbf16> to vector<8x8xbf16>
    %cst_36 = arith.constant dense<0.000000e+00> : vector<8x8xf32>
    %83 = tpu.matmul %81, %82, %cst_36 {dimension_numbers = #tpu.dot_dimension_numbers<[1], [1], [0], [0], [0, 0, 1, 0], [], []>} : vector<8x8xbf16>, vector<8x8xbf16>, vector<8x8xf32> -> vector<8x8xf32>
    %cst_37 = arith.constant dense<0xFF800000> : vector<8xf32>
    %84 = vector.multi_reduction <maximumf>, %83, %cst_37 [1] : vector<8x8xf32> to vector<8xf32>
    %85 = vector.shape_cast %84 : vector<8xf32> to vector<8x1xf32>
    %86 = vector.broadcast %85 : vector<8x1xf32> to vector<8x8xf32>
    %87 = arith.subf %83, %86 : vector<8x8xf32>
    %88 = math.exp %87 : vector<8x8xf32>
    %cst_38 = arith.constant dense<0.000000e+00> : vector<8xf32>
    %89 = vector.multi_reduction <add>, %88, %cst_38 [1] : vector<8x8xf32> to vector<8xf32>
    %90 = vector.shape_cast %89 : vector<8xf32> to vector<8x1xf32>
    %91 = tpu.reciprocal %90 {approx = true} : vector<8x1xf32> -> vector<8x1xf32>
    %92 = vector.broadcast %91 : vector<8x1xf32> to vector<8x8xf32>
    %93 = arith.mulf %88, %92 : vector<8x8xf32>
    %94 = arith.truncf %93 : vector<8x8xf32> to vector<8x8xbf16>
    %95 = vector.extract_strided_slice %48 {offsets = [0, 16], sizes = [8, 8], strides = [1, 1]} : vector<8x32xbf16> to vector<8x8xbf16>
    %cst_39 = arith.constant dense<0.000000e+00> : vector<8x8xf32>
    %96 = tpu.matmul %94, %95, %cst_39 {dimension_numbers = #tpu.dot_dimension_numbers<[1], [0], [0], [1], [0, 0, 1, 1], [], []>} : vector<8x8xbf16>, vector<8x8xbf16>, vector<8x8xf32> -> vector<8x8xf32>
    %97 = vector.extract_strided_slice %46 {offsets = [0, 24], sizes = [8, 8], strides = [1, 1]} : vector<8x32xbf16> to vector<8x8xbf16>
    %98 = vector.extract_strided_slice %47 {offsets = [0, 24], sizes = [8, 8], strides = [1, 1]} : vector<8x32xbf16> to vector<8x8xbf16>
    %cst_40 = arith.constant dense<0.000000e+00> : vector<8x8xf32>
    %99 = tpu.matmul %97, %98, %cst_40 {dimension_numbers = #tpu.dot_dimension_numbers<[1], [1], [0], [0], [0, 0, 1, 0], [], []>} : vector<8x8xbf16>, vector<8x8xbf16>, vector<8x8xf32> -> vector<8x8xf32>
    %cst_41 = arith.constant dense<0xFF800000> : vector<8xf32>
    %100 = vector.multi_reduction <maximumf>, %99, %cst_41 [1] : vector<8x8xf32> to vector<8xf32>
    %101 = vector.shape_cast %100 : vector<8xf32> to vector<8x1xf32>
    %102 = vector.broadcast %101 : vector<8x1xf32> to vector<8x8xf32>
    %103 = arith.subf %99, %102 : vector<8x8xf32>
    %104 = math.exp %103 : vector<8x8xf32>
    %cst_42 = arith.constant dense<0.000000e+00> : vector<8xf32>
    %105 = vector.multi_reduction <add>, %104, %cst_42 [1] : vector<8x8xf32> to vector<8xf32>
    %106 = vector.shape_cast %105 : vector<8xf32> to vector<8x1xf32>
    %107 = tpu.reciprocal %106 {approx = true} : vector<8x1xf32> -> vector<8x1xf32>
    %108 = vector.broadcast %107 : vector<8x1xf32> to vector<8x8xf32>
    %109 = arith.mulf %104, %108 : vector<8x8xf32>
    %110 = arith.truncf %109 : vector<8x8xf32> to vector<8x8xbf16>
    %111 = vector.extract_strided_slice %48 {offsets = [0, 24], sizes = [8, 8], strides = [1, 1]} : vector<8x32xbf16> to vector<8x8xbf16>
    %cst_43 = arith.constant dense<0.000000e+00> : vector<8x8xf32>
    %112 = tpu.matmul %110, %111, %cst_43 {dimension_numbers = #tpu.dot_dimension_numbers<[1], [0], [0], [1], [0, 0, 1, 1], [], []>} : vector<8x8xbf16>, vector<8x8xbf16>, vector<8x8xf32> -> vector<8x8xf32>
    %113 = tpu.concatenate %64, %80, %96, %112 in 1 : vector<8x8xf32>, vector<8x8xf32>, vector<8x8xf32>, vector<8x8xf32> -> vector<8x32xf32>
    %114 = arith.truncf %113 : vector<8x32xf32> to vector<8x32xbf16>
    %cst_44 = arith.constant dense<0.000000e+00> : vector<8x32xf32>
    %115 = tpu.matmul %114, %16, %cst_44 {dimension_numbers = #tpu.dot_dimension_numbers<[1], [0], [0], [1], [0, 0, 1, 1], [], []>} : vector<8x32xbf16>, vector<32x32xbf16>, vector<8x32xf32> -> vector<8x32xf32>
    %116 = vector.broadcast %22 : vector<1x32xf32> to vector<8x32xf32>
    %117 = arith.addf %115, %116 : vector<8x32xf32>
    %118 = arith.addf %4, %117 : vector<8x32xf32>
    %cst_45 = arith.constant dense<0.000000e+00> : vector<8xf32>
    %119 = vector.multi_reduction <add>, %118, %cst_45 [1] : vector<8x32xf32> to vector<8xf32>
    %120 = vector.shape_cast %119 : vector<8xf32> to vector<8x1xf32>
    %cst_46 = arith.constant 3.200000e+01 : f32
    %121 = vector.broadcast %cst_46 : f32 to vector<8x1xf32>
    %122 = arith.divf %120, %121 : vector<8x1xf32>
    %123 = vector.broadcast %122 : vector<8x1xf32> to vector<8x32xf32>
    %124 = arith.subf %118, %123 : vector<8x32xf32>
    %125 = arith.mulf %124, %124 : vector<8x32xf32>
    %cst_47 = arith.constant dense<0.000000e+00> : vector<8xf32>
    %126 = vector.multi_reduction <add>, %125, %cst_47 [1] : vector<8x32xf32> to vector<8xf32>
    %127 = vector.shape_cast %126 : vector<8xf32> to vector<8x1xf32>
    %cst_48 = arith.constant 3.200000e+01 : f32
    %128 = vector.broadcast %cst_48 : f32 to vector<8x1xf32>
    %129 = arith.divf %127, %128 : vector<8x1xf32>
    %130 = vector.broadcast %122 : vector<8x1xf32> to vector<8x32xf32>
    %131 = arith.subf %118, %130 : vector<8x32xf32>
    %cst_49 = arith.constant 9.99999974E-6 : f32
    %132 = vector.broadcast %cst_49 : f32 to vector<8x1xf32>
    %133 = arith.addf %129, %132 : vector<8x1xf32>
    %134 = math.rsqrt %133 : vector<8x1xf32>
    %135 = vector.broadcast %134 : vector<8x1xf32> to vector<8x32xf32>
    %136 = arith.mulf %131, %135 : vector<8x32xf32>
    %137 = vector.broadcast %24 : vector<1x32xf32> to vector<8x32xf32>
    %138 = arith.mulf %136, %137 : vector<8x32xf32>
    %139 = vector.broadcast %25 : vector<1x32xf32> to vector<8x32xf32>
    %140 = arith.addf %138, %139 : vector<8x32xf32>
    %141 = arith.addf %140, %8 : vector<8x32xf32>
    %142 = arith.truncf %141 : vector<8x32xf32> to vector<8x32xbf16>
    %143 = arith.truncf %140 : vector<8x32xf32> to vector<8x32xbf16>
    %cst_50 = arith.constant dense<0.000000e+00> : vector<8x32xf32>
    %144 = tpu.matmul %142, %10, %cst_50 {dimension_numbers = #tpu.dot_dimension_numbers<[1], [0], [0], [1], [0, 0, 1, 1], [], []>} : vector<8x32xbf16>, vector<32x32xbf16>, vector<8x32xf32> -> vector<8x32xf32>
    %145 = vector.broadcast %19 : vector<1x32xf32> to vector<8x32xf32>
    %146 = arith.addf %144, %145 : vector<8x32xf32>
    %cst_51 = arith.constant 0.353553385 : f32
    %147 = vector.broadcast %cst_51 : f32 to vector<8x32xf32>
    %148 = arith.mulf %146, %147 : vector<8x32xf32>
    %cst_52 = arith.constant dense<0.000000e+00> : vector<8x32xf32>
    %149 = tpu.matmul %142, %12, %cst_52 {dimension_numbers = #tpu.dot_dimension_numbers<[1], [0], [0], [1], [0, 0, 1, 1], [], []>} : vector<8x32xbf16>, vector<32x32xbf16>, vector<8x32xf32> -> vector<8x32xf32>
    %150 = vector.broadcast %20 : vector<1x32xf32> to vector<8x32xf32>
    %151 = arith.addf %149, %150 : vector<8x32xf32>
    %cst_53 = arith.constant dense<0.000000e+00> : vector<8x32xf32>
    %152 = tpu.matmul %143, %14, %cst_53 {dimension_numbers = #tpu.dot_dimension_numbers<[1], [0], [0], [1], [0, 0, 1, 1], [], []>} : vector<8x32xbf16>, vector<32x32xbf16>, vector<8x32xf32> -> vector<8x32xf32>
    %153 = vector.broadcast %21 : vector<1x32xf32> to vector<8x32xf32>
    %154 = arith.addf %152, %153 : vector<8x32xf32>
    %155 = arith.truncf %148 : vector<8x32xf32> to vector<8x32xbf16>
    %156 = arith.truncf %151 : vector<8x32xf32> to vector<8x32xbf16>
    %157 = arith.truncf %154 : vector<8x32xf32> to vector<8x32xbf16>
    %158 = vector.extract_strided_slice %155 {offsets = [0, 0], sizes = [8, 8], strides = [1, 1]} : vector<8x32xbf16> to vector<8x8xbf16>
    %159 = vector.extract_strided_slice %156 {offsets = [0, 0], sizes = [8, 8], strides = [1, 1]} : vector<8x32xbf16> to vector<8x8xbf16>
    %cst_54 = arith.constant dense<0.000000e+00> : vector<8x8xf32>
    %160 = tpu.matmul %158, %159, %cst_54 {dimension_numbers = #tpu.dot_dimension_numbers<[1], [1], [0], [0], [0, 0, 1, 0], [], []>} : vector<8x8xbf16>, vector<8x8xbf16>, vector<8x8xf32> -> vector<8x8xf32>
    %cst_55 = arith.constant dense<0xFF800000> : vector<8xf32>
    %161 = vector.multi_reduction <maximumf>, %160, %cst_55 [1] : vector<8x8xf32> to vector<8xf32>
    %162 = vector.shape_cast %161 : vector<8xf32> to vector<8x1xf32>
    %163 = vector.broadcast %162 : vector<8x1xf32> to vector<8x8xf32>
    %164 = arith.subf %160, %163 : vector<8x8xf32>
    %165 = math.exp %164 : vector<8x8xf32>
    %cst_56 = arith.constant dense<0.000000e+00> : vector<8xf32>
    %166 = vector.multi_reduction <add>, %165, %cst_56 [1] : vector<8x8xf32> to vector<8xf32>
    %167 = vector.shape_cast %166 : vector<8xf32> to vector<8x1xf32>
    %168 = tpu.reciprocal %167 {approx = true} : vector<8x1xf32> -> vector<8x1xf32>
    %169 = vector.broadcast %168 : vector<8x1xf32> to vector<8x8xf32>
    %170 = arith.mulf %165, %169 : vector<8x8xf32>
    %171 = arith.truncf %170 : vector<8x8xf32> to vector<8x8xbf16>
    %172 = vector.extract_strided_slice %157 {offsets = [0, 0], sizes = [8, 8], strides = [1, 1]} : vector<8x32xbf16> to vector<8x8xbf16>
    %cst_57 = arith.constant dense<0.000000e+00> : vector<8x8xf32>
    %173 = tpu.matmul %171, %172, %cst_57 {dimension_numbers = #tpu.dot_dimension_numbers<[1], [0], [0], [1], [0, 0, 1, 1], [], []>} : vector<8x8xbf16>, vector<8x8xbf16>, vector<8x8xf32> -> vector<8x8xf32>
    %174 = vector.extract_strided_slice %155 {offsets = [0, 8], sizes = [8, 8], strides = [1, 1]} : vector<8x32xbf16> to vector<8x8xbf16>
    %175 = vector.extract_strided_slice %156 {offsets = [0, 8], sizes = [8, 8], strides = [1, 1]} : vector<8x32xbf16> to vector<8x8xbf16>
    %cst_58 = arith.constant dense<0.000000e+00> : vector<8x8xf32>
    %176 = tpu.matmul %174, %175, %cst_58 {dimension_numbers = #tpu.dot_dimension_numbers<[1], [1], [0], [0], [0, 0, 1, 0], [], []>} : vector<8x8xbf16>, vector<8x8xbf16>, vector<8x8xf32> -> vector<8x8xf32>
    %cst_59 = arith.constant dense<0xFF800000> : vector<8xf32>
    %177 = vector.multi_reduction <maximumf>, %176, %cst_59 [1] : vector<8x8xf32> to vector<8xf32>
    %178 = vector.shape_cast %177 : vector<8xf32> to vector<8x1xf32>
    %179 = vector.broadcast %178 : vector<8x1xf32> to vector<8x8xf32>
    %180 = arith.subf %176, %179 : vector<8x8xf32>
    %181 = math.exp %180 : vector<8x8xf32>
    %cst_60 = arith.constant dense<0.000000e+00> : vector<8xf32>
    %182 = vector.multi_reduction <add>, %181, %cst_60 [1] : vector<8x8xf32> to vector<8xf32>
    %183 = vector.shape_cast %182 : vector<8xf32> to vector<8x1xf32>
    %184 = tpu.reciprocal %183 {approx = true} : vector<8x1xf32> -> vector<8x1xf32>
    %185 = vector.broadcast %184 : vector<8x1xf32> to vector<8x8xf32>
    %186 = arith.mulf %181, %185 : vector<8x8xf32>
    %187 = arith.truncf %186 : vector<8x8xf32> to vector<8x8xbf16>
    %188 = vector.extract_strided_slice %157 {offsets = [0, 8], sizes = [8, 8], strides = [1, 1]} : vector<8x32xbf16> to vector<8x8xbf16>
    %cst_61 = arith.constant dense<0.000000e+00> : vector<8x8xf32>
    %189 = tpu.matmul %187, %188, %cst_61 {dimension_numbers = #tpu.dot_dimension_numbers<[1], [0], [0], [1], [0, 0, 1, 1], [], []>} : vector<8x8xbf16>, vector<8x8xbf16>, vector<8x8xf32> -> vector<8x8xf32>
    %190 = vector.extract_strided_slice %155 {offsets = [0, 16], sizes = [8, 8], strides = [1, 1]} : vector<8x32xbf16> to vector<8x8xbf16>
    %191 = vector.extract_strided_slice %156 {offsets = [0, 16], sizes = [8, 8], strides = [1, 1]} : vector<8x32xbf16> to vector<8x8xbf16>
    %cst_62 = arith.constant dense<0.000000e+00> : vector<8x8xf32>
    %192 = tpu.matmul %190, %191, %cst_62 {dimension_numbers = #tpu.dot_dimension_numbers<[1], [1], [0], [0], [0, 0, 1, 0], [], []>} : vector<8x8xbf16>, vector<8x8xbf16>, vector<8x8xf32> -> vector<8x8xf32>
    %cst_63 = arith.constant dense<0xFF800000> : vector<8xf32>
    %193 = vector.multi_reduction <maximumf>, %192, %cst_63 [1] : vector<8x8xf32> to vector<8xf32>
    %194 = vector.shape_cast %193 : vector<8xf32> to vector<8x1xf32>
    %195 = vector.broadcast %194 : vector<8x1xf32> to vector<8x8xf32>
    %196 = arith.subf %192, %195 : vector<8x8xf32>
    %197 = math.exp %196 : vector<8x8xf32>
    %cst_64 = arith.constant dense<0.000000e+00> : vector<8xf32>
    %198 = vector.multi_reduction <add>, %197, %cst_64 [1] : vector<8x8xf32> to vector<8xf32>
    %199 = vector.shape_cast %198 : vector<8xf32> to vector<8x1xf32>
    %200 = tpu.reciprocal %199 {approx = true} : vector<8x1xf32> -> vector<8x1xf32>
    %201 = vector.broadcast %200 : vector<8x1xf32> to vector<8x8xf32>
    %202 = arith.mulf %197, %201 : vector<8x8xf32>
    %203 = arith.truncf %202 : vector<8x8xf32> to vector<8x8xbf16>
    %204 = vector.extract_strided_slice %157 {offsets = [0, 16], sizes = [8, 8], strides = [1, 1]} : vector<8x32xbf16> to vector<8x8xbf16>
    %cst_65 = arith.constant dense<0.000000e+00> : vector<8x8xf32>
    %205 = tpu.matmul %203, %204, %cst_65 {dimension_numbers = #tpu.dot_dimension_numbers<[1], [0], [0], [1], [0, 0, 1, 1], [], []>} : vector<8x8xbf16>, vector<8x8xbf16>, vector<8x8xf32> -> vector<8x8xf32>
    %206 = vector.extract_strided_slice %155 {offsets = [0, 24], sizes = [8, 8], strides = [1, 1]} : vector<8x32xbf16> to vector<8x8xbf16>
    %207 = vector.extract_strided_slice %156 {offsets = [0, 24], sizes = [8, 8], strides = [1, 1]} : vector<8x32xbf16> to vector<8x8xbf16>
    %cst_66 = arith.constant dense<0.000000e+00> : vector<8x8xf32>
    %208 = tpu.matmul %206, %207, %cst_66 {dimension_numbers = #tpu.dot_dimension_numbers<[1], [1], [0], [0], [0, 0, 1, 0], [], []>} : vector<8x8xbf16>, vector<8x8xbf16>, vector<8x8xf32> -> vector<8x8xf32>
    %cst_67 = arith.constant dense<0xFF800000> : vector<8xf32>
    %209 = vector.multi_reduction <maximumf>, %208, %cst_67 [1] : vector<8x8xf32> to vector<8xf32>
    %210 = vector.shape_cast %209 : vector<8xf32> to vector<8x1xf32>
    %211 = vector.broadcast %210 : vector<8x1xf32> to vector<8x8xf32>
    %212 = arith.subf %208, %211 : vector<8x8xf32>
    %213 = math.exp %212 : vector<8x8xf32>
    %cst_68 = arith.constant dense<0.000000e+00> : vector<8xf32>
    %214 = vector.multi_reduction <add>, %213, %cst_68 [1] : vector<8x8xf32> to vector<8xf32>
    %215 = vector.shape_cast %214 : vector<8xf32> to vector<8x1xf32>
    %216 = tpu.reciprocal %215 {approx = true} : vector<8x1xf32> -> vector<8x1xf32>
    %217 = vector.broadcast %216 : vector<8x1xf32> to vector<8x8xf32>
    %218 = arith.mulf %213, %217 : vector<8x8xf32>
    %219 = arith.truncf %218 : vector<8x8xf32> to vector<8x8xbf16>
    %220 = vector.extract_strided_slice %157 {offsets = [0, 24], sizes = [8, 8], strides = [1, 1]} : vector<8x32xbf16> to vector<8x8xbf16>
    %cst_69 = arith.constant dense<0.000000e+00> : vector<8x8xf32>
    %221 = tpu.matmul %219, %220, %cst_69 {dimension_numbers = #tpu.dot_dimension_numbers<[1], [0], [0], [1], [0, 0, 1, 1], [], []>} : vector<8x8xbf16>, vector<8x8xbf16>, vector<8x8xf32> -> vector<8x8xf32>
    %222 = tpu.concatenate %173, %189, %205, %221 in 1 : vector<8x8xf32>, vector<8x8xf32>, vector<8x8xf32>, vector<8x8xf32> -> vector<8x32xf32>
    %223 = arith.truncf %222 : vector<8x32xf32> to vector<8x32xbf16>
    %cst_70 = arith.constant dense<0.000000e+00> : vector<8x32xf32>
    %224 = tpu.matmul %223, %16, %cst_70 {dimension_numbers = #tpu.dot_dimension_numbers<[1], [0], [0], [1], [0, 0, 1, 1], [], []>} : vector<8x32xbf16>, vector<32x32xbf16>, vector<8x32xf32> -> vector<8x32xf32>
    %225 = vector.broadcast %22 : vector<1x32xf32> to vector<8x32xf32>
    %226 = arith.addf %224, %225 : vector<8x32xf32>
    %227 = arith.addf %140, %226 : vector<8x32xf32>
    %cst_71 = arith.constant dense<0.000000e+00> : vector<8xf32>
    %228 = vector.multi_reduction <add>, %227, %cst_71 [1] : vector<8x32xf32> to vector<8xf32>
    %229 = vector.shape_cast %228 : vector<8xf32> to vector<8x1xf32>
    %cst_72 = arith.constant 3.200000e+01 : f32
    %230 = vector.broadcast %cst_72 : f32 to vector<8x1xf32>
    %231 = arith.divf %229, %230 : vector<8x1xf32>
    %232 = vector.broadcast %231 : vector<8x1xf32> to vector<8x32xf32>
    %233 = arith.subf %227, %232 : vector<8x32xf32>
    %234 = arith.mulf %233, %233 : vector<8x32xf32>
    %cst_73 = arith.constant dense<0.000000e+00> : vector<8xf32>
    %235 = vector.multi_reduction <add>, %234, %cst_73 [1] : vector<8x32xf32> to vector<8xf32>
    %236 = vector.shape_cast %235 : vector<8xf32> to vector<8x1xf32>
    %cst_74 = arith.constant 3.200000e+01 : f32
    %237 = vector.broadcast %cst_74 : f32 to vector<8x1xf32>
    %238 = arith.divf %236, %237 : vector<8x1xf32>
    %239 = vector.broadcast %231 : vector<8x1xf32> to vector<8x32xf32>
    %240 = arith.subf %227, %239 : vector<8x32xf32>
    %cst_75 = arith.constant 9.99999974E-6 : f32
    %241 = vector.broadcast %cst_75 : f32 to vector<8x1xf32>
    %242 = arith.addf %238, %241 : vector<8x1xf32>
    %243 = math.rsqrt %242 : vector<8x1xf32>
    %244 = vector.broadcast %243 : vector<8x1xf32> to vector<8x32xf32>
    %245 = arith.mulf %240, %244 : vector<8x32xf32>
    %246 = vector.broadcast %26 : vector<1x32xf32> to vector<8x32xf32>
    %247 = arith.mulf %245, %246 : vector<8x32xf32>
    %248 = vector.broadcast %27 : vector<1x32xf32> to vector<8x32xf32>
    %249 = arith.addf %247, %248 : vector<8x32xf32>
    %250 = arith.truncf %249 : vector<8x32xf32> to vector<8x32xbf16>
    %c0_76 = arith.constant 0 : index
    %c0_77 = arith.constant 0 : index
    %c0_78 = arith.constant 0 : index
    %251 = vector.load %arg7[%c0_76, %c0_77, %c0_78] : memref<1x32x64xbf16, #tpu.memory_space<vmem>>, vector<1x32x64xbf16>
    %252 = vector.shape_cast %251 : vector<1x32x64xbf16> to vector<32x64xbf16>
    %cst_79 = arith.constant dense<0.000000e+00> : vector<8x64xf32>
    %253 = tpu.matmul %250, %252, %cst_79 {dimension_numbers = #tpu.dot_dimension_numbers<[1], [0], [0], [1], [0, 0, 1, 1], [], []>} : vector<8x32xbf16>, vector<32x64xbf16>, vector<8x64xf32> -> vector<8x64xf32>
    %c0_80 = arith.constant 0 : index
    %c0_81 = arith.constant 0 : index
    %c0_82 = arith.constant 0 : index
    %254 = vector.load %arg8[%c0_80, %c0_81, %c0_82] : memref<1x1x64xf32, #tpu.memory_space<vmem>>, vector<1x1x64xf32>
    %255 = vector.shape_cast %254 : vector<1x1x64xf32> to vector<1x64xf32>
    %256 = vector.broadcast %255 : vector<1x64xf32> to vector<8x64xf32>
    %257 = arith.addf %253, %256 : vector<8x64xf32>
    %cst_83 = arith.constant 0.000000e+00 : f32
    %258 = vector.broadcast %cst_83 : f32 to vector<8x64xf32>
    %259 = arith.maximumf %257, %258 : vector<8x64xf32>
    %260 = arith.truncf %259 : vector<8x64xf32> to vector<8x64xbf16>
    %c0_84 = arith.constant 0 : index
    %c0_85 = arith.constant 0 : index
    %c0_86 = arith.constant 0 : index
    %261 = vector.load %arg9[%c0_84, %c0_85, %c0_86] : memref<1x64x32xbf16, #tpu.memory_space<vmem>>, vector<1x64x32xbf16>
    %262 = vector.shape_cast %261 : vector<1x64x32xbf16> to vector<64x32xbf16>
    %cst_87 = arith.constant dense<0.000000e+00> : vector<8x32xf32>
    %263 = tpu.matmul %260, %262, %cst_87 {dimension_numbers = #tpu.dot_dimension_numbers<[1], [0], [0], [1], [0, 0, 1, 1], [], []>} : vector<8x64xbf16>, vector<64x32xbf16>, vector<8x32xf32> -> vector<8x32xf32>
    %264 = vector.broadcast %23 : vector<1x32xf32> to vector<8x32xf32>
    %265 = arith.addf %263, %264 : vector<8x32xf32>
    %266 = arith.addf %249, %265 : vector<8x32xf32>
    %cst_88 = arith.constant dense<0.000000e+00> : vector<8xf32>
    %267 = vector.multi_reduction <add>, %266, %cst_88 [1] : vector<8x32xf32> to vector<8xf32>
    %268 = vector.shape_cast %267 : vector<8xf32> to vector<8x1xf32>
    %cst_89 = arith.constant 3.200000e+01 : f32
    %269 = vector.broadcast %cst_89 : f32 to vector<8x1xf32>
    %270 = arith.divf %268, %269 : vector<8x1xf32>
    %271 = vector.broadcast %270 : vector<8x1xf32> to vector<8x32xf32>
    %272 = arith.subf %266, %271 : vector<8x32xf32>
    %273 = arith.mulf %272, %272 : vector<8x32xf32>
    %cst_90 = arith.constant dense<0.000000e+00> : vector<8xf32>
    %274 = vector.multi_reduction <add>, %273, %cst_90 [1] : vector<8x32xf32> to vector<8xf32>
    %275 = vector.shape_cast %274 : vector<8xf32> to vector<8x1xf32>
    %cst_91 = arith.constant 3.200000e+01 : f32
    %276 = vector.broadcast %cst_91 : f32 to vector<8x1xf32>
    %277 = arith.divf %275, %276 : vector<8x1xf32>
    %278 = vector.broadcast %270 : vector<8x1xf32> to vector<8x32xf32>
    %279 = arith.subf %266, %278 : vector<8x32xf32>
    %cst_92 = arith.constant 9.99999974E-6 : f32
    %280 = vector.broadcast %cst_92 : f32 to vector<8x1xf32>
    %281 = arith.addf %277, %280 : vector<8x1xf32>
    %282 = math.rsqrt %281 : vector<8x1xf32>
    %283 = vector.broadcast %282 : vector<8x1xf32> to vector<8x32xf32>
    %284 = arith.mulf %279, %283 : vector<8x32xf32>
    %285 = vector.broadcast %28 : vector<1x32xf32> to vector<8x32xf32>
    %286 = arith.mulf %284, %285 : vector<8x32xf32>
    %287 = vector.broadcast %29 : vector<1x32xf32> to vector<8x32xf32>
    %288 = arith.addf %286, %287 : vector<8x32xf32>
    %c0_93 = arith.constant 0 : index
    %c0_94 = arith.constant 0 : index
    %c0_95 = arith.constant 0 : index
    %289 = vector.load %arg10[%c0_93, %c0_94, %c0_95] : memref<1x8x32xf32, #tpu.memory_space<vmem>>, vector<1x8x32xf32>
    %290 = vector.shape_cast %289 : vector<1x8x32xf32> to vector<8x32xf32>
    %291 = vector.shape_cast %288 : vector<8x32xf32> to vector<1x8x32xf32>
    tpu.vector_store %arg10[%c0_93, %c0_94, %c0_95], %291 {strides = array<i32>} : memref<1x8x32xf32, #tpu.memory_space<vmem>>, vector<1x8x32xf32>,
    return
  }
  func.func @transform_0(%arg0: i32, %arg1: i32) -> (i32, i32, i32) {
    %c0_i32 = arith.constant 0 : i32
    %c0_i32_0 = arith.constant 0 : i32
    %c0_i32_1 = arith.constant 0 : i32
    return %arg0, %c0_i32, %c0_i32_0 : i32, i32, i32
  }
  func.func @transform_1(%arg0: i32, %arg1: i32) -> (i32, i32, i32) {
    %c0_i32 = arith.constant 0 : i32
    %c0_i32_0 = arith.constant 0 : i32
    %c0_i32_1 = arith.constant 0 : i32
    return %arg0, %c0_i32, %c0_i32_0 : i32, i32, i32
  }
  func.func @transform_2(%arg0: i32, %arg1: i32) -> (i32, i32, i32) {
    %c0_i32 = arith.constant 0 : i32
    %c0_i32_0 = arith.constant 0 : i32
    %c0_i32_1 = arith.constant 0 : i32
    return %arg0, %c0_i32, %c0_i32_0 : i32, i32, i32
  }
  func.func @transform_3(%arg0: i32, %arg1: i32) -> (i32, i32, i32, i32) {
    %c0_i32 = arith.constant 0 : i32
    %c0_i32_0 = arith.constant 0 : i32
    %c0_i32_1 = arith.constant 0 : i32
    %c0_i32_2 = arith.constant 0 : i32
    return %arg1, %c0_i32, %c0_i32_0, %c0_i32_1 : i32, i32, i32, i32
  }
  func.func @transform_4(%arg0: i32, %arg1: i32) -> (i32, i32, i32) {
    %c0_i32 = arith.constant 0 : i32
    %c0_i32_0 = arith.constant 0 : i32
    %c0_i32_1 = arith.constant 0 : i32
    return %arg1, %c0_i32, %c0_i32_0 : i32, i32, i32
  }
  func.func @transform_5(%arg0: i32, %arg1: i32) -> (i32, i32, i32) {
    %c0_i32 = arith.constant 0 : i32
    %c0_i32_0 = arith.constant 0 : i32
    %c0_i32_1 = arith.constant 0 : i32
    return %arg1, %c0_i32, %c0_i32_0 : i32, i32, i32
  }
  func.func @transform_6(%arg0: i32, %arg1: i32) -> (i32, i32, i32) {
    %c0_i32 = arith.constant 0 : i32
    %c0_i32_0 = arith.constant 0 : i32
    %c0_i32_1 = arith.constant 0 : i32
    return %arg1, %c0_i32, %c0_i32_0 : i32, i32, i32
  }
  func.func @transform_7(%arg0: i32, %arg1: i32) -> (i32, i32, i32) {
    %c0_i32 = arith.constant 0 : i32
    %c0_i32_0 = arith.constant 0 : i32
    %c0_i32_1 = arith.constant 0 : i32
    return %arg1, %c0_i32, %c0_i32_0 : i32, i32, i32
  }
  func.func @transform_8(%arg0: i32, %arg1: i32) -> (i32, i32, i32) {
    %c0_i32 = arith.constant 0 : i32
    %c0_i32_0 = arith.constant 0 : i32
    %c0_i32_1 = arith.constant 0 : i32
    return %arg0, %c0_i32, %c0_i32_0 : i32, i32, i32
  }
}

module attributes {stable_mosaic.version = 11 : i64} {
  func.func @_decoder_stack_kernel(%arg0: i32, %arg1: i32, %arg2: memref<1x8x32xf32, #tpu.memory_space<vmem>>, %arg3: memref<1x8x32xf32, #tpu.memory_space<vmem>>, %arg4: memref<8x32xf32, #tpu.memory_space<vmem>>, %arg5: memref<1x4x32x32xbf16, #tpu.memory_space<vmem>>, %arg6: memref<1x4x32x32xbf16, #tpu.memory_space<vmem>>, %arg7: memref<1x15x32xf32, #tpu.memory_space<vmem>>, %arg8: memref<1x32x64xbf16, #tpu.memory_space<vmem>>, %arg9: memref<1x1x64xf32, #tpu.memory_space<vmem>>, %arg10: memref<1x64x32xbf16, #tpu.memory_space<vmem>>, %arg11: memref<2x32xf32, #tpu.memory_space<vmem>>, %arg12: memref<1x8x32xf32, #tpu.memory_space<vmem>>) attributes {dimension_semantics = [#tpu.dimension_semantics<parallel>, #tpu.dimension_semantics<arbitrary>], iteration_bounds = array<i64: 2, 2>, scalar_prefetch = 0 : i64, scratch_operands = 0 : i64, tpu.core_type = #tpu.core_type<tc>, window_params = [{transform_indices = @transform_0, window_bounds = array<i64: 1, 8, 32>}, {transform_indices = @transform_1, window_bounds = array<i64: 1, 8, 32>}, {pipeline_mode = #tpu.pipeline_mode<synchronous>, transform_indices = @transform_2, window_bounds = array<i64: 8, 32>}, {transform_indices = @transform_3, window_bounds = array<i64: 1, 4, 32, 32>}, {transform_indices = @transform_4, window_bounds = array<i64: 1, 4, 32, 32>}, {transform_indices = @transform_5, window_bounds = array<i64: 1, 15, 32>}, {transform_indices = @transform_6, window_bounds = array<i64: 1, 32, 64>}, {transform_indices = @transform_7, window_bounds = array<i64: 1, 1, 64>}, {transform_indices = @transform_8, window_bounds = array<i64: 1, 64, 32>}, {pipeline_mode = #tpu.pipeline_mode<synchronous>, transform_indices = @transform_9, window_bounds = array<i64: 2, 32>}, {transform_indices = @transform_10, window_bounds = array<i64: 1, 8, 32>}]} {
    %c0_i32 = arith.constant 0 : i32
    %0 = arith.cmpi eq, %arg1, %c0_i32 : i32
    %1 = arith.extui %0 : i1 to i32
    %c0_i32_0 = arith.constant 0 : i32
    %2 = arith.cmpi ne, %1, %c0_i32_0 : i32
    scf.if %2 {
      %cst_114 = arith.constant 0.000000e+00 : f32
      %308 = vector.broadcast %cst_114 : f32 to vector<1x8x32xf32>
      %c0_115 = arith.constant 0 : index
      %c0_116 = arith.constant 0 : index
      %c0_117 = arith.constant 0 : index
      %309 = vector.load %arg12[%c0_115, %c0_116, %c0_117] : memref<1x8x32xf32, #tpu.memory_space<vmem>>, vector<1x8x32xf32>
      tpu.vector_store %arg12[%c0_115, %c0_116, %c0_117], %308 {strides = array<i32>} : memref<1x8x32xf32, #tpu.memory_space<vmem>>, vector<1x8x32xf32>,
    } else {
    }
    %c0 = arith.constant 0 : index
    %c0_1 = arith.constant 0 : index
    %c0_2 = arith.constant 0 : index
    %3 = vector.load %arg12[%c0, %c0_1, %c0_2] : memref<1x8x32xf32, #tpu.memory_space<vmem>>, vector<1x8x32xf32>
    %4 = vector.shape_cast %3 : vector<1x8x32xf32> to vector<8x32xf32>
    %c0_3 = arith.constant 0 : index
    %c0_4 = arith.constant 0 : index
    %c0_5 = arith.constant 0 : index
    %5 = vector.load %arg2[%c0_3, %c0_4, %c0_5] : memref<1x8x32xf32, #tpu.memory_space<vmem>>, vector<1x8x32xf32>
    %6 = vector.shape_cast %5 : vector<1x8x32xf32> to vector<8x32xf32>
    %c0_6 = arith.constant 0 : index
    %c0_7 = arith.constant 0 : index
    %c0_8 = arith.constant 0 : index
    %7 = vector.load %arg3[%c0_6, %c0_7, %c0_8] : memref<1x8x32xf32, #tpu.memory_space<vmem>>, vector<1x8x32xf32>
    %8 = vector.shape_cast %7 : vector<1x8x32xf32> to vector<8x32xf32>
    %c0_9 = arith.constant 0 : index
    %c0_10 = arith.constant 0 : index
    %9 = vector.load %arg4[%c0_9, %c0_10] : memref<8x32xf32, #tpu.memory_space<vmem>>, vector<8x32xf32>
    %c0_11 = arith.constant 0 : index
    %c0_12 = arith.constant 0 : index
    %c0_13 = arith.constant 0 : index
    %10 = vector.load %arg7[%c0_11, %c0_12, %c0_13] : memref<1x15x32xf32, #tpu.memory_space<vmem>>, vector<1x15x32xf32>
    %11 = vector.shape_cast %10 : vector<1x15x32xf32> to vector<15x32xf32>
    %12 = vector.extract_strided_slice %11 {offsets = [0, 0], sizes = [1, 32], strides = [1, 1]} : vector<15x32xf32> to vector<1x32xf32>
    %13 = vector.extract_strided_slice %11 {offsets = [1, 0], sizes = [1, 32], strides = [1, 1]} : vector<15x32xf32> to vector<1x32xf32>
    %14 = vector.extract_strided_slice %11 {offsets = [2, 0], sizes = [1, 32], strides = [1, 1]} : vector<15x32xf32> to vector<1x32xf32>
    %15 = vector.extract_strided_slice %11 {offsets = [3, 0], sizes = [1, 32], strides = [1, 1]} : vector<15x32xf32> to vector<1x32xf32>
    %16 = vector.extract_strided_slice %11 {offsets = [4, 0], sizes = [1, 32], strides = [1, 1]} : vector<15x32xf32> to vector<1x32xf32>
    %17 = vector.extract_strided_slice %11 {offsets = [5, 0], sizes = [1, 32], strides = [1, 1]} : vector<15x32xf32> to vector<1x32xf32>
    %18 = vector.extract_strided_slice %11 {offsets = [6, 0], sizes = [1, 32], strides = [1, 1]} : vector<15x32xf32> to vector<1x32xf32>
    %19 = vector.extract_strided_slice %11 {offsets = [7, 0], sizes = [1, 32], strides = [1, 1]} : vector<15x32xf32> to vector<1x32xf32>
    %20 = vector.extract_strided_slice %11 {offsets = [8, 0], sizes = [1, 32], strides = [1, 1]} : vector<15x32xf32> to vector<1x32xf32>
    %21 = vector.extract_strided_slice %11 {offsets = [9, 0], sizes = [1, 32], strides = [1, 1]} : vector<15x32xf32> to vector<1x32xf32>
    %22 = vector.extract_strided_slice %11 {offsets = [10, 0], sizes = [1, 32], strides = [1, 1]} : vector<15x32xf32> to vector<1x32xf32>
    %23 = vector.extract_strided_slice %11 {offsets = [11, 0], sizes = [1, 32], strides = [1, 1]} : vector<15x32xf32> to vector<1x32xf32>
    %24 = vector.extract_strided_slice %11 {offsets = [12, 0], sizes = [1, 32], strides = [1, 1]} : vector<15x32xf32> to vector<1x32xf32>
    %25 = vector.extract_strided_slice %11 {offsets = [13, 0], sizes = [1, 32], strides = [1, 1]} : vector<15x32xf32> to vector<1x32xf32>
    %26 = vector.extract_strided_slice %11 {offsets = [14, 0], sizes = [1, 32], strides = [1, 1]} : vector<15x32xf32> to vector<1x32xf32>
    %27 = arith.addf %4, %9 : vector<8x32xf32>
    %c0_14 = arith.constant 0 : index
    %c0_15 = arith.constant 0 : index
    %c0_16 = arith.constant 0 : index
    %c0_17 = arith.constant 0 : index
    %28 = vector.load %arg5[%c0_14, %c0_15, %c0_16, %c0_17] : memref<1x4x32x32xbf16, #tpu.memory_space<vmem>>, vector<1x1x32x32xbf16>
    %29 = vector.shape_cast %28 : vector<1x1x32x32xbf16> to vector<32x32xbf16>
    %c0_18 = arith.constant 0 : index
    %c1 = arith.constant 1 : index
    %c0_19 = arith.constant 0 : index
    %c0_20 = arith.constant 0 : index
    %30 = vector.load %arg5[%c0_18, %c1, %c0_19, %c0_20] : memref<1x4x32x32xbf16, #tpu.memory_space<vmem>>, vector<1x1x32x32xbf16>
    %31 = vector.shape_cast %30 : vector<1x1x32x32xbf16> to vector<32x32xbf16>
    %c0_21 = arith.constant 0 : index
    %c2 = arith.constant 2 : index
    %c0_22 = arith.constant 0 : index
    %c0_23 = arith.constant 0 : index
    %32 = vector.load %arg5[%c0_21, %c2, %c0_22, %c0_23] : memref<1x4x32x32xbf16, #tpu.memory_space<vmem>>, vector<1x1x32x32xbf16>
    %33 = vector.shape_cast %32 : vector<1x1x32x32xbf16> to vector<32x32xbf16>
    %c0_24 = arith.constant 0 : index
    %c3 = arith.constant 3 : index
    %c0_25 = arith.constant 0 : index
    %c0_26 = arith.constant 0 : index
    %34 = vector.load %arg5[%c0_24, %c3, %c0_25, %c0_26] : memref<1x4x32x32xbf16, #tpu.memory_space<vmem>>, vector<1x1x32x32xbf16>
    %35 = vector.shape_cast %34 : vector<1x1x32x32xbf16> to vector<32x32xbf16>
    %36 = arith.truncf %27 : vector<8x32xf32> to vector<8x32xbf16>
    %37 = arith.truncf %4 : vector<8x32xf32> to vector<8x32xbf16>
    %cst = arith.constant dense<0.000000e+00> : vector<8x32xf32>
    %38 = tpu.matmul %36, %29, %cst {dimension_numbers = #tpu.dot_dimension_numbers<[1], [0], [0], [1], [0, 0, 1, 1], [], []>} : vector<8x32xbf16>, vector<32x32xbf16>, vector<8x32xf32> -> vector<8x32xf32>
    %39 = vector.broadcast %12 : vector<1x32xf32> to vector<8x32xf32>
    %40 = arith.addf %38, %39 : vector<8x32xf32>
    %cst_27 = arith.constant 0.353553385 : f32
    %41 = vector.broadcast %cst_27 : f32 to vector<8x32xf32>
    %42 = arith.mulf %40, %41 : vector<8x32xf32>
    %cst_28 = arith.constant dense<0.000000e+00> : vector<8x32xf32>
    %43 = tpu.matmul %36, %31, %cst_28 {dimension_numbers = #tpu.dot_dimension_numbers<[1], [0], [0], [1], [0, 0, 1, 1], [], []>} : vector<8x32xbf16>, vector<32x32xbf16>, vector<8x32xf32> -> vector<8x32xf32>
    %44 = vector.broadcast %13 : vector<1x32xf32> to vector<8x32xf32>
    %45 = arith.addf %43, %44 : vector<8x32xf32>
    %cst_29 = arith.constant dense<0.000000e+00> : vector<8x32xf32>
    %46 = tpu.matmul %37, %33, %cst_29 {dimension_numbers = #tpu.dot_dimension_numbers<[1], [0], [0], [1], [0, 0, 1, 1], [], []>} : vector<8x32xbf16>, vector<32x32xbf16>, vector<8x32xf32> -> vector<8x32xf32>
    %47 = vector.broadcast %14 : vector<1x32xf32> to vector<8x32xf32>
    %48 = arith.addf %46, %47 : vector<8x32xf32>
    %49 = arith.truncf %42 : vector<8x32xf32> to vector<8x32xbf16>
    %50 = arith.truncf %45 : vector<8x32xf32> to vector<8x32xbf16>
    %51 = arith.truncf %48 : vector<8x32xf32> to vector<8x32xbf16>
    %52 = vector.extract_strided_slice %49 {offsets = [0, 0], sizes = [8, 8], strides = [1, 1]} : vector<8x32xbf16> to vector<8x8xbf16>
    %53 = vector.extract_strided_slice %50 {offsets = [0, 0], sizes = [8, 8], strides = [1, 1]} : vector<8x32xbf16> to vector<8x8xbf16>
    %cst_30 = arith.constant dense<0.000000e+00> : vector<8x8xf32>
    %54 = tpu.matmul %52, %53, %cst_30 {dimension_numbers = #tpu.dot_dimension_numbers<[1], [1], [0], [0], [0, 0, 1, 0], [], []>} : vector<8x8xbf16>, vector<8x8xbf16>, vector<8x8xf32> -> vector<8x8xf32>
    %cst_31 = arith.constant dense<0xFF800000> : vector<8xf32>
    %55 = vector.multi_reduction <maximumf>, %54, %cst_31 [1] : vector<8x8xf32> to vector<8xf32>
    %56 = vector.shape_cast %55 : vector<8xf32> to vector<8x1xf32>
    %57 = vector.broadcast %56 : vector<8x1xf32> to vector<8x8xf32>
    %58 = arith.subf %54, %57 : vector<8x8xf32>
    %59 = math.exp %58 : vector<8x8xf32>
    %cst_32 = arith.constant dense<0.000000e+00> : vector<8xf32>
    %60 = vector.multi_reduction <add>, %59, %cst_32 [1] : vector<8x8xf32> to vector<8xf32>
    %61 = vector.shape_cast %60 : vector<8xf32> to vector<8x1xf32>
    %62 = tpu.reciprocal %61 {approx = true} : vector<8x1xf32> -> vector<8x1xf32>
    %63 = vector.broadcast %62 : vector<8x1xf32> to vector<8x8xf32>
    %64 = arith.mulf %59, %63 : vector<8x8xf32>
    %65 = arith.truncf %64 : vector<8x8xf32> to vector<8x8xbf16>
    %66 = vector.extract_strided_slice %51 {offsets = [0, 0], sizes = [8, 8], strides = [1, 1]} : vector<8x32xbf16> to vector<8x8xbf16>
    %cst_33 = arith.constant dense<0.000000e+00> : vector<8x8xf32>
    %67 = tpu.matmul %65, %66, %cst_33 {dimension_numbers = #tpu.dot_dimension_numbers<[1], [0], [0], [1], [0, 0, 1, 1], [], []>} : vector<8x8xbf16>, vector<8x8xbf16>, vector<8x8xf32> -> vector<8x8xf32>
    %68 = vector.extract_strided_slice %49 {offsets = [0, 8], sizes = [8, 8], strides = [1, 1]} : vector<8x32xbf16> to vector<8x8xbf16>
    %69 = vector.extract_strided_slice %50 {offsets = [0, 8], sizes = [8, 8], strides = [1, 1]} : vector<8x32xbf16> to vector<8x8xbf16>
    %cst_34 = arith.constant dense<0.000000e+00> : vector<8x8xf32>
    %70 = tpu.matmul %68, %69, %cst_34 {dimension_numbers = #tpu.dot_dimension_numbers<[1], [1], [0], [0], [0, 0, 1, 0], [], []>} : vector<8x8xbf16>, vector<8x8xbf16>, vector<8x8xf32> -> vector<8x8xf32>
    %cst_35 = arith.constant dense<0xFF800000> : vector<8xf32>
    %71 = vector.multi_reduction <maximumf>, %70, %cst_35 [1] : vector<8x8xf32> to vector<8xf32>
    %72 = vector.shape_cast %71 : vector<8xf32> to vector<8x1xf32>
    %73 = vector.broadcast %72 : vector<8x1xf32> to vector<8x8xf32>
    %74 = arith.subf %70, %73 : vector<8x8xf32>
    %75 = math.exp %74 : vector<8x8xf32>
    %cst_36 = arith.constant dense<0.000000e+00> : vector<8xf32>
    %76 = vector.multi_reduction <add>, %75, %cst_36 [1] : vector<8x8xf32> to vector<8xf32>
    %77 = vector.shape_cast %76 : vector<8xf32> to vector<8x1xf32>
    %78 = tpu.reciprocal %77 {approx = true} : vector<8x1xf32> -> vector<8x1xf32>
    %79 = vector.broadcast %78 : vector<8x1xf32> to vector<8x8xf32>
    %80 = arith.mulf %75, %79 : vector<8x8xf32>
    %81 = arith.truncf %80 : vector<8x8xf32> to vector<8x8xbf16>
    %82 = vector.extract_strided_slice %51 {offsets = [0, 8], sizes = [8, 8], strides = [1, 1]} : vector<8x32xbf16> to vector<8x8xbf16>
    %cst_37 = arith.constant dense<0.000000e+00> : vector<8x8xf32>
    %83 = tpu.matmul %81, %82, %cst_37 {dimension_numbers = #tpu.dot_dimension_numbers<[1], [0], [0], [1], [0, 0, 1, 1], [], []>} : vector<8x8xbf16>, vector<8x8xbf16>, vector<8x8xf32> -> vector<8x8xf32>
    %84 = vector.extract_strided_slice %49 {offsets = [0, 16], sizes = [8, 8], strides = [1, 1]} : vector<8x32xbf16> to vector<8x8xbf16>
    %85 = vector.extract_strided_slice %50 {offsets = [0, 16], sizes = [8, 8], strides = [1, 1]} : vector<8x32xbf16> to vector<8x8xbf16>
    %cst_38 = arith.constant dense<0.000000e+00> : vector<8x8xf32>
    %86 = tpu.matmul %84, %85, %cst_38 {dimension_numbers = #tpu.dot_dimension_numbers<[1], [1], [0], [0], [0, 0, 1, 0], [], []>} : vector<8x8xbf16>, vector<8x8xbf16>, vector<8x8xf32> -> vector<8x8xf32>
    %cst_39 = arith.constant dense<0xFF800000> : vector<8xf32>
    %87 = vector.multi_reduction <maximumf>, %86, %cst_39 [1] : vector<8x8xf32> to vector<8xf32>
    %88 = vector.shape_cast %87 : vector<8xf32> to vector<8x1xf32>
    %89 = vector.broadcast %88 : vector<8x1xf32> to vector<8x8xf32>
    %90 = arith.subf %86, %89 : vector<8x8xf32>
    %91 = math.exp %90 : vector<8x8xf32>
    %cst_40 = arith.constant dense<0.000000e+00> : vector<8xf32>
    %92 = vector.multi_reduction <add>, %91, %cst_40 [1] : vector<8x8xf32> to vector<8xf32>
    %93 = vector.shape_cast %92 : vector<8xf32> to vector<8x1xf32>
    %94 = tpu.reciprocal %93 {approx = true} : vector<8x1xf32> -> vector<8x1xf32>
    %95 = vector.broadcast %94 : vector<8x1xf32> to vector<8x8xf32>
    %96 = arith.mulf %91, %95 : vector<8x8xf32>
    %97 = arith.truncf %96 : vector<8x8xf32> to vector<8x8xbf16>
    %98 = vector.extract_strided_slice %51 {offsets = [0, 16], sizes = [8, 8], strides = [1, 1]} : vector<8x32xbf16> to vector<8x8xbf16>
    %cst_41 = arith.constant dense<0.000000e+00> : vector<8x8xf32>
    %99 = tpu.matmul %97, %98, %cst_41 {dimension_numbers = #tpu.dot_dimension_numbers<[1], [0], [0], [1], [0, 0, 1, 1], [], []>} : vector<8x8xbf16>, vector<8x8xbf16>, vector<8x8xf32> -> vector<8x8xf32>
    %100 = vector.extract_strided_slice %49 {offsets = [0, 24], sizes = [8, 8], strides = [1, 1]} : vector<8x32xbf16> to vector<8x8xbf16>
    %101 = vector.extract_strided_slice %50 {offsets = [0, 24], sizes = [8, 8], strides = [1, 1]} : vector<8x32xbf16> to vector<8x8xbf16>
    %cst_42 = arith.constant dense<0.000000e+00> : vector<8x8xf32>
    %102 = tpu.matmul %100, %101, %cst_42 {dimension_numbers = #tpu.dot_dimension_numbers<[1], [1], [0], [0], [0, 0, 1, 0], [], []>} : vector<8x8xbf16>, vector<8x8xbf16>, vector<8x8xf32> -> vector<8x8xf32>
    %cst_43 = arith.constant dense<0xFF800000> : vector<8xf32>
    %103 = vector.multi_reduction <maximumf>, %102, %cst_43 [1] : vector<8x8xf32> to vector<8xf32>
    %104 = vector.shape_cast %103 : vector<8xf32> to vector<8x1xf32>
    %105 = vector.broadcast %104 : vector<8x1xf32> to vector<8x8xf32>
    %106 = arith.subf %102, %105 : vector<8x8xf32>
    %107 = math.exp %106 : vector<8x8xf32>
    %cst_44 = arith.constant dense<0.000000e+00> : vector<8xf32>
    %108 = vector.multi_reduction <add>, %107, %cst_44 [1] : vector<8x8xf32> to vector<8xf32>
    %109 = vector.shape_cast %108 : vector<8xf32> to vector<8x1xf32>
    %110 = tpu.reciprocal %109 {approx = true} : vector<8x1xf32> -> vector<8x1xf32>
    %111 = vector.broadcast %110 : vector<8x1xf32> to vector<8x8xf32>
    %112 = arith.mulf %107, %111 : vector<8x8xf32>
    %113 = arith.truncf %112 : vector<8x8xf32> to vector<8x8xbf16>
    %114 = vector.extract_strided_slice %51 {offsets = [0, 24], sizes = [8, 8], strides = [1, 1]} : vector<8x32xbf16> to vector<8x8xbf16>
    %cst_45 = arith.constant dense<0.000000e+00> : vector<8x8xf32>
    %115 = tpu.matmul %113, %114, %cst_45 {dimension_numbers = #tpu.dot_dimension_numbers<[1], [0], [0], [1], [0, 0, 1, 1], [], []>} : vector<8x8xbf16>, vector<8x8xbf16>, vector<8x8xf32> -> vector<8x8xf32>
    %116 = tpu.concatenate %67, %83, %99, %115 in 1 : vector<8x8xf32>, vector<8x8xf32>, vector<8x8xf32>, vector<8x8xf32> -> vector<8x32xf32>
    %117 = arith.truncf %116 : vector<8x32xf32> to vector<8x32xbf16>
    %cst_46 = arith.constant dense<0.000000e+00> : vector<8x32xf32>
    %118 = tpu.matmul %117, %35, %cst_46 {dimension_numbers = #tpu.dot_dimension_numbers<[1], [0], [0], [1], [0, 0, 1, 1], [], []>} : vector<8x32xbf16>, vector<32x32xbf16>, vector<8x32xf32> -> vector<8x32xf32>
    %119 = vector.broadcast %15 : vector<1x32xf32> to vector<8x32xf32>
    %120 = arith.addf %118, %119 : vector<8x32xf32>
    %121 = arith.addf %4, %120 : vector<8x32xf32>
    %cst_47 = arith.constant dense<0.000000e+00> : vector<8xf32>
    %122 = vector.multi_reduction <add>, %121, %cst_47 [1] : vector<8x32xf32> to vector<8xf32>
    %123 = vector.shape_cast %122 : vector<8xf32> to vector<8x1xf32>
    %cst_48 = arith.constant 3.200000e+01 : f32
    %124 = vector.broadcast %cst_48 : f32 to vector<8x1xf32>
    %125 = arith.divf %123, %124 : vector<8x1xf32>
    %126 = vector.broadcast %125 : vector<8x1xf32> to vector<8x32xf32>
    %127 = arith.subf %121, %126 : vector<8x32xf32>
    %128 = arith.mulf %127, %127 : vector<8x32xf32>
    %cst_49 = arith.constant dense<0.000000e+00> : vector<8xf32>
    %129 = vector.multi_reduction <add>, %128, %cst_49 [1] : vector<8x32xf32> to vector<8xf32>
    %130 = vector.shape_cast %129 : vector<8xf32> to vector<8x1xf32>
    %cst_50 = arith.constant 3.200000e+01 : f32
    %131 = vector.broadcast %cst_50 : f32 to vector<8x1xf32>
    %132 = arith.divf %130, %131 : vector<8x1xf32>
    %133 = vector.broadcast %125 : vector<8x1xf32> to vector<8x32xf32>
    %134 = arith.subf %121, %133 : vector<8x32xf32>
    %cst_51 = arith.constant 9.99999974E-6 : f32
    %135 = vector.broadcast %cst_51 : f32 to vector<8x1xf32>
    %136 = arith.addf %132, %135 : vector<8x1xf32>
    %137 = math.rsqrt %136 : vector<8x1xf32>
    %138 = vector.broadcast %137 : vector<8x1xf32> to vector<8x32xf32>
    %139 = arith.mulf %134, %138 : vector<8x32xf32>
    %140 = vector.broadcast %21 : vector<1x32xf32> to vector<8x32xf32>
    %141 = arith.mulf %139, %140 : vector<8x32xf32>
    %142 = vector.broadcast %22 : vector<1x32xf32> to vector<8x32xf32>
    %143 = arith.addf %141, %142 : vector<8x32xf32>
    %144 = arith.addf %143, %9 : vector<8x32xf32>
    %145 = arith.addf %6, %8 : vector<8x32xf32>
    %c0_52 = arith.constant 0 : index
    %c0_53 = arith.constant 0 : index
    %c0_54 = arith.constant 0 : index
    %c0_55 = arith.constant 0 : index
    %146 = vector.load %arg6[%c0_52, %c0_53, %c0_54, %c0_55] : memref<1x4x32x32xbf16, #tpu.memory_space<vmem>>, vector<1x1x32x32xbf16>
    %147 = vector.shape_cast %146 : vector<1x1x32x32xbf16> to vector<32x32xbf16>
    %c0_56 = arith.constant 0 : index
    %c1_57 = arith.constant 1 : index
    %c0_58 = arith.constant 0 : index
    %c0_59 = arith.constant 0 : index
    %148 = vector.load %arg6[%c0_56, %c1_57, %c0_58, %c0_59] : memref<1x4x32x32xbf16, #tpu.memory_space<vmem>>, vector<1x1x32x32xbf16>
    %149 = vector.shape_cast %148 : vector<1x1x32x32xbf16> to vector<32x32xbf16>
    %c0_60 = arith.constant 0 : index
    %c2_61 = arith.constant 2 : index
    %c0_62 = arith.constant 0 : index
    %c0_63 = arith.constant 0 : index
    %150 = vector.load %arg6[%c0_60, %c2_61, %c0_62, %c0_63] : memref<1x4x32x32xbf16, #tpu.memory_space<vmem>>, vector<1x1x32x32xbf16>
    %151 = vector.shape_cast %150 : vector<1x1x32x32xbf16> to vector<32x32xbf16>
    %c0_64 = arith.constant 0 : index
    %c3_65 = arith.constant 3 : index
    %c0_66 = arith.constant 0 : index
    %c0_67 = arith.constant 0 : index
    %152 = vector.load %arg6[%c0_64, %c3_65, %c0_66, %c0_67] : memref<1x4x32x32xbf16, #tpu.memory_space<vmem>>, vector<1x1x32x32xbf16>
    %153 = vector.shape_cast %152 : vector<1x1x32x32xbf16> to vector<32x32xbf16>
    %154 = arith.truncf %144 : vector<8x32xf32> to vector<8x32xbf16>
    %155 = arith.truncf %145 : vector<8x32xf32> to vector<8x32xbf16>
    %156 = arith.truncf %6 : vector<8x32xf32> to vector<8x32xbf16>
    %cst_68 = arith.constant dense<0.000000e+00> : vector<8x32xf32>
    %157 = tpu.matmul %154, %147, %cst_68 {dimension_numbers = #tpu.dot_dimension_numbers<[1], [0], [0], [1], [0, 0, 1, 1], [], []>} : vector<8x32xbf16>, vector<32x32xbf16>, vector<8x32xf32> -> vector<8x32xf32>
    %158 = vector.broadcast %16 : vector<1x32xf32> to vector<8x32xf32>
    %159 = arith.addf %157, %158 : vector<8x32xf32>
    %cst_69 = arith.constant 0.353553385 : f32
    %160 = vector.broadcast %cst_69 : f32 to vector<8x32xf32>
    %161 = arith.mulf %159, %160 : vector<8x32xf32>
    %cst_70 = arith.constant dense<0.000000e+00> : vector<8x32xf32>
    %162 = tpu.matmul %155, %149, %cst_70 {dimension_numbers = #tpu.dot_dimension_numbers<[1], [0], [0], [1], [0, 0, 1, 1], [], []>} : vector<8x32xbf16>, vector<32x32xbf16>, vector<8x32xf32> -> vector<8x32xf32>
    %163 = vector.broadcast %17 : vector<1x32xf32> to vector<8x32xf32>
    %164 = arith.addf %162, %163 : vector<8x32xf32>
    %cst_71 = arith.constant dense<0.000000e+00> : vector<8x32xf32>
    %165 = tpu.matmul %156, %151, %cst_71 {dimension_numbers = #tpu.dot_dimension_numbers<[1], [0], [0], [1], [0, 0, 1, 1], [], []>} : vector<8x32xbf16>, vector<32x32xbf16>, vector<8x32xf32> -> vector<8x32xf32>
    %166 = vector.broadcast %18 : vector<1x32xf32> to vector<8x32xf32>
    %167 = arith.addf %165, %166 : vector<8x32xf32>
    %168 = arith.truncf %161 : vector<8x32xf32> to vector<8x32xbf16>
    %169 = arith.truncf %164 : vector<8x32xf32> to vector<8x32xbf16>
    %170 = arith.truncf %167 : vector<8x32xf32> to vector<8x32xbf16>
    %171 = vector.extract_strided_slice %168 {offsets = [0, 0], sizes = [8, 8], strides = [1, 1]} : vector<8x32xbf16> to vector<8x8xbf16>
    %172 = vector.extract_strided_slice %169 {offsets = [0, 0], sizes = [8, 8], strides = [1, 1]} : vector<8x32xbf16> to vector<8x8xbf16>
    %cst_72 = arith.constant dense<0.000000e+00> : vector<8x8xf32>
    %173 = tpu.matmul %171, %172, %cst_72 {dimension_numbers = #tpu.dot_dimension_numbers<[1], [1], [0], [0], [0, 0, 1, 0], [], []>} : vector<8x8xbf16>, vector<8x8xbf16>, vector<8x8xf32> -> vector<8x8xf32>
    %cst_73 = arith.constant dense<0xFF800000> : vector<8xf32>
    %174 = vector.multi_reduction <maximumf>, %173, %cst_73 [1] : vector<8x8xf32> to vector<8xf32>
    %175 = vector.shape_cast %174 : vector<8xf32> to vector<8x1xf32>
    %176 = vector.broadcast %175 : vector<8x1xf32> to vector<8x8xf32>
    %177 = arith.subf %173, %176 : vector<8x8xf32>
    %178 = math.exp %177 : vector<8x8xf32>
    %cst_74 = arith.constant dense<0.000000e+00> : vector<8xf32>
    %179 = vector.multi_reduction <add>, %178, %cst_74 [1] : vector<8x8xf32> to vector<8xf32>
    %180 = vector.shape_cast %179 : vector<8xf32> to vector<8x1xf32>
    %181 = tpu.reciprocal %180 {approx = true} : vector<8x1xf32> -> vector<8x1xf32>
    %182 = vector.broadcast %181 : vector<8x1xf32> to vector<8x8xf32>
    %183 = arith.mulf %178, %182 : vector<8x8xf32>
    %184 = arith.truncf %183 : vector<8x8xf32> to vector<8x8xbf16>
    %185 = vector.extract_strided_slice %170 {offsets = [0, 0], sizes = [8, 8], strides = [1, 1]} : vector<8x32xbf16> to vector<8x8xbf16>
    %cst_75 = arith.constant dense<0.000000e+00> : vector<8x8xf32>
    %186 = tpu.matmul %184, %185, %cst_75 {dimension_numbers = #tpu.dot_dimension_numbers<[1], [0], [0], [1], [0, 0, 1, 1], [], []>} : vector<8x8xbf16>, vector<8x8xbf16>, vector<8x8xf32> -> vector<8x8xf32>
    %187 = vector.extract_strided_slice %168 {offsets = [0, 8], sizes = [8, 8], strides = [1, 1]} : vector<8x32xbf16> to vector<8x8xbf16>
    %188 = vector.extract_strided_slice %169 {offsets = [0, 8], sizes = [8, 8], strides = [1, 1]} : vector<8x32xbf16> to vector<8x8xbf16>
    %cst_76 = arith.constant dense<0.000000e+00> : vector<8x8xf32>
    %189 = tpu.matmul %187, %188, %cst_76 {dimension_numbers = #tpu.dot_dimension_numbers<[1], [1], [0], [0], [0, 0, 1, 0], [], []>} : vector<8x8xbf16>, vector<8x8xbf16>, vector<8x8xf32> -> vector<8x8xf32>
    %cst_77 = arith.constant dense<0xFF800000> : vector<8xf32>
    %190 = vector.multi_reduction <maximumf>, %189, %cst_77 [1] : vector<8x8xf32> to vector<8xf32>
    %191 = vector.shape_cast %190 : vector<8xf32> to vector<8x1xf32>
    %192 = vector.broadcast %191 : vector<8x1xf32> to vector<8x8xf32>
    %193 = arith.subf %189, %192 : vector<8x8xf32>
    %194 = math.exp %193 : vector<8x8xf32>
    %cst_78 = arith.constant dense<0.000000e+00> : vector<8xf32>
    %195 = vector.multi_reduction <add>, %194, %cst_78 [1] : vector<8x8xf32> to vector<8xf32>
    %196 = vector.shape_cast %195 : vector<8xf32> to vector<8x1xf32>
    %197 = tpu.reciprocal %196 {approx = true} : vector<8x1xf32> -> vector<8x1xf32>
    %198 = vector.broadcast %197 : vector<8x1xf32> to vector<8x8xf32>
    %199 = arith.mulf %194, %198 : vector<8x8xf32>
    %200 = arith.truncf %199 : vector<8x8xf32> to vector<8x8xbf16>
    %201 = vector.extract_strided_slice %170 {offsets = [0, 8], sizes = [8, 8], strides = [1, 1]} : vector<8x32xbf16> to vector<8x8xbf16>
    %cst_79 = arith.constant dense<0.000000e+00> : vector<8x8xf32>
    %202 = tpu.matmul %200, %201, %cst_79 {dimension_numbers = #tpu.dot_dimension_numbers<[1], [0], [0], [1], [0, 0, 1, 1], [], []>} : vector<8x8xbf16>, vector<8x8xbf16>, vector<8x8xf32> -> vector<8x8xf32>
    %203 = vector.extract_strided_slice %168 {offsets = [0, 16], sizes = [8, 8], strides = [1, 1]} : vector<8x32xbf16> to vector<8x8xbf16>
    %204 = vector.extract_strided_slice %169 {offsets = [0, 16], sizes = [8, 8], strides = [1, 1]} : vector<8x32xbf16> to vector<8x8xbf16>
    %cst_80 = arith.constant dense<0.000000e+00> : vector<8x8xf32>
    %205 = tpu.matmul %203, %204, %cst_80 {dimension_numbers = #tpu.dot_dimension_numbers<[1], [1], [0], [0], [0, 0, 1, 0], [], []>} : vector<8x8xbf16>, vector<8x8xbf16>, vector<8x8xf32> -> vector<8x8xf32>
    %cst_81 = arith.constant dense<0xFF800000> : vector<8xf32>
    %206 = vector.multi_reduction <maximumf>, %205, %cst_81 [1] : vector<8x8xf32> to vector<8xf32>
    %207 = vector.shape_cast %206 : vector<8xf32> to vector<8x1xf32>
    %208 = vector.broadcast %207 : vector<8x1xf32> to vector<8x8xf32>
    %209 = arith.subf %205, %208 : vector<8x8xf32>
    %210 = math.exp %209 : vector<8x8xf32>
    %cst_82 = arith.constant dense<0.000000e+00> : vector<8xf32>
    %211 = vector.multi_reduction <add>, %210, %cst_82 [1] : vector<8x8xf32> to vector<8xf32>
    %212 = vector.shape_cast %211 : vector<8xf32> to vector<8x1xf32>
    %213 = tpu.reciprocal %212 {approx = true} : vector<8x1xf32> -> vector<8x1xf32>
    %214 = vector.broadcast %213 : vector<8x1xf32> to vector<8x8xf32>
    %215 = arith.mulf %210, %214 : vector<8x8xf32>
    %216 = arith.truncf %215 : vector<8x8xf32> to vector<8x8xbf16>
    %217 = vector.extract_strided_slice %170 {offsets = [0, 16], sizes = [8, 8], strides = [1, 1]} : vector<8x32xbf16> to vector<8x8xbf16>
    %cst_83 = arith.constant dense<0.000000e+00> : vector<8x8xf32>
    %218 = tpu.matmul %216, %217, %cst_83 {dimension_numbers = #tpu.dot_dimension_numbers<[1], [0], [0], [1], [0, 0, 1, 1], [], []>} : vector<8x8xbf16>, vector<8x8xbf16>, vector<8x8xf32> -> vector<8x8xf32>
    %219 = vector.extract_strided_slice %168 {offsets = [0, 24], sizes = [8, 8], strides = [1, 1]} : vector<8x32xbf16> to vector<8x8xbf16>
    %220 = vector.extract_strided_slice %169 {offsets = [0, 24], sizes = [8, 8], strides = [1, 1]} : vector<8x32xbf16> to vector<8x8xbf16>
    %cst_84 = arith.constant dense<0.000000e+00> : vector<8x8xf32>
    %221 = tpu.matmul %219, %220, %cst_84 {dimension_numbers = #tpu.dot_dimension_numbers<[1], [1], [0], [0], [0, 0, 1, 0], [], []>} : vector<8x8xbf16>, vector<8x8xbf16>, vector<8x8xf32> -> vector<8x8xf32>
    %cst_85 = arith.constant dense<0xFF800000> : vector<8xf32>
    %222 = vector.multi_reduction <maximumf>, %221, %cst_85 [1] : vector<8x8xf32> to vector<8xf32>
    %223 = vector.shape_cast %222 : vector<8xf32> to vector<8x1xf32>
    %224 = vector.broadcast %223 : vector<8x1xf32> to vector<8x8xf32>
    %225 = arith.subf %221, %224 : vector<8x8xf32>
    %226 = math.exp %225 : vector<8x8xf32>
    %cst_86 = arith.constant dense<0.000000e+00> : vector<8xf32>
    %227 = vector.multi_reduction <add>, %226, %cst_86 [1] : vector<8x8xf32> to vector<8xf32>
    %228 = vector.shape_cast %227 : vector<8xf32> to vector<8x1xf32>
    %229 = tpu.reciprocal %228 {approx = true} : vector<8x1xf32> -> vector<8x1xf32>
    %230 = vector.broadcast %229 : vector<8x1xf32> to vector<8x8xf32>
    %231 = arith.mulf %226, %230 : vector<8x8xf32>
    %232 = arith.truncf %231 : vector<8x8xf32> to vector<8x8xbf16>
    %233 = vector.extract_strided_slice %170 {offsets = [0, 24], sizes = [8, 8], strides = [1, 1]} : vector<8x32xbf16> to vector<8x8xbf16>
    %cst_87 = arith.constant dense<0.000000e+00> : vector<8x8xf32>
    %234 = tpu.matmul %232, %233, %cst_87 {dimension_numbers = #tpu.dot_dimension_numbers<[1], [0], [0], [1], [0, 0, 1, 1], [], []>} : vector<8x8xbf16>, vector<8x8xbf16>, vector<8x8xf32> -> vector<8x8xf32>
    %235 = tpu.concatenate %186, %202, %218, %234 in 1 : vector<8x8xf32>, vector<8x8xf32>, vector<8x8xf32>, vector<8x8xf32> -> vector<8x32xf32>
    %236 = arith.truncf %235 : vector<8x32xf32> to vector<8x32xbf16>
    %cst_88 = arith.constant dense<0.000000e+00> : vector<8x32xf32>
    %237 = tpu.matmul %236, %153, %cst_88 {dimension_numbers = #tpu.dot_dimension_numbers<[1], [0], [0], [1], [0, 0, 1, 1], [], []>} : vector<8x32xbf16>, vector<32x32xbf16>, vector<8x32xf32> -> vector<8x32xf32>
    %238 = vector.broadcast %19 : vector<1x32xf32> to vector<8x32xf32>
    %239 = arith.addf %237, %238 : vector<8x32xf32>
    %240 = arith.addf %143, %239 : vector<8x32xf32>
    %cst_89 = arith.constant dense<0.000000e+00> : vector<8xf32>
    %241 = vector.multi_reduction <add>, %240, %cst_89 [1] : vector<8x32xf32> to vector<8xf32>
    %242 = vector.shape_cast %241 : vector<8xf32> to vector<8x1xf32>
    %cst_90 = arith.constant 3.200000e+01 : f32
    %243 = vector.broadcast %cst_90 : f32 to vector<8x1xf32>
    %244 = arith.divf %242, %243 : vector<8x1xf32>
    %245 = vector.broadcast %244 : vector<8x1xf32> to vector<8x32xf32>
    %246 = arith.subf %240, %245 : vector<8x32xf32>
    %247 = arith.mulf %246, %246 : vector<8x32xf32>
    %cst_91 = arith.constant dense<0.000000e+00> : vector<8xf32>
    %248 = vector.multi_reduction <add>, %247, %cst_91 [1] : vector<8x32xf32> to vector<8xf32>
    %249 = vector.shape_cast %248 : vector<8xf32> to vector<8x1xf32>
    %cst_92 = arith.constant 3.200000e+01 : f32
    %250 = vector.broadcast %cst_92 : f32 to vector<8x1xf32>
    %251 = arith.divf %249, %250 : vector<8x1xf32>
    %252 = vector.broadcast %244 : vector<8x1xf32> to vector<8x32xf32>
    %253 = arith.subf %240, %252 : vector<8x32xf32>
    %cst_93 = arith.constant 9.99999974E-6 : f32
    %254 = vector.broadcast %cst_93 : f32 to vector<8x1xf32>
    %255 = arith.addf %251, %254 : vector<8x1xf32>
    %256 = math.rsqrt %255 : vector<8x1xf32>
    %257 = vector.broadcast %256 : vector<8x1xf32> to vector<8x32xf32>
    %258 = arith.mulf %253, %257 : vector<8x32xf32>
    %259 = vector.broadcast %23 : vector<1x32xf32> to vector<8x32xf32>
    %260 = arith.mulf %258, %259 : vector<8x32xf32>
    %261 = vector.broadcast %24 : vector<1x32xf32> to vector<8x32xf32>
    %262 = arith.addf %260, %261 : vector<8x32xf32>
    %263 = arith.truncf %262 : vector<8x32xf32> to vector<8x32xbf16>
    %c0_94 = arith.constant 0 : index
    %c0_95 = arith.constant 0 : index
    %c0_96 = arith.constant 0 : index
    %264 = vector.load %arg8[%c0_94, %c0_95, %c0_96] : memref<1x32x64xbf16, #tpu.memory_space<vmem>>, vector<1x32x64xbf16>
    %265 = vector.shape_cast %264 : vector<1x32x64xbf16> to vector<32x64xbf16>
    %cst_97 = arith.constant dense<0.000000e+00> : vector<8x64xf32>
    %266 = tpu.matmul %263, %265, %cst_97 {dimension_numbers = #tpu.dot_dimension_numbers<[1], [0], [0], [1], [0, 0, 1, 1], [], []>} : vector<8x32xbf16>, vector<32x64xbf16>, vector<8x64xf32> -> vector<8x64xf32>
    %c0_98 = arith.constant 0 : index
    %c0_99 = arith.constant 0 : index
    %c0_100 = arith.constant 0 : index
    %267 = vector.load %arg9[%c0_98, %c0_99, %c0_100] : memref<1x1x64xf32, #tpu.memory_space<vmem>>, vector<1x1x64xf32>
    %268 = vector.shape_cast %267 : vector<1x1x64xf32> to vector<1x64xf32>
    %269 = vector.broadcast %268 : vector<1x64xf32> to vector<8x64xf32>
    %270 = arith.addf %266, %269 : vector<8x64xf32>
    %cst_101 = arith.constant 0.000000e+00 : f32
    %271 = vector.broadcast %cst_101 : f32 to vector<8x64xf32>
    %272 = arith.maximumf %270, %271 : vector<8x64xf32>
    %273 = arith.truncf %272 : vector<8x64xf32> to vector<8x64xbf16>
    %c0_102 = arith.constant 0 : index
    %c0_103 = arith.constant 0 : index
    %c0_104 = arith.constant 0 : index
    %274 = vector.load %arg10[%c0_102, %c0_103, %c0_104] : memref<1x64x32xbf16, #tpu.memory_space<vmem>>, vector<1x64x32xbf16>
    %275 = vector.shape_cast %274 : vector<1x64x32xbf16> to vector<64x32xbf16>
    %cst_105 = arith.constant dense<0.000000e+00> : vector<8x32xf32>
    %276 = tpu.matmul %273, %275, %cst_105 {dimension_numbers = #tpu.dot_dimension_numbers<[1], [0], [0], [1], [0, 0, 1, 1], [], []>} : vector<8x64xbf16>, vector<64x32xbf16>, vector<8x32xf32> -> vector<8x32xf32>
    %277 = vector.broadcast %20 : vector<1x32xf32> to vector<8x32xf32>
    %278 = arith.addf %276, %277 : vector<8x32xf32>
    %279 = arith.addf %262, %278 : vector<8x32xf32>
    %cst_106 = arith.constant dense<0.000000e+00> : vector<8xf32>
    %280 = vector.multi_reduction <add>, %279, %cst_106 [1] : vector<8x32xf32> to vector<8xf32>
    %281 = vector.shape_cast %280 : vector<8xf32> to vector<8x1xf32>
    %cst_107 = arith.constant 3.200000e+01 : f32
    %282 = vector.broadcast %cst_107 : f32 to vector<8x1xf32>
    %283 = arith.divf %281, %282 : vector<8x1xf32>
    %284 = vector.broadcast %283 : vector<8x1xf32> to vector<8x32xf32>
    %285 = arith.subf %279, %284 : vector<8x32xf32>
    %286 = arith.mulf %285, %285 : vector<8x32xf32>
    %cst_108 = arith.constant dense<0.000000e+00> : vector<8xf32>
    %287 = vector.multi_reduction <add>, %286, %cst_108 [1] : vector<8x32xf32> to vector<8xf32>
    %288 = vector.shape_cast %287 : vector<8xf32> to vector<8x1xf32>
    %cst_109 = arith.constant 3.200000e+01 : f32
    %289 = vector.broadcast %cst_109 : f32 to vector<8x1xf32>
    %290 = arith.divf %288, %289 : vector<8x1xf32>
    %291 = vector.broadcast %283 : vector<8x1xf32> to vector<8x32xf32>
    %292 = arith.subf %279, %291 : vector<8x32xf32>
    %cst_110 = arith.constant 9.99999974E-6 : f32
    %293 = vector.broadcast %cst_110 : f32 to vector<8x1xf32>
    %294 = arith.addf %290, %293 : vector<8x1xf32>
    %295 = math.rsqrt %294 : vector<8x1xf32>
    %296 = vector.broadcast %295 : vector<8x1xf32> to vector<8x32xf32>
    %297 = arith.mulf %292, %296 : vector<8x32xf32>
    %298 = vector.broadcast %25 : vector<1x32xf32> to vector<8x32xf32>
    %299 = arith.mulf %297, %298 : vector<8x32xf32>
    %300 = vector.broadcast %26 : vector<1x32xf32> to vector<8x32xf32>
    %301 = arith.addf %299, %300 : vector<8x32xf32>
    %c1_i32 = arith.constant 1 : i32
    %302 = arith.cmpi slt, %arg1, %c1_i32 : i32
    %303 = arith.extui %302 : i1 to i32
    %c0_i32_111 = arith.constant 0 : i32
    %304 = arith.cmpi ne, %303, %c0_i32_111 : i32
    scf.if %304 {
      %c0_114 = arith.constant 0 : index
      %c0_115 = arith.constant 0 : index
      %c0_116 = arith.constant 0 : index
      %308 = vector.load %arg12[%c0_114, %c0_115, %c0_116] : memref<1x8x32xf32, #tpu.memory_space<vmem>>, vector<1x8x32xf32>
      %309 = vector.shape_cast %308 : vector<1x8x32xf32> to vector<8x32xf32>
      %310 = vector.shape_cast %301 : vector<8x32xf32> to vector<1x8x32xf32>
      tpu.vector_store %arg12[%c0_114, %c0_115, %c0_116], %310 {strides = array<i32>} : memref<1x8x32xf32, #tpu.memory_space<vmem>>, vector<1x8x32xf32>,
    } else {
    }
    %c1_i32_112 = arith.constant 1 : i32
    %305 = arith.cmpi eq, %arg1, %c1_i32_112 : i32
    %306 = arith.extui %305 : i1 to i32
    %c0_i32_113 = arith.constant 0 : i32
    %307 = arith.cmpi ne, %306, %c0_i32_113 : i32
    scf.if %307 {
      %c0_114 = arith.constant 0 : index
      %c0_115 = arith.constant 0 : index
      %308 = vector.load %arg11[%c0_114, %c0_115] : memref<2x32xf32, #tpu.memory_space<vmem>>, vector<2x32xf32>
      %309 = vector.extract_strided_slice %308 {offsets = [0, 0], sizes = [1, 32], strides = [1, 1]} : vector<2x32xf32> to vector<1x32xf32>
      %310 = vector.extract_strided_slice %308 {offsets = [1, 0], sizes = [1, 32], strides = [1, 1]} : vector<2x32xf32> to vector<1x32xf32>
      %cst_116 = arith.constant dense<0.000000e+00> : vector<8xf32>
      %311 = vector.multi_reduction <add>, %301, %cst_116 [1] : vector<8x32xf32> to vector<8xf32>
      %312 = vector.shape_cast %311 : vector<8xf32> to vector<8x1xf32>
      %cst_117 = arith.constant 3.200000e+01 : f32
      %313 = vector.broadcast %cst_117 : f32 to vector<8x1xf32>
      %314 = arith.divf %312, %313 : vector<8x1xf32>
      %315 = vector.broadcast %314 : vector<8x1xf32> to vector<8x32xf32>
      %316 = arith.subf %301, %315 : vector<8x32xf32>
      %317 = arith.mulf %316, %316 : vector<8x32xf32>
      %cst_118 = arith.constant dense<0.000000e+00> : vector<8xf32>
      %318 = vector.multi_reduction <add>, %317, %cst_118 [1] : vector<8x32xf32> to vector<8xf32>
      %319 = vector.shape_cast %318 : vector<8xf32> to vector<8x1xf32>
      %cst_119 = arith.constant 3.200000e+01 : f32
      %320 = vector.broadcast %cst_119 : f32 to vector<8x1xf32>
      %321 = arith.divf %319, %320 : vector<8x1xf32>
      %322 = vector.broadcast %314 : vector<8x1xf32> to vector<8x32xf32>
      %323 = arith.subf %301, %322 : vector<8x32xf32>
      %cst_120 = arith.constant 9.99999974E-6 : f32
      %324 = vector.broadcast %cst_120 : f32 to vector<8x1xf32>
      %325 = arith.addf %321, %324 : vector<8x1xf32>
      %326 = math.rsqrt %325 : vector<8x1xf32>
      %327 = vector.broadcast %326 : vector<8x1xf32> to vector<8x32xf32>
      %328 = arith.mulf %323, %327 : vector<8x32xf32>
      %329 = vector.broadcast %309 : vector<1x32xf32> to vector<8x32xf32>
      %330 = arith.mulf %328, %329 : vector<8x32xf32>
      %331 = vector.broadcast %310 : vector<1x32xf32> to vector<8x32xf32>
      %332 = arith.addf %330, %331 : vector<8x32xf32>
      %c0_121 = arith.constant 0 : index
      %c0_122 = arith.constant 0 : index
      %c0_123 = arith.constant 0 : index
      %333 = vector.load %arg12[%c0_121, %c0_122, %c0_123] : memref<1x8x32xf32, #tpu.memory_space<vmem>>, vector<1x8x32xf32>
      %334 = vector.shape_cast %333 : vector<1x8x32xf32> to vector<8x32xf32>
      %335 = vector.shape_cast %332 : vector<8x32xf32> to vector<1x8x32xf32>
      tpu.vector_store %arg12[%c0_121, %c0_122, %c0_123], %335 {strides = array<i32>} : memref<1x8x32xf32, #tpu.memory_space<vmem>>, vector<1x8x32xf32>,
    } else {
    }
    return
  }
  func.func @transform_0(%arg0: i32, %arg1: i32) -> (i32, i32, i32) {
    %c0_i32 = arith.constant 0 : i32
    %c0_i32_0 = arith.constant 0 : i32
    %c0_i32_1 = arith.constant 0 : i32
    return %arg0, %c0_i32, %c0_i32_0 : i32, i32, i32
  }
  func.func @transform_1(%arg0: i32, %arg1: i32) -> (i32, i32, i32) {
    %c0_i32 = arith.constant 0 : i32
    %c0_i32_0 = arith.constant 0 : i32
    %c0_i32_1 = arith.constant 0 : i32
    return %arg0, %c0_i32, %c0_i32_0 : i32, i32, i32
  }
  func.func @transform_2(%arg0: i32, %arg1: i32) -> (i32, i32) {
    %c0_i32 = arith.constant 0 : i32
    %c0_i32_0 = arith.constant 0 : i32
    %c0_i32_1 = arith.constant 0 : i32
    return %c0_i32, %c0_i32_0 : i32, i32
  }
  func.func @transform_3(%arg0: i32, %arg1: i32) -> (i32, i32, i32, i32) {
    %c0_i32 = arith.constant 0 : i32
    %c0_i32_0 = arith.constant 0 : i32
    %c0_i32_1 = arith.constant 0 : i32
    %c0_i32_2 = arith.constant 0 : i32
    return %arg1, %c0_i32, %c0_i32_0, %c0_i32_1 : i32, i32, i32, i32
  }
  func.func @transform_4(%arg0: i32, %arg1: i32) -> (i32, i32, i32, i32) {
    %c0_i32 = arith.constant 0 : i32
    %c0_i32_0 = arith.constant 0 : i32
    %c0_i32_1 = arith.constant 0 : i32
    %c0_i32_2 = arith.constant 0 : i32
    return %arg1, %c0_i32, %c0_i32_0, %c0_i32_1 : i32, i32, i32, i32
  }
  func.func @transform_5(%arg0: i32, %arg1: i32) -> (i32, i32, i32) {
    %c0_i32 = arith.constant 0 : i32
    %c0_i32_0 = arith.constant 0 : i32
    %c0_i32_1 = arith.constant 0 : i32
    return %arg1, %c0_i32, %c0_i32_0 : i32, i32, i32
  }
  func.func @transform_6(%arg0: i32, %arg1: i32) -> (i32, i32, i32) {
    %c0_i32 = arith.constant 0 : i32
    %c0_i32_0 = arith.constant 0 : i32
    %c0_i32_1 = arith.constant 0 : i32
    return %arg1, %c0_i32, %c0_i32_0 : i32, i32, i32
  }
  func.func @transform_7(%arg0: i32, %arg1: i32) -> (i32, i32, i32) {
    %c0_i32 = arith.constant 0 : i32
    %c0_i32_0 = arith.constant 0 : i32
    %c0_i32_1 = arith.constant 0 : i32
    return %arg1, %c0_i32, %c0_i32_0 : i32, i32, i32
  }
  func.func @transform_8(%arg0: i32, %arg1: i32) -> (i32, i32, i32) {
    %c0_i32 = arith.constant 0 : i32
    %c0_i32_0 = arith.constant 0 : i32
    %c0_i32_1 = arith.constant 0 : i32
    return %arg1, %c0_i32, %c0_i32_0 : i32, i32, i32
  }
  func.func @transform_9(%arg0: i32, %arg1: i32) -> (i32, i32) {
    %c0_i32 = arith.constant 0 : i32
    %c0_i32_0 = arith.constant 0 : i32
    %c0_i32_1 = arith.constant 0 : i32
    return %c0_i32, %c0_i32_0 : i32, i32
  }
  func.func @transform_10(%arg0: i32, %arg1: i32) -> (i32, i32, i32) {
    %c0_i32 = arith.constant 0 : i32
    %c0_i32_0 = arith.constant 0 : i32
    %c0_i32_1 = arith.constant 0 : i32
    return %arg0, %c0_i32, %c0_i32_0 : i32, i32, i32
  }
}

</mosaic_0001>

<llo_original>
// kernel: transformer_forward.2
$region0: #{transformer_forward.2}
  #allocation0 [shape = 'u32[]', space=smem, size = 0x4, offset = 0x4, fixed_abs, tag = 'smem constant byte address 0x4 - core index']
  #allocation1 [shape = 'u32[144,128]{1,0:T(1,128)}', space=vmem, size = 0x12000, scoped, tag = 'internal scratch']
  %s0 = inlined_call_operand.hbm [shape: f32[2,8,32], index: 0, kind: input, shape index: {}]
  %s1 = inlined_call_operand.hbm [shape: f32[2,8,32], index: 1, kind: input, shape index: {}]
  %s2 = inlined_call_operand.vmem [shape: f32[2,8,32], index: 2, kind: input, shape index: {}]
  %s3 = inlined_call_operand.vmem [shape: bf16[2,4,32,32], index: 3, kind: input, shape index: {}]
  %s4 = inlined_call_operand.vmem [shape: f32[2,11,32], index: 4, kind: input, shape index: {}]
  %s5 = inlined_call_operand.hbm [shape: bf16[2,32,64], index: 5, kind: input, shape index: {}]
  %s6 = inlined_call_operand.vmem [shape: f32[2,1,64], index: 6, kind: input, shape index: {}]
  %s7 = inlined_call_operand.vmem [shape: bf16[2,64,32], index: 7, kind: input, shape index: {}]
  %s8 = inlined_call_operand.vmem [shape: f32[2,8,32], index: 8, kind: output, shape index: {}]
  %s9 = sld [smem:[#allocation0]]
  $region81: #{transformer_forward.2} parent=0
    _
  %s11 = ssub.s32 1, %s9
  %s12 = scalar_select 0, %s11, %s9
  $region1: #{transformer_forward.2} parent=0
    #allocation2 [shape = 'u8[8192]{0}', space=vmem, size = 0x2000, scoped, tag = 'input window, operand 0']
    #allocation3 [shape = 's32[2]{0}', space=sflag, size = 0x8, scoped, tag = 'scoped memory for transformer_forward.2']
    #allocation4 [shape = 'u8[8192]{0}', space=vmem, size = 0x2000, scoped, tag = 'input window, operand 1']
    #allocation5 [shape = 's32[2]{0}', space=sflag, size = 0x8, scoped, tag = 'scoped memory for transformer_forward.2']
    #allocation6 [shape = 'u8[16384]{0}', space=vmem, size = 0x4000, scoped, tag = 'input window, operand 5']
    %13 = vsyncpa [#allocation3], 0
    %s14 = scalar_lea.sflag [#allocation3], 1
    %15 = vsyncpa %s14, 0
    %16 = vsyncpa [#allocation5], 0
    %s17 = scalar_lea.sflag [#allocation5], 1
    %18 = vsyncpa %s17, 0
    loop: start=0, step=1, limit=6
    $region2: #{transformer_forward.2} parent=1 // loop_pre_header
      _
    $region3: #{transformer_forward.2} parent=1 // loop_header
      %s20 = sphi 0, %s24
      %p21 = scmp.ge.s32.totalorder %s20, 6
      %s27 = sphi 0, %s39
      %s28 = sphi 0, %s35
      %s29 = sphi 0, %s27
      %s30 = sphi 0, %s28
      %s31 = sphi 0, %s29
      %s32 = sphi 0, %s30
      %s42 = sphi 0, %s44
      %s45 = sphi 0, %s42
      %s46 = sphi 0, %s45
      %s62 = sphi 0, %s46
      %s68 = sphi 0, %s70
      %s71 = sphi 0, %s68
      %s72 = sphi 0, %s71
      %s88 = sphi 0, %s72
      %s94 = sphi 0, %s96
      %s97 = sphi 0, %s94
      %s98 = sphi 0, %s97
      %s114 = sphi 0, %s98
      %s120 = sphi 0, %s122
      %s123 = sphi 0, %s120
      %s124 = sphi 0, %s123
      %s140 = sphi 0, %s124
      %s146 = sphi 0, %s148
      %s149 = sphi 0, %s146
      %s150 = sphi 0, %s149
      %s166 = sphi 0, %s150
      %s172 = sphi 0, %s174
      %s175 = sphi 0, %s172
      %s176 = sphi 0, %s175
      %s192 = sphi 0, %s176
      %s198 = sphi 0, %s200
      %s201 = sphi 0, %s198
      %s202 = sphi 0, %s201
      %s218 = sphi 0, %s202
      %s224 = sphi 0, %s226
      %s227 = sphi 0, %s224
      %s228 = sphi 0, %s227
      %s244 = sphi 0, %s228
      %s250 = sphi 0, %s252
      %s253 = sphi 0, %s250
      %s254 = sphi 0, %s253
      %s270 = sphi 0, %s254
    $region4: #{transformer_forward.2} parent=1 // loop_header_branch
      %23 = sbr.rel (%p21) target = $region8
    $region5: #{transformer_forward.2} parent=1 // loop_body
      %s25 = ssub.s32 %s20, 1
      %s26 = ssub.s32 %s20, 2
      %s33 = sadd.s32 1, %s28
      %p34 = scmp.ge.s32.totalorder %s33, 2
      %s35 = scalar_select %p34, 0, %s33
      %s36 = sadd.s32 1, %s27
      %s37 = scalar_select %p34, %s36, %s27
      %p38 = scmp.ge.s32.totalorder %s37, 2
      %s39 = scalar_select %p38, 0, %s37
      %s40 = ssub.s32 %s27, %s39
      %p41 = scmp.eq.s32.totalorder %s40, 0
      %s43 = sadd.s32 %s42, 1
      %s44 = scalar_select %p41, %s42, %s43
      %p47 = pneg %p41
      %p48 = scmp.eq.s32.totalorder %s20, 3
      %p49 = por %p47, %p48
      %p50 = scmp.ne.s32.totalorder %s42, %s45
      %p51 = scmp.eq.s32.totalorder %s20, 0
      %p52 = por %p50, %p51
      %p53 = scmp.ne.s32.totalorder %s42, %s45
      %p54 = scmp.eq.s32.totalorder %s25, 3
      %p55 = por %p53, %p54
      %p56 = scmp.ne.s32.totalorder %s45, %s46
      %p57 = scmp.eq.s32.totalorder %s25, 0
      %p58 = por %p56, %p57
      %p59 = scmp.ne.s32.totalorder %s45, %s46
      %p60 = scmp.eq.s32.totalorder %s26, 3
      %p61 = por %p59, %p60
      %p63 = scmp.ne.s32.totalorder %s46, %s62
      %p64 = scmp.eq.s32.totalorder %s26, 0
      %p65 = por %p63, %p64
      %s66 = ssub.s32 %s27, %s39
      %p67 = scmp.eq.s32.totalorder %s66, 0
      %s69 = sadd.s32 %s68, 1
      %s70 = scalar_select %p67, %s68, %s69
      %p73 = pneg %p67
      %p74 = scmp.eq.s32.totalorder %s20, 3
      %p75 = por %p73, %p74
      %p76 = scmp.ne.s32.totalorder %s68, %s71
      %p77 = scmp.eq.s32.totalorder %s20, 0
      %p78 = por %p76, %p77
      %p79 = scmp.ne.s32.totalorder %s68, %s71
      %p80 = scmp.eq.s32.totalorder %s25, 3
      %p81 = por %p79, %p80
      %p82 = scmp.ne.s32.totalorder %s71, %s72
      %p83 = scmp.eq.s32.totalorder %s25, 0
      %p84 = por %p82, %p83
      %p85 = scmp.ne.s32.totalorder %s71, %s72
      %p86 = scmp.eq.s32.totalorder %s26, 3
      %p87 = por %p85, %p86
      %p89 = scmp.ne.s32.totalorder %s72, %s88
      %p90 = scmp.eq.s32.totalorder %s26, 0
      %p91 = por %p89, %p90
      %s92 = ssub.s32 %s27, %s39
      %p93 = scmp.eq.s32.totalorder %s92, 0
      %s95 = sadd.s32 %s94, 1
      %s96 = scalar_select %p93, %s94, %s95
      %p99 = pneg %p93
      %p100 = scmp.eq.s32.totalorder %s20, 3
      %p101 = por %p99, %p100
      %p102 = scmp.ne.s32.totalorder %s94, %s97
      %p103 = scmp.eq.s32.totalorder %s20, 0
      %p104 = por %p102, %p103
      %p105 = scmp.ne.s32.totalorder %s94, %s97
      %p106 = scmp.eq.s32.totalorder %s25, 3
      %p107 = por %p105, %p106
      %p108 = scmp.ne.s32.totalorder %s97, %s98
      %p109 = scmp.eq.s32.totalorder %s25, 0
      %p110 = por %p108, %p109
      %p111 = scmp.ne.s32.totalorder %s97, %s98
      %p112 = scmp.eq.s32.totalorder %s26, 3
      %p113 = por %p111, %p112
      %p115 = scmp.ne.s32.totalorder %s98, %s114
      %p116 = scmp.eq.s32.totalorder %s26, 0
      %p117 = por %p115, %p116
      %s118 = ssub.s32 %s28, %s35
      %p119 = scmp.eq.s32.totalorder %s118, 0
      %s121 = sadd.s32 %s120, 1
      %s122 = scalar_select %p119, %s120, %s121
      %p125 = pneg %p119
      %p126 = scmp.eq.s32.totalorder %s20, 3
      %p127 = por %p125, %p126
      %p128 = scmp.ne.s32.totalorder %s120, %s123
      %p129 = scmp.eq.s32.totalorder %s20, 0
      %p130 = por %p128, %p129
      %p131 = scmp.ne.s32.totalorder %s120, %s123
      %p132 = scmp.eq.s32.totalorder %s25, 3
      %p133 = por %p131, %p132
      %p134 = scmp.ne.s32.totalorder %s123, %s124
      %p135 = scmp.eq.s32.totalorder %s25, 0
      %p136 = por %p134, %p135
      %p137 = scmp.ne.s32.totalorder %s123, %s124
      %p138 = scmp.eq.s32.totalorder %s26, 3
      %p139 = por %p137, %p138
      %p141 = scmp.ne.s32.totalorder %s124, %s140
      %p142 = scmp.eq.s32.totalorder %s26, 0
      %p143 = por %p141, %p142
      %s144 = ssub.s32 %s28, %s35
      %p145 = scmp.eq.s32.totalorder %s144, 0
      %s147 = sadd.s32 %s146, 1
      %s148 = scalar_select %p145, %s146, %s147
      %p151 = pneg %p145
      %p152 = scmp.eq.s32.totalorder %s20, 3
      %p153 = por %p151, %p152
      %p154 = scmp.ne.s32.totalorder %s146, %s149
      %p155 = scmp.eq.s32.totalorder %s20, 0
      %p156 = por %p154, %p155
      %p157 = scmp.ne.s32.totalorder %s146, %s149
      %p158 = scmp.eq.s32.totalorder %s25, 3
      %p159 = por %p157, %p158
      %p160 = scmp.ne.s32.totalorder %s149, %s150
      %p161 = scmp.eq.s32.totalorder %s25, 0
      %p162 = por %p160, %p161
      %p163 = scmp.ne.s32.totalorder %s149, %s150
      %p164 = scmp.eq.s32.totalorder %s26, 3
      %p165 = por %p163, %p164
      %p167 = scmp.ne.s32.totalorder %s150, %s166
      %p168 = scmp.eq.s32.totalorder %s26, 0
      %p169 = por %p167, %p168
      %s170 = ssub.s32 %s28, %s35
      %p171 = scmp.eq.s32.totalorder %s170, 0
      %s173 = sadd.s32 %s172, 1
      %s174 = scalar_select %p171, %s172, %s173
      %p177 = pneg %p171
      %p178 = scmp.eq.s32.totalorder %s20, 3
      %p179 = por %p177, %p178
      %p180 = scmp.ne.s32.totalorder %s172, %s175
      %p181 = scmp.eq.s32.totalorder %s20, 0
      %p182 = por %p180, %p181
      %p183 = scmp.ne.s32.totalorder %s172, %s175
      %p184 = scmp.eq.s32.totalorder %s25, 3
      %p185 = por %p183, %p184
      %p186 = scmp.ne.s32.totalorder %s175, %s176
      %p187 = scmp.eq.s32.totalorder %s25, 0
      %p188 = por %p186, %p187
      %p189 = scmp.ne.s32.totalorder %s175, %s176
      %p190 = scmp.eq.s32.totalorder %s26, 3
      %p191 = por %p189, %p190
      %p193 = scmp.ne.s32.totalorder %s176, %s192
      %p194 = scmp.eq.s32.totalorder %s26, 0
      %p195 = por %p193, %p194
      %s196 = ssub.s32 %s28, %s35
      %p197 = scmp.eq.s32.totalorder %s196, 0
      %s199 = sadd.s32 %s198, 1
      %s200 = scalar_select %p197, %s198, %s199
      %p203 = pneg %p197
      %p204 = scmp.eq.s32.totalorder %s20, 3
      %p205 = por %p203, %p204
      %p206 = scmp.ne.s32.totalorder %s198, %s201
      %p207 = scmp.eq.s32.totalorder %s20, 0
      %p208 = por %p206, %p207
      %p209 = scmp.ne.s32.totalorder %s198, %s201
      %p210 = scmp.eq.s32.totalorder %s25, 3
      %p211 = por %p209, %p210
      %p212 = scmp.ne.s32.totalorder %s201, %s202
      %p213 = scmp.eq.s32.totalorder %s25, 0
      %p214 = por %p212, %p213
      %p215 = scmp.ne.s32.totalorder %s201, %s202
      %p216 = scmp.eq.s32.totalorder %s26, 3
      %p217 = por %p215, %p216
      %p219 = scmp.ne.s32.totalorder %s202, %s218
      %p220 = scmp.eq.s32.totalorder %s26, 0
      %p221 = por %p219, %p220
      %s222 = ssub.s32 %s28, %s35
      %p223 = scmp.eq.s32.totalorder %s222, 0
      %s225 = sadd.s32 %s224, 1
      %s226 = scalar_select %p223, %s224, %s225
      %p229 = pneg %p223
      %p230 = scmp.eq.s32.totalorder %s20, 3
      %p231 = por %p229, %p230
      %p232 = scmp.ne.s32.totalorder %s224, %s227
      %p233 = scmp.eq.s32.totalorder %s20, 0
      %p234 = por %p232, %p233
      %p235 = scmp.ne.s32.totalorder %s224, %s227
      %p236 = scmp.eq.s32.totalorder %s25, 3
      %p237 = por %p235, %p236
      %p238 = scmp.ne.s32.totalorder %s227, %s228
      %p239 = scmp.eq.s32.totalorder %s25, 0
      %p240 = por %p238, %p239
      %p241 = scmp.ne.s32.totalorder %s227, %s228
      %p242 = scmp.eq.s32.totalorder %s26, 3
      %p243 = por %p241, %p242
      %p245 = scmp.ne.s32.totalorder %s228, %s244
      %p246 = scmp.eq.s32.totalorder %s26, 0
      %p247 = por %p245, %p246
      %s248 = ssub.s32 %s27, %s39
      %p249 = scmp.eq.s32.totalorder %s248, 0
      %s251 = sadd.s32 %s250, 1
      %s252 = scalar_select %p249, %s250, %s251
      %p255 = pneg %p249
      %p256 = scmp.eq.s32.totalorder %s20, 3
      %p257 = por %p255, %p256
      %p258 = scmp.ne.s32.totalorder %s250, %s253
      %p259 = scmp.eq.s32.totalorder %s20, 0
      %p260 = por %p258, %p259
      %p261 = scmp.ne.s32.totalorder %s250, %s253
      %p262 = scmp.eq.s32.totalorder %s25, 3
      %p263 = por %p261, %p262
      %p264 = scmp.ne.s32.totalorder %s253, %s254
      %p265 = scmp.eq.s32.totalorder %s25, 0
      %p266 = por %p264, %p265
      %p267 = scmp.ne.s32.totalorder %s253, %s254
      %p268 = scmp.eq.s32.totalorder %s26, 3
      %p269 = por %p267, %p268
      %p271 = scmp.ne.s32.totalorder %s254, %s270
      %p272 = scmp.eq.s32.totalorder %s26, 0
      %p273 = por %p271, %p272
      %p274 = scmp.le.s32.totalorder 1, %s20
      %p275 = scmp.lt.s32.totalorder %s20, 5
      %p276 = pnand %p274, %p275
      %p277 = pneg %p276
      // Predicated region
      $region9: #{transformer_forward.2} parent=5 // pred_check
        _
      $region10: #{transformer_forward.2} parent=5 // pred_check_branch
        %279 = sbr.rel (%p276) target = $region12
      $region11: #{transformer_forward.2} parent=5 // pred_region
        %s280 = ssub.s32 %s20, 1
      $region12: #{transformer_forward.2} parent=5 // pred_fallthru
        _
      %p281 = scmp.lt.s32.totalorder %s20, 4
      // Predicated region
      $region13: #{transformer_forward.2} parent=5 // pred_check
        %p282 = pneg %p281
      $region14: #{transformer_forward.2} parent=5 // pred_check_branch
        %284 = sbr.rel (%p282) target = $region16
      $region15: #{transformer_forward.2} parent=5 // pred_region
        // Predicated region
        $region17: #{transformer_forward.2} parent=15 // pred_check
          %p285 = pneg %p52
        $region18: #{transformer_forward.2} parent=15 // pred_check_branch
          %287 = sbr.rel (%p285) target = $region20
        $region19: #{transformer_forward.2} parent=15 // pred_region
          %s288 = sand.u32 %s42, 1
          %s289 = scalar_lea.sflag [#allocation3], %s288
          %s290 = sand.u32 %s42, 1
          %s291 = smul.addr %s290, 8
          %s292 = scalar_lea.vmem [#allocation2], %s291
          %s294 = ssub.s32 128, 128
          %295 = vsyncadd %s289, %s294
          %s296 = smul.addr %s27, 128
          %s297 = scalar_lea.hbm %s0, %s296
          %s299 = sshll.u32 %s292, 4
          %s300 = int_to_ptr.vmem [resolvable:$true] %s299
          %302 = dma.hbm_to_vmem [thread:$0]  %s297, 128, %s300, %s289
        $region20: #{transformer_forward.2} parent=15 // pred_fallthru
          _
        // Predicated region
        $region21: #{transformer_forward.2} parent=15 // pred_check
          %p303 = pneg %p78
        $region22: #{transformer_forward.2} parent=15 // pred_check_branch
          %305 = sbr.rel (%p303) target = $region24
        $region23: #{transformer_forward.2} parent=15 // pred_region
          %s306 = sand.u32 %s20, 1
          %s307 = scalar_lea.sflag [#allocation5], %s306
          %s308 = sand.u32 %s68, 1
          %s309 = smul.addr %s308, 8
          %s310 = scalar_lea.vmem [#allocation4], %s309
          %s312 = ssub.s32 128, 128
          %313 = vsyncadd %s307, %s312
          %s314 = smul.addr %s27, 128
          %s315 = scalar_lea.hbm %s1, %s314
          %s317 = sshll.u32 %s310, 4
          %s318 = int_to_ptr.vmem [resolvable:$true] %s317
          %320 = dma.hbm_to_vmem [thread:$0]  %s315, 128, %s318, %s307
        $region24: #{transformer_forward.2} parent=15 // pred_fallthru
          _
        // Predicated region
        $region25: #{transformer_forward.2} parent=15 // pred_check
          %p321 = pneg %p104
        $region26: #{transformer_forward.2} parent=15 // pred_check_branch
          %323 = sbr.rel (%p321) target = $region28
        $region27: #{transformer_forward.2} parent=15 // pred_region
          %p324 = scmp.lt.s32.totalorder %s27, 1
          %s325 = scalar_select %p324, %s27, 1
          %s326 = smul.addr %s325, 8
          %s327 = scalar_lea.vmem %s2, %s326
        $region28: #{transformer_forward.2} parent=15 // pred_fallthru
          _
        // Predicated region
        $region29: #{transformer_forward.2} parent=15 // pred_check
          %p328 = pneg %p130
        $region30: #{transformer_forward.2} parent=15 // pred_check_branch
          %330 = sbr.rel (%p328) target = $region32
        $region31: #{transformer_forward.2} parent=15 // pred_region
          %p331 = scmp.lt.s32.totalorder %s28, 1
          %s332 = scalar_select %p331, %s28, 1
          %s333 = smul.addr %s332, 16
          %s334 = smul.addr %s333, 4
          %s335 = scalar_lea.vmem %s3, %s334
        $region32: #{transformer_forward.2} parent=15 // pred_fallthru
          _
        // Predicated region
        $region33: #{transformer_forward.2} parent=15 // pred_check
          %p336 = pneg %p156
        $region34: #{transformer_forward.2} parent=15 // pred_check_branch
          %338 = sbr.rel (%p336) target = $region36
        $region35: #{transformer_forward.2} parent=15 // pred_region
          %p339 = scmp.lt.s32.totalorder %s28, 1
          %s340 = scalar_select %p339, %s28, 1
          %s341 = smul.addr %s340, 2
          %s342 = smul.addr %s341, 8
          %s343 = scalar_lea.vmem %s4, %s342
        $region36: #{transformer_forward.2} parent=15 // pred_fallthru
          _
        // Predicated region
        $region37: #{transformer_forward.2} parent=15 // pred_check
          %p344 = pneg %p182
        $region38: #{transformer_forward.2} parent=15 // pred_check_branch
          %346 = sbr.rel (%p344) target = $region40
        $region39: #{transformer_forward.2} parent=15 // pred_region
          %s347 = sand.u32 %s20, 1
          %s348 = scalar_lea.sflag [#allocation5], %s347
          %s349 = sand.u32 %s172, 1
          %s350 = smul.addr %s349, 16
          %s351 = scalar_lea.vmem [#allocation6], %s350
          %s353 = ssub.s32 256, 256
          %354 = vsyncadd %s348, %s353
          %s355 = smul.addr %s28, 4
          %s356 = smul.addr %s355, 64
          %s357 = scalar_lea.hbm %s5, %s356
          %s358 = sshll.u32 %s351, 4
          %s359 = int_to_ptr.vmem [resolvable:$true] %s358
          %364 = dma.hbm_to_vmem [thread:$0]  %s357, 256, %s359, %s348, 64, 64, 4
        $region40: #{transformer_forward.2} parent=15 // pred_fallthru
          _
        // Predicated region
        $region41: #{transformer_forward.2} parent=15 // pred_check
          %p365 = pneg %p208
        $region42: #{transformer_forward.2} parent=15 // pred_check_branch
          %367 = sbr.rel (%p365) target = $region44
        $region43: #{transformer_forward.2} parent=15 // pred_region
          %p368 = scmp.lt.s32.totalorder %s28, 1
          %s369 = scalar_select %p368, %s28, 1
          %s370 = scalar_lea.vmem %s6, %s369
        $region44: #{transformer_forward.2} parent=15 // pred_fallthru
          _
        // Predicated region
        $region45: #{transformer_forward.2} parent=15 // pred_check
          %p371 = pneg %p234
        $region46: #{transformer_forward.2} parent=15 // pred_check_branch
          %373 = sbr.rel (%p371) target = $region48
        $region47: #{transformer_forward.2} parent=15 // pred_region
          %p374 = scmp.lt.s32.totalorder %s28, 1
          %s375 = scalar_select %p374, %s28, 1
          %s376 = smul.addr %s375, 8
          %s377 = smul.addr %s376, 4
          %s378 = scalar_lea.vmem %s7, %s377
        $region48: #{transformer_forward.2} parent=15 // pred_fallthru
          _
      $region16: #{transformer_forward.2} parent=5 // pred_fallthru
        _
      %p379 = scmp.le.s32.totalorder 1, %s20
      %p380 = scmp.lt.s32.totalorder %s20, 5
      %p381 = pnand %p379, %p380
      %p382 = pneg %p381
      // Predicated region
      $region49: #{transformer_forward.2} parent=5 // pred_check
        _
      $region50: #{transformer_forward.2} parent=5 // pred_check_branch
        %384 = sbr.rel (%p381) target = $region52
      $region51: #{transformer_forward.2} parent=5 // pred_region
        %s385 = ssub.s32 %s20, 1
        %s386 = sand.u32 %s45, 1
        %s387 = scalar_lea.sflag [#allocation3], %s386
        %s388 = sand.u32 %s45, 1
        %s389 = smul.addr %s388, 8
        %s390 = scalar_lea.vmem [#allocation2], %s389
        // Predicated region
        $region53: #{transformer_forward.2} parent=51 // pred_check
          %p391 = pneg %p58
        $region54: #{transformer_forward.2} parent=51 // pred_check_branch
          %393 = sbr.rel (%p391) target = $region56
        $region55: #{transformer_forward.2} parent=51 // pred_region
          %394 = dma.done %s387, 128
        $region56: #{transformer_forward.2} parent=51 // pred_fallthru
          _
        %s395 = sand.u32 %s25, 1
        %s396 = scalar_lea.sflag [#allocation5], %s395
        %s397 = sand.u32 %s71, 1
        %s398 = smul.addr %s397, 8
        %s399 = scalar_lea.vmem [#allocation4], %s398
        // Predicated region
        $region57: #{transformer_forward.2} parent=51 // pred_check
          %p400 = pneg %p84
        $region58: #{transformer_forward.2} parent=51 // pred_check_branch
          %402 = sbr.rel (%p400) target = $region60
        $region59: #{transformer_forward.2} parent=51 // pred_region
          %403 = dma.done %s396, 128
        $region60: #{transformer_forward.2} parent=51 // pred_fallthru
          _
        %s404 = sand.u32 %s25, 1
        %s405 = scalar_lea.sflag [#allocation5], %s404
        %s406 = sand.u32 %s175, 1
        %s407 = smul.addr %s406, 16
        %s408 = scalar_lea.vmem [#allocation6], %s407
        // Predicated region
        $region61: #{transformer_forward.2} parent=51 // pred_check
          %p409 = pneg %p188
        $region62: #{transformer_forward.2} parent=51 // pred_check_branch
          %411 = sbr.rel (%p409) target = $region64
        $region63: #{transformer_forward.2} parent=51 // pred_region
          %412 = dma.done %s405, 256
        $region64: #{transformer_forward.2} parent=51 // pred_fallthru
          _
        %s413 = sand.u32 %s45, 1
        %s414 = scalar_lea.sflag [#allocation3], %s413
        %s415 = sand.u32 %s45, 1
        %s416 = smul.addr %s415, 8
        %s417 = scalar_lea.vmem [#allocation2], %s416
        %p418 = pneg %p58
        %p419 = pneg %p55
        %s420 = sand.u32 %s25, 1
        %s421 = scalar_lea.sflag [#allocation5], %s420
        %s422 = sand.u32 %s71, 1
        %s423 = smul.addr %s422, 8
        %s424 = scalar_lea.vmem [#allocation4], %s423
        %p425 = pneg %p84
        %p426 = pneg %p81
        %p427 = scmp.lt.s32.totalorder %s29, 1
        %s428 = scalar_select %p427, %s29, 1
        %s429 = smul.addr %s428, 8
        %s430 = scalar_lea.vmem %s2, %s429
        %p431 = pneg %p110
        %p432 = pneg %p107
        %p433 = scmp.lt.s32.totalorder %s30, 1
        %s434 = scalar_select %p433, %s30, 1
        %s435 = smul.addr %s434, 16
        %s436 = smul.addr %s435, 4
        %s437 = scalar_lea.vmem %s3, %s436
        %p438 = pneg %p136
        %p439 = pneg %p133
        %p440 = scmp.lt.s32.totalorder %s30, 1
        %s441 = scalar_select %p440, %s30, 1
        %s442 = smul.addr %s441, 2
        %s443 = smul.addr %s442, 8
        %s444 = scalar_lea.vmem %s4, %s443
        %p445 = pneg %p162
        %p446 = pneg %p159
        %s447 = sand.u32 %s25, 1
        %s448 = scalar_lea.sflag [#allocation5], %s447
        %s449 = sand.u32 %s175, 1
        %s450 = smul.addr %s449, 16
        %s451 = scalar_lea.vmem [#allocation6], %s450
        %p452 = pneg %p188
        %p453 = pneg %p185
        %p454 = scmp.lt.s32.totalorder %s30, 1
        %s455 = scalar_select %p454, %s30, 1
        %s456 = scalar_lea.vmem %s6, %s455
        %p457 = pneg %p214
        %p458 = pneg %p211
        %p459 = scmp.lt.s32.totalorder %s30, 1
        %s460 = scalar_select %p459, %s30, 1
        %s461 = smul.addr %s460, 8
        %s462 = smul.addr %s461, 4
        %s463 = scalar_lea.vmem %s7, %s462
        %p464 = pneg %p240
        %p465 = pneg %p237
        %p466 = pneg %p266
        %p467 = pneg %p263
        %p468 = scmp.lt.s32.totalorder %s29, 1
        %s469 = scalar_select %p468, %s29, 1
        %s470 = smul.addr %s469, 8
        %s471 = scalar_lea.vmem %s8, %s470
        %p472 = scmp.lt.s32.totalorder %s29, 1
        %s473 = scalar_select %p472, %s29, 1
        %s474 = smul.addr %s473, 8
        %s475 = scalar_lea.vmem %s2, %s474
        %p476 = scmp.lt.s32.totalorder %s30, 1
        %s477 = scalar_select %p476, %s30, 1
        %s478 = smul.addr %s477, 16
        %s479 = smul.addr %s478, 4
        %s480 = scalar_lea.vmem %s3, %s479
        %p481 = scmp.lt.s32.totalorder %s30, 1
        %s482 = scalar_select %p481, %s30, 1
        %s483 = smul.addr %s482, 2
        %s484 = smul.addr %s483, 8
        %s485 = scalar_lea.vmem %s4, %s484
        %p486 = scmp.lt.s32.totalorder %s30, 1
        %s487 = scalar_select %p486, %s30, 1
        %s488 = scalar_lea.vmem %s6, %s487
        %p489 = scmp.lt.s32.totalorder %s30, 1
        %s490 = scalar_select %p489, %s30, 1
        %s491 = smul.addr %s490, 8
        %s492 = smul.addr %s491, 4
        %s493 = scalar_lea.vmem %s7, %s492
        %p494 = scmp.lt.s32.totalorder %s29, 1
        %s495 = scalar_select %p494, %s29, 1
        %s496 = smul.addr %s495, 8
        %s497 = scalar_lea.vmem %s8, %s496
        %p499 = scmp.eq.s32.totalorder %s30, 0
        // Predicated region
        $region65: #{transformer_forward.2} parent=51 // pred_check
          %p500 = pneg %p499
        $region66: #{transformer_forward.2} parent=51 // pred_check_branch
          %502 = sbr.rel (%p500) target = $region68
        $region67: #{transformer_forward.2} parent=51 // pred_region
          %v503 = vld [vmem:[%s390] sm:$0xff]
          %vm504 = vcmask 261120
          %505 = vst.msk [vmem:[%s497] sm:$0xff] %vm504, %v503
        $region68: #{transformer_forward.2} parent=51 // pred_fallthru
          _
        %v506 = vld [vmem:[%s497] sm:$0xff]
        %v507 = vld [vmem:[%s399] sm:$0xff]
        %v508 = vld [vmem:[%s475] sm:$0xff]
        %v509 = vld [vmem:[%s480] sm:$0xf]
        %v510 = vld [vmem:[%s480 + $0x4] sm:$0xf]
        %v511 = vld [vmem:[%s480 + $0x8] sm:$0xf]
        %v512 = vld [vmem:[%s480 + $0xc] sm:$0xf]
        %s513 = scalar_lea.vmem %s480, 16
        %v514 = vld [vmem:[%s513] sm:$0xf]
        %v515 = vld [vmem:[%s513 + $0x4] sm:$0xf]
        %v516 = vld [vmem:[%s513 + $0x8] sm:$0xf]
        %v517 = vld [vmem:[%s513 + $0xc] sm:$0xf]
        %s518 = scalar_lea.vmem %s480, 32
        %v519 = vld [vmem:[%s518] sm:$0xf]
        %v520 = vld [vmem:[%s518 + $0x4] sm:$0xf]
        %v521 = vld [vmem:[%s518 + $0x8] sm:$0xf]
        %v522 = vld [vmem:[%s518 + $0xc] sm:$0xf]
        %s523 = scalar_lea.vmem %s480, 48
        %v524 = vld [vmem:[%s523] sm:$0xf]
        %v525 = vld [vmem:[%s523 + $0x4] sm:$0xf]
        %v526 = vld [vmem:[%s523 + $0x8] sm:$0xf]
        %v527 = vld [vmem:[%s523 + $0xc] sm:$0xf]
        %v528 = vld [vmem:[%s485] sm:$0xff]
        %v529 = vld [vmem:[%s485 + $0x8] sm:$0x7]
        %v530 = vadd.f32 %v506, %v508
        %v531 = vadd.f32 %v507, %v508
        %v532 = vpack.c.bf16 %v530, %v530
        %v533 = vpack.c.bf16 %v531, %v531
        %v534 = vpack.c.bf16 %v507, %v507
        %v535 = vlaneseq
        %v536 = vshrl.u32 %v535, 7
        %v537 = vsub.s32 0, %v536
        %v538 = vrot.slane %v528, %v537
        %v543 = vunpack.c.l.b16 %v509
        %v544 = vunpack.c.l.b16 %v510
        %v545 = vunpack.c.l.b16 %v511
        %v546 = vunpack.c.l.b16 %v512
        %v547 = vpack.c.b16 %v544, %v543
        %v548 = vpack.c.b16 %v546, %v545
        %vm551 = vcmask 261120
        %v553 = vsel %vm551, %v532, 0
        %555 = vmatprep.subr.bf16.mxu0 0
        %556 = vmatpush1.bf16.msra.mxu0 %v547
        %557 = vmatprep.subr.bf16.mxu0 0
        %558 = vmatpush1.bf16.msra.mxu0 %v548
        %559 = vmatprep.subr.bf16.mxu0 0
        %560 = vmatpush1.bf16.msra.mxu0 0
        %561 = vmatprep.subr.bf16.mxu0 0
        %562 = vmatpush1.bf16.msra.mxu0 0
        %563 = vmatprep.subr.bf16.mxu0 0
        %564 = vmatpush1.bf16.msra.mxu0 0
        %565 = vmatprep.subr.bf16.mxu0 0
        %566 = vmatpush1.bf16.msra.mxu0 0
        %567 = vmatprep.subr.bf16.mxu0 0
        %568 = vmatpush1.bf16.msra.mxu0 0
        %569 = vmatprep.subr.bf16.mxu0 0
        %570 = vmatpush1.bf16.msra.mxu0 0
        %571 = vmatprep.subr.bf16.mxu0 0
        %572 = vmatpush1.bf16.msra.mxu0 0
        %573 = vmatprep.subr.bf16.mxu0 0
        %574 = vmatpush1.bf16.msra.mxu0 0
        %575 = vmatprep.subr.bf16.mxu0 0
        %576 = vmatpush1.bf16.msra.mxu0 0
        %577 = vmatprep.subr.bf16.mxu0 0
        %578 = vmatpush1.bf16.msra.mxu0 0
        %579 = vmatprep.subr.bf16.mxu0 0
        %580 = vmatpush1.bf16.msra.mxu0 0
        %581 = vmatprep.subr.bf16.mxu0 0
        %582 = vmatpush1.bf16.msra.mxu0 0
        %583 = vmatprep.subr.bf16.mxu0 0
        %584 = vmatpush1.bf16.msra.mxu0 0
        %585 = vmatprep.subr.bf16.mxu0 0
        %586 = vmatpush1.bf16.msra.mxu0 0
        %587 = vmatprep.mubr.bf16.mxu0 0
        %588 = vmatmul.mubr.bf16.gmra.mrb[0].mxu0 %v553
        %v589 = vpop.f32.mrb[0].mxu0
        %v590 = vadd.f32 %v538, %v589
        %v591 = vpop.f32.mrb[0].mxu0
        %v592 = vpop.f32.mrb[0].mxu0
        %v593 = vpop.f32.mrb[0].mxu0
        %594 = vdwg.mxu0
        %v595 = vmul.f32 %v590, 0.35355338
        %v596 = vlaneseq
        %v597 = vshrl.u32 %v596, 7
        %v598 = vsub.s32 1, %v597
        %v599 = vrot.slane %v528, %v598
        %v604 = vunpack.c.l.b16 %v514
        %v605 = vunpack.c.l.b16 %v515
        %v606 = vunpack.c.l.b16 %v516
        %v607 = vunpack.c.l.b16 %v517
        %v608 = vpack.c.b16 %v605, %v604
        %v609 = vpack.c.b16 %v607, %v606
        %v613 = vsel %vm551, %v533, 0
        %615 = vmatprep.subr.bf16.mxu0 0
        %616 = vmatpush1.bf16.msra.mxu0 %v608
        %617 = vmatprep.subr.bf16.mxu0 0
        %618 = vmatpush1.bf16.msra.mxu0 %v609
        %619 = vmatprep.subr.bf16.mxu0 0
        %620 = vmatpush1.bf16.msra.mxu0 0
        %621 = vmatprep.subr.bf16.mxu0 0
        %622 = vmatpush1.bf16.msra.mxu0 0
        %623 = vmatprep.subr.bf16.mxu0 0
        %624 = vmatpush1.bf16.msra.mxu0 0
        %625 = vmatprep.subr.bf16.mxu0 0
        %626 = vmatpush1.bf16.msra.mxu0 0
        %627 = vmatprep.subr.bf16.mxu0 0
        %628 = vmatpush1.bf16.msra.mxu0 0
        %629 = vmatprep.subr.bf16.mxu0 0
        %630 = vmatpush1.bf16.msra.mxu0 0
        %631 = vmatprep.subr.bf16.mxu0 0
        %632 = vmatpush1.bf16.msra.mxu0 0
        %633 = vmatprep.subr.bf16.mxu0 0
        %634 = vmatpush1.bf16.msra.mxu0 0
        %635 = vmatprep.subr.bf16.mxu0 0
        %636 = vmatpush1.bf16.msra.mxu0 0
        %637 = vmatprep.subr.bf16.mxu0 0
        %638 = vmatpush1.bf16.msra.mxu0 0
        %639 = vmatprep.subr.bf16.mxu0 0
        %640 = vmatpush1.bf16.msra.mxu0 0
        %641 = vmatprep.subr.bf16.mxu0 0
        %642 = vmatpush1.bf16.msra.mxu0 0
        %643 = vmatprep.subr.bf16.mxu0 0
        %644 = vmatpush1.bf16.msra.mxu0 0
        %645 = vmatprep.subr.bf16.mxu0 0
        %646 = vmatpush1.bf16.msra.mxu0 0
        %647 = vmatprep.mubr.bf16.mxu0 0
        %648 = vmatmul.mubr.bf16.gmra.mrb[0].mxu0 %v613
        %v649 = vpop.f32.mrb[0].mxu0
        %v650 = vadd.f32 %v599, %v649
        %v651 = vpop.f32.mrb[0].mxu0
        %v652 = vpop.f32.mrb[0].mxu0
        %v653 = vpop.f32.mrb[0].mxu0
        %654 = vdwg.mxu0
        %v655 = vlaneseq
        %v656 = vshrl.u32 %v655, 7
        %v657 = vsub.s32 2, %v656
        %v658 = vrot.slane %v528, %v657
        %v663 = vunpack.c.l.b16 %v519
        %v664 = vunpack.c.l.b16 %v520
        %v665 = vunpack.c.l.b16 %v521
        %v666 = vunpack.c.l.b16 %v522
        %v667 = vpack.c.b16 %v664, %v663
        %v668 = vpack.c.b16 %v666, %v665
        %v672 = vsel %vm551, %v534, 0
        %674 = vmatprep.subr.bf16.mxu0 0
        %675 = vmatpush1.bf16.msra.mxu0 %v667
        %676 = vmatprep.subr.bf16.mxu0 0
        %677 = vmatpush1.bf16.msra.mxu0 %v668
        %678 = vmatprep.subr.bf16.mxu0 0
        %679 = vmatpush1.bf16.msra.mxu0 0
        %680 = vmatprep.subr.bf16.mxu0 0
        %681 = vmatpush1.bf16.msra.mxu0 0
        %682 = vmatprep.subr.bf16.mxu0 0
        %683 = vmatpush1.bf16.msra.mxu0 0
        %684 = vmatprep.subr.bf16.mxu0 0
        %685 = vmatpush1.bf16.msra.mxu0 0
        %686 = vmatprep.subr.bf16.mxu0 0
        %687 = vmatpush1.bf16.msra.mxu0 0
        %688 = vmatprep.subr.bf16.mxu0 0
        %689 = vmatpush1.bf16.msra.mxu0 0
        %690 = vmatprep.subr.bf16.mxu0 0
        %691 = vmatpush1.bf16.msra.mxu0 0
        %692 = vmatprep.subr.bf16.mxu0 0
        %693 = vmatpush1.bf16.msra.mxu0 0
        %694 = vmatprep.subr.bf16.mxu0 0
        %695 = vmatpush1.bf16.msra.mxu0 0
        %696 = vmatprep.subr.bf16.mxu0 0
        %697 = vmatpush1.bf16.msra.mxu0 0
        %698 = vmatprep.subr.bf16.mxu0 0
        %699 = vmatpush1.bf16.msra.mxu0 0
        %700 = vmatprep.subr.bf16.mxu0 0
        %701 = vmatpush1.bf16.msra.mxu0 0
        %702 = vmatprep.subr.bf16.mxu0 0
        %703 = vmatpush1.bf16.msra.mxu0 0
        %704 = vmatprep.subr.bf16.mxu0 0
        %705 = vmatpush1.bf16.msra.mxu0 0
        %706 = vmatprep.mubr.bf16.mxu0 0
        %707 = vmatmul.mubr.bf16.gmra.mrb[0].mxu0 %v672
        %v708 = vpop.f32.mrb[0].mxu0
        %v709 = vadd.f32 %v658, %v708
        %v710 = vpop.f32.mrb[0].mxu0
        %v711 = vpop.f32.mrb[0].mxu0
        %v712 = vpop.f32.mrb[0].mxu0
        %713 = vdwg.mxu0
        %v714 = vpack.c.bf16 %v595, %v595
        %v715 = vpack.c.bf16 %v650, %v650
        %v716 = vpack.c.bf16 %v709, %v709
        %vm717 = vcmask 64512
        %v719 = vsel %vm717, %v714, 0
        %v722 = vsel %vm717, %v715, 0
        %724 = vmatprep.subr.bf16.mxu0 0
        %725 = vmatpush1.bf16.xpose.msra.mxu0 %v722
        %726 = vmatprep.subr.bf16.mxu0 0
        %727 = vmatpush1.bf16.xpose.msra.mxu0 0
        %728 = vmatprep.subr.bf16.mxu0 0
        %729 = vmatpush1.bf16.xpose.msra.mxu0 0
        %730 = vmatprep.subr.bf16.mxu0 0
        %731 = vmatpush1.bf16.xpose.msra.mxu0 0
        %732 = vmatprep.subr.bf16.mxu0 0
        %733 = vmatpush1.bf16.xpose.msra.mxu0 0
        %734 = vmatprep.subr.bf16.mxu0 0
        %735 = vmatpush1.bf16.xpose.msra.mxu0 0
        %736 = vmatprep.subr.bf16.mxu0 0
        %737 = vmatpush1.bf16.xpose.msra.mxu0 0
        %738 = vmatprep.subr.bf16.mxu0 0
        %739 = vmatpush1.bf16.xpose.msra.mxu0 0
        %740 = vmatprep.subr.bf16.mxu0 0
        %741 = vmatpush1.bf16.xpose.msra.mxu0 0
        %742 = vmatprep.subr.bf16.mxu0 0
        %743 = vmatpush1.bf16.xpose.msra.mxu0 0
        %744 = vmatprep.subr.bf16.mxu0 0
        %745 = vmatpush1.bf16.xpose.msra.mxu0 0
        %746 = vmatprep.subr.bf16.mxu0 0
        %747 = vmatpush1.bf16.xpose.msra.mxu0 0
        %748 = vmatprep.subr.bf16.mxu0 0
        %749 = vmatpush1.bf16.xpose.msra.mxu0 0
        %750 = vmatprep.subr.bf16.mxu0 0
        %751 = vmatpush1.bf16.xpose.msra.mxu0 0
        %752 = vmatprep.subr.bf16.mxu0 0
        %753 = vmatpush1.bf16.xpose.msra.mxu0 0
        %754 = vmatprep.subr.bf16.mxu0 0
        %755 = vmatpush1.bf16.xpose.msra.mxu0 0
        %756 = vmatprep.mubr.bf16.mxu0 0
        %757 = vmatmul.mubr.bf16.gmra.mrb[0].mxu0 %v719
        %v758 = vpop.f32.mrb[0].mxu0
        %v759 = vadd.f32 0.0, %v758
        %v760 = vpop.f32.mrb[0].mxu0
        %v761 = vpop.f32.mrb[0].mxu0
        %v762 = vpop.f32.mrb[0].mxu0
        %763 = vdwg.mxu0
        %v764 = vsel %vm717, %v759, -inf
        %765 = vmax.xlane.f32.xlu0 %v764
        %v766 = vpop.xlane.xlu0 %765
        %v767 = vsub.f32 %v759, %v766
        %v768 = vmul.f32 %v767, 1.442695
        %v769 = vpow.pop %v768
        %v770 = vsel %vm717, %v769, 0.0
        %771 = vadd.xlane.f32.xlu0 %v770
        %v772 = vpop.xlane.xlu0 %771
        %v773 = vrcp.pop %v772
        %v774 = vmul.f32 %v769, %v773
        %v775 = vpack.c.bf16 %v774, %v774
        %v777 = vsel %vm717, %v775, 0
        %vm779 = vcmask 1043456
        %v781 = vsel %vm779, %v716, 0
        %783 = vmatprep.subr.bf16.mxu0 0
        %784 = vmatpush1.bf16.msra.mxu0 %v781
        %785 = vmatprep.subr.bf16.mxu0 0
        %786 = vmatpush1.bf16.msra.mxu0 0
        %787 = vmatprep.subr.bf16.mxu0 0
        %788 = vmatpush1.bf16.msra.mxu0 0
        %789 = vmatprep.subr.bf16.mxu0 0
        %790 = vmatpush1.bf16.msra.mxu0 0
        %791 = vmatprep.subr.bf16.mxu0 0
        %792 = vmatpush1.bf16.msra.mxu0 0
        %793 = vmatprep.subr.bf16.mxu0 0
        %794 = vmatpush1.bf16.msra.mxu0 0
        %795 = vmatprep.subr.bf16.mxu0 0
        %796 = vmatpush1.bf16.msra.mxu0 0
        %797 = vmatprep.subr.bf16.mxu0 0
        %798 = vmatpush1.bf16.msra.mxu0 0
        %799 = vmatprep.subr.bf16.mxu0 0
        %800 = vmatpush1.bf16.msra.mxu0 0
        %801 = vmatprep.subr.bf16.mxu0 0
        %802 = vmatpush1.bf16.msra.mxu0 0
        %803 = vmatprep.subr.bf16.mxu0 0
        %804 = vmatpush1.bf16.msra.mxu0 0
        %805 = vmatprep.subr.bf16.mxu0 0
        %806 = vmatpush1.bf16.msra.mxu0 0
        %807 = vmatprep.subr.bf16.mxu0 0
        %808 = vmatpush1.bf16.msra.mxu0 0
        %809 = vmatprep.subr.bf16.mxu0 0
        %810 = vmatpush1.bf16.msra.mxu0 0
        %811 = vmatprep.subr.bf16.mxu0 0
        %812 = vmatpush1.bf16.msra.mxu0 0
        %813 = vmatprep.subr.bf16.mxu0 0
        %814 = vmatpush1.bf16.msra.mxu0 0
        %815 = vmatprep.mubr.bf16.mxu0 0
        %816 = vmatmul.mubr.bf16.gmra.mrb[0].mxu0 %v777
        %v817 = vpop.f32.mrb[0].mxu0
        %v818 = vadd.f32 0.0, %v817
        %v819 = vpop.f32.mrb[0].mxu0
        %v820 = vpop.f32.mrb[0].mxu0
        %v821 = vpop.f32.mrb[0].mxu0
        %822 = vdwg.mxu0
        %824 = vrot.lane.b32.xlu0 %v714, 120
        %v825 = vpop.permute.xlu0 %824
        %827 = vrot.lane.b32.xlu0 %v715, 120
        %v828 = vpop.permute.xlu0 %827
        %v830 = vsel %vm717, %v825, 0
        %v833 = vsel %vm717, %v828, 0
        %835 = vmatprep.subr.bf16.mxu0 0
        %836 = vmatpush1.bf16.xpose.msra.mxu0 %v833
        %837 = vmatprep.subr.bf16.mxu0 0
        %838 = vmatpush1.bf16.xpose.msra.mxu0 0
        %839 = vmatprep.subr.bf16.mxu0 0
        %840 = vmatpush1.bf16.xpose.msra.mxu0 0
        %841 = vmatprep.subr.bf16.mxu0 0
        %842 = vmatpush1.bf16.xpose.msra.mxu0 0
        %843 = vmatprep.subr.bf16.mxu0 0
        %844 = vmatpush1.bf16.xpose.msra.mxu0 0
        %845 = vmatprep.subr.bf16.mxu0 0
        %846 = vmatpush1.bf16.xpose.msra.mxu0 0
        %847 = vmatprep.subr.bf16.mxu0 0
        %848 = vmatpush1.bf16.xpose.msra.mxu0 0
        %849 = vmatprep.subr.bf16.mxu0 0
        %850 = vmatpush1.bf16.xpose.msra.mxu0 0
        %851 = vmatprep.subr.bf16.mxu0 0
        %852 = vmatpush1.bf16.xpose.msra.mxu0 0
        %853 = vmatprep.subr.bf16.mxu0 0
        %854 = vmatpush1.bf16.xpose.msra.mxu0 0
        %855 = vmatprep.subr.bf16.mxu0 0
        %856 = vmatpush1.bf16.xpose.msra.mxu0 0
        %857 = vmatprep.subr.bf16.mxu0 0
        %858 = vmatpush1.bf16.xpose.msra.mxu0 0
        %859 = vmatprep.subr.bf16.mxu0 0
        %860 = vmatpush1.bf16.xpose.msra.mxu0 0
        %861 = vmatprep.subr.bf16.mxu0 0
        %862 = vmatpush1.bf16.xpose.msra.mxu0 0
        %863 = vmatprep.subr.bf16.mxu0 0
        %864 = vmatpush1.bf16.xpose.msra.mxu0 0
        %865 = vmatprep.subr.bf16.mxu0 0
        %866 = vmatpush1.bf16.xpose.msra.mxu0 0
        %867 = vmatprep.mubr.bf16.mxu0 0
        %868 = vmatmul.mubr.bf16.gmra.mrb[0].mxu0 %v830
        %v869 = vpop.f32.mrb[0].mxu0
        %v870 = vadd.f32 0.0, %v869
        %v871 = vpop.f32.mrb[0].mxu0
        %v872 = vpop.f32.mrb[0].mxu0
        %v873 = vpop.f32.mrb[0].mxu0
        %874 = vdwg.mxu0
        %v875 = vsel %vm717, %v870, -inf
        %876 = vmax.xlane.f32.xlu0 %v875
        %v877 = vpop.xlane.xlu0 %876
        %v878 = vsub.f32 %v870, %v877
        %v879 = vmul.f32 %v878, 1.442695
        %v880 = vpow.pop %v879
        %v881 = vsel %vm717, %v880, 0.0
        %882 = vadd.xlane.f32.xlu0 %v881
        %v883 = vpop.xlane.xlu0 %882
        %v884 = vrcp.pop %v883
        %v885 = vmul.f32 %v880, %v884
        %v886 = vpack.c.bf16 %v885, %v885
        %888 = vrot.lane.b32.xlu0 %v716, 120
        %v889 = vpop.permute.xlu0 %888
        %v891 = vsel %vm717, %v886, 0
        %v894 = vsel %vm779, %v889, 0
        %896 = vmatprep.subr.bf16.mxu0 0
        %897 = vmatpush1.bf16.msra.mxu0 %v894
        %898 = vmatprep.subr.bf16.mxu0 0
        %899 = vmatpush1.bf16.msra.mxu0 0
        %900 = vmatprep.subr.bf16.mxu0 0
        %901 = vmatpush1.bf16.msra.mxu0 0
        %902 = vmatprep.subr.bf16.mxu0 0
        %903 = vmatpush1.bf16.msra.mxu0 0
        %904 = vmatprep.subr.bf16.mxu0 0
        %905 = vmatpush1.bf16.msra.mxu0 0
        %906 = vmatprep.subr.bf16.mxu0 0
        %907 = vmatpush1.bf16.msra.mxu0 0
        %908 = vmatprep.subr.bf16.mxu0 0
        %909 = vmatpush1.bf16.msra.mxu0 0
        %910 = vmatprep.subr.bf16.mxu0 0
        %911 = vmatpush1.bf16.msra.mxu0 0
        %912 = vmatprep.subr.bf16.mxu0 0
        %913 = vmatpush1.bf16.msra.mxu0 0
        %914 = vmatprep.subr.bf16.mxu0 0
        %915 = vmatpush1.bf16.msra.mxu0 0
        %916 = vmatprep.subr.bf16.mxu0 0
        %917 = vmatpush1.bf16.msra.mxu0 0
        %918 = vmatprep.subr.bf16.mxu0 0
        %919 = vmatpush1.bf16.msra.mxu0 0
        %920 = vmatprep.subr.bf16.mxu0 0
        %921 = vmatpush1.bf16.msra.mxu0 0
        %922 = vmatprep.subr.bf16.mxu0 0
        %923 = vmatpush1.bf16.msra.mxu0 0
        %924 = vmatprep.subr.bf16.mxu0 0
        %925 = vmatpush1.bf16.msra.mxu0 0
        %926 = vmatprep.subr.bf16.mxu0 0
        %927 = vmatpush1.bf16.msra.mxu0 0
        %928 = vmatprep.mubr.bf16.mxu0 0
        %929 = vmatmul.mubr.bf16.gmra.mrb[0].mxu0 %v891
        %v930 = vpop.f32.mrb[0].mxu0
        %v931 = vadd.f32 0.0, %v930
        %v932 = vpop.f32.mrb[0].mxu0
        %v933 = vpop.f32.mrb[0].mxu0
        %v934 = vpop.f32.mrb[0].mxu0
        %935 = vdwg.mxu0
        %936 = vrot.lane.b32.xlu0 %v714, 112
        %v937 = vpop.permute.xlu0 %936
        %938 = vrot.lane.b32.xlu0 %v715, 112
        %v939 = vpop.permute.xlu0 %938
        %v941 = vsel %vm717, %v937, 0
        %v944 = vsel %vm717, %v939, 0
        %946 = vmatprep.subr.bf16.mxu0 0
        %947 = vmatpush1.bf16.xpose.msra.mxu0 %v944
        %948 = vmatprep.subr.bf16.mxu0 0
        %949 = vmatpush1.bf16.xpose.msra.mxu0 0
        %950 = vmatprep.subr.bf16.mxu0 0
        %951 = vmatpush1.bf16.xpose.msra.mxu0 0
        %952 = vmatprep.subr.bf16.mxu0 0
        %953 = vmatpush1.bf16.xpose.msra.mxu0 0
        %954 = vmatprep.subr.bf16.mxu0 0
        %955 = vmatpush1.bf16.xpose.msra.mxu0 0
        %956 = vmatprep.subr.bf16.mxu0 0
        %957 = vmatpush1.bf16.xpose.msra.mxu0 0
        %958 = vmatprep.subr.bf16.mxu0 0
        %959 = vmatpush1.bf16.xpose.msra.mxu0 0
        %960 = vmatprep.subr.bf16.mxu0 0
        %961 = vmatpush1.bf16.xpose.msra.mxu0 0
        %962 = vmatprep.subr.bf16.mxu0 0
        %963 = vmatpush1.bf16.xpose.msra.mxu0 0
        %964 = vmatprep.subr.bf16.mxu0 0
        %965 = vmatpush1.bf16.xpose.msra.mxu0 0
        %966 = vmatprep.subr.bf16.mxu0 0
        %967 = vmatpush1.bf16.xpose.msra.mxu0 0
        %968 = vmatprep.subr.bf16.mxu0 0
        %969 = vmatpush1.bf16.xpose.msra.mxu0 0
        %970 = vmatprep.subr.bf16.mxu0 0
        %971 = vmatpush1.bf16.xpose.msra.mxu0 0
        %972 = vmatprep.subr.bf16.mxu0 0
        %973 = vmatpush1.bf16.xpose.msra.mxu0 0
        %974 = vmatprep.subr.bf16.mxu0 0
        %975 = vmatpush1.bf16.xpose.msra.mxu0 0
        %976 = vmatprep.subr.bf16.mxu0 0
        %977 = vmatpush1.bf16.xpose.msra.mxu0 0
        %978 = vmatprep.mubr.bf16.mxu0 0
        %979 = vmatmul.mubr.bf16.gmra.mrb[0].mxu0 %v941
        %v980 = vpop.f32.mrb[0].mxu0
        %v981 = vadd.f32 0.0, %v980
        %v982 = vpop.f32.mrb[0].mxu0
        %v983 = vpop.f32.mrb[0].mxu0
        %v984 = vpop.f32.mrb[0].mxu0
        %985 = vdwg.mxu0
        %v986 = vsel %vm717, %v981, -inf
        %987 = vmax.xlane.f32.xlu0 %v986
        %v988 = vpop.xlane.xlu0 %987
        %v989 = vsub.f32 %v981, %v988
        %v990 = vmul.f32 %v989, 1.442695
        %v991 = vpow.pop %v990
        %v992 = vsel %vm717, %v991, 0.0
        %993 = vadd.xlane.f32.xlu0 %v992
        %v994 = vpop.xlane.xlu0 %993
        %v995 = vrcp.pop %v994
        %v996 = vmul.f32 %v991, %v995
        %v997 = vpack.c.bf16 %v996, %v996
        %998 = vrot.lane.b32.xlu0 %v716, 112
        %v999 = vpop.permute.xlu0 %998
        %v1001 = vsel %vm717, %v997, 0
        %v1004 = vsel %vm779, %v999, 0
        %1006 = vmatprep.subr.bf16.mxu0 0
        %1007 = vmatpush1.bf16.msra.mxu0 %v1004
        %1008 = vmatprep.subr.bf16.mxu0 0
        %1009 = vmatpush1.bf16.msra.mxu0 0
        %1010 = vmatprep.subr.bf16.mxu0 0
        %1011 = vmatpush1.bf16.msra.mxu0 0
        %1012 = vmatprep.subr.bf16.mxu0 0
        %1013 = vmatpush1.bf16.msra.mxu0 0
        %1014 = vmatprep.subr.bf16.mxu0 0
        %1015 = vmatpush1.bf16.msra.mxu0 0
        %1016 = vmatprep.subr.bf16.mxu0 0
        %1017 = vmatpush1.bf16.msra.mxu0 0
        %1018 = vmatprep.subr.bf16.mxu0 0
        %1019 = vmatpush1.bf16.msra.mxu0 0
        %1020 = vmatprep.subr.bf16.mxu0 0
        %1021 = vmatpush1.bf16.msra.mxu0 0
        %1022 = vmatprep.subr.bf16.mxu0 0
        %1023 = vmatpush1.bf16.msra.mxu0 0
        %1024 = vmatprep.subr.bf16.mxu0 0
        %1025 = vmatpush1.bf16.msra.mxu0 0
        %1026 = vmatprep.subr.bf16.mxu0 0
        %1027 = vmatpush1.bf16.msra.mxu0 0
        %1028 = vmatprep.subr.bf16.mxu0 0
        %1029 = vmatpush1.bf16.msra.mxu0 0
        %1030 = vmatprep.subr.bf16.mxu0 0
        %1031 = vmatpush1.bf16.msra.mxu0 0
        %1032 = vmatprep.subr.bf16.mxu0 0
        %1033 = vmatpush1.bf16.msra.mxu0 0
        %1034 = vmatprep.subr.bf16.mxu0 0
        %1035 = vmatpush1.bf16.msra.mxu0 0
        %1036 = vmatprep.subr.bf16.mxu0 0
        %1037 = vmatpush1.bf16.msra.mxu0 0
        %1038 = vmatprep.mubr.bf16.mxu0 0
        %1039 = vmatmul.mubr.bf16.gmra.mrb[0].mxu0 %v1001
        %v1040 = vpop.f32.mrb[0].mxu0
        %v1041 = vadd.f32 0.0, %v1040
        %v1042 = vpop.f32.mrb[0].mxu0
        %v1043 = vpop.f32.mrb[0].mxu0
        %v1044 = vpop.f32.mrb[0].mxu0
        %1045 = vdwg.mxu0
        %1046 = vrot.lane.b32.xlu0 %v714, 104
        %v1047 = vpop.permute.xlu0 %1046
        %1048 = vrot.lane.b32.xlu0 %v715, 104
        %v1049 = vpop.permute.xlu0 %1048
        %v1051 = vsel %vm717, %v1047, 0
        %v1054 = vsel %vm717, %v1049, 0
        %1056 = vmatprep.subr.bf16.mxu0 0
        %1057 = vmatpush1.bf16.xpose.msra.mxu0 %v1054
        %1058 = vmatprep.subr.bf16.mxu0 0
        %1059 = vmatpush1.bf16.xpose.msra.mxu0 0
        %1060 = vmatprep.subr.bf16.mxu0 0
        %1061 = vmatpush1.bf16.xpose.msra.mxu0 0
        %1062 = vmatprep.subr.bf16.mxu0 0
        %1063 = vmatpush1.bf16.xpose.msra.mxu0 0
        %1064 = vmatprep.subr.bf16.mxu0 0
        %1065 = vmatpush1.bf16.xpose.msra.mxu0 0
        %1066 = vmatprep.subr.bf16.mxu0 0
        %1067 = vmatpush1.bf16.xpose.msra.mxu0 0
        %1068 = vmatprep.subr.bf16.mxu0 0
        %1069 = vmatpush1.bf16.xpose.msra.mxu0 0
        %1070 = vmatprep.subr.bf16.mxu0 0
        %1071 = vmatpush1.bf16.xpose.msra.mxu0 0
        %1072 = vmatprep.subr.bf16.mxu0 0
        %1073 = vmatpush1.bf16.xpose.msra.mxu0 0
        %1074 = vmatprep.subr.bf16.mxu0 0
        %1075 = vmatpush1.bf16.xpose.msra.mxu0 0
        %1076 = vmatprep.subr.bf16.mxu0 0
        %1077 = vmatpush1.bf16.xpose.msra.mxu0 0
        %1078 = vmatprep.subr.bf16.mxu0 0
        %1079 = vmatpush1.bf16.xpose.msra.mxu0 0
        %1080 = vmatprep.subr.bf16.mxu0 0
        %1081 = vmatpush1.bf16.xpose.msra.mxu0 0
        %1082 = vmatprep.subr.bf16.mxu0 0
        %1083 = vmatpush1.bf16.xpose.msra.mxu0 0
        %1084 = vmatprep.subr.bf16.mxu0 0
        %1085 = vmatpush1.bf16.xpose.msra.mxu0 0
        %1086 = vmatprep.subr.bf16.mxu0 0
        %1087 = vmatpush1.bf16.xpose.msra.mxu0 0
        %1088 = vmatprep.mubr.bf16.mxu0 0
        %1089 = vmatmul.mubr.bf16.gmra.mrb[0].mxu0 %v1051
        %v1090 = vpop.f32.mrb[0].mxu0
        %v1091 = vadd.f32 0.0, %v1090
        %v1092 = vpop.f32.mrb[0].mxu0
        %v1093 = vpop.f32.mrb[0].mxu0
        %v1094 = vpop.f32.mrb[0].mxu0
        %1095 = vdwg.mxu0
        %v1096 = vsel %vm717, %v1091, -inf
        %1097 = vmax.xlane.f32.xlu0 %v1096
        %v1098 = vpop.xlane.xlu0 %1097
        %v1099 = vsub.f32 %v1091, %v1098
        %v1100 = vmul.f32 %v1099, 1.442695
        %v1101 = vpow.pop %v1100
        %v1102 = vsel %vm717, %v1101, 0.0
        %1103 = vadd.xlane.f32.xlu0 %v1102
        %v1104 = vpop.xlane.xlu0 %1103
        %v1105 = vrcp.pop %v1104
        %v1106 = vmul.f32 %v1101, %v1105
        %v1107 = vpack.c.bf16 %v1106, %v1106
        %1108 = vrot.lane.b32.xlu0 %v716, 104
        %v1109 = vpop.permute.xlu0 %1108
        %v1111 = vsel %vm717, %v1107, 0
        %v1114 = vsel %vm779, %v1109, 0
        %1116 = vmatprep.subr.bf16.mxu0 0
        %1117 = vmatpush1.bf16.msra.mxu0 %v1114
        %1118 = vmatprep.subr.bf16.mxu0 0
        %1119 = vmatpush1.bf16.msra.mxu0 0
        %1120 = vmatprep.subr.bf16.mxu0 0
        %1121 = vmatpush1.bf16.msra.mxu0 0
        %1122 = vmatprep.subr.bf16.mxu0 0
        %1123 = vmatpush1.bf16.msra.mxu0 0
        %1124 = vmatprep.subr.bf16.mxu0 0
        %1125 = vmatpush1.bf16.msra.mxu0 0
        %1126 = vmatprep.subr.bf16.mxu0 0
        %1127 = vmatpush1.bf16.msra.mxu0 0
        %1128 = vmatprep.subr.bf16.mxu0 0
        %1129 = vmatpush1.bf16.msra.mxu0 0
        %1130 = vmatprep.subr.bf16.mxu0 0
        %1131 = vmatpush1.bf16.msra.mxu0 0
        %1132 = vmatprep.subr.bf16.mxu0 0
        %1133 = vmatpush1.bf16.msra.mxu0 0
        %1134 = vmatprep.subr.bf16.mxu0 0
        %1135 = vmatpush1.bf16.msra.mxu0 0
        %1136 = vmatprep.subr.bf16.mxu0 0
        %1137 = vmatpush1.bf16.msra.mxu0 0
        %1138 = vmatprep.subr.bf16.mxu0 0
        %1139 = vmatpush1.bf16.msra.mxu0 0
        %1140 = vmatprep.subr.bf16.mxu0 0
        %1141 = vmatpush1.bf16.msra.mxu0 0
        %1142 = vmatprep.subr.bf16.mxu0 0
        %1143 = vmatpush1.bf16.msra.mxu0 0
        %1144 = vmatprep.subr.bf16.mxu0 0
        %1145 = vmatpush1.bf16.msra.mxu0 0
        %1146 = vmatprep.subr.bf16.mxu0 0
        %1147 = vmatpush1.bf16.msra.mxu0 0
        %1148 = vmatprep.mubr.bf16.mxu0 0
        %1149 = vmatmul.mubr.bf16.gmra.mrb[0].mxu0 %v1111
        %v1150 = vpop.f32.mrb[0].mxu0
        %v1151 = vadd.f32 0.0, %v1150
        %v1152 = vpop.f32.mrb[0].mxu0
        %v1153 = vpop.f32.mrb[0].mxu0
        %v1154 = vpop.f32.mrb[0].mxu0
        %1155 = vdwg.mxu0
        %1157 = vrot.lane.b32.xlu0 %v931, 8
        %v1158 = vpop.permute.xlu0 %1157
        %1161 = vrot.lane.b32.xlu0 %v1041, 16
        %v1162 = vpop.permute.xlu0 %1161
        %1165 = vrot.lane.b32.xlu0 %v1151, 24
        %v1166 = vpop.permute.xlu0 %1165
        %v1168 = vsel %vm717, %v818, %v1158
        %vm1169 = vcmask 130048
        %v1170 = vsel %vm1169, %v1168, %v1162
        %vm1171 = vcmask 195584
        %v1172 = vsel %vm1171, %v1170, %v1166
        %v1173 = vpack.c.bf16 %v1172, %v1172
        %v1174 = vlaneseq
        %v1175 = vshrl.u32 %v1174, 7
        %v1176 = vsub.s32 3, %v1175
        %v1177 = vrot.slane %v528, %v1176
        %v1182 = vunpack.c.l.b16 %v524
        %v1183 = vunpack.c.l.b16 %v525
        %v1184 = vunpack.c.l.b16 %v526
        %v1185 = vunpack.c.l.b16 %v527
        %v1186 = vpack.c.b16 %v1183, %v1182
        %v1187 = vpack.c.b16 %v1185, %v1184
        %v1191 = vsel %vm551, %v1173, 0
        %1193 = vmatprep.subr.bf16.mxu0 0
        %1194 = vmatpush1.bf16.msra.mxu0 %v1186
        %1195 = vmatprep.subr.bf16.mxu0 0
        %1196 = vmatpush1.bf16.msra.mxu0 %v1187
        %1197 = vmatprep.subr.bf16.mxu0 0
        %1198 = vmatpush1.bf16.msra.mxu0 0
        %1199 = vmatprep.subr.bf16.mxu0 0
        %1200 = vmatpush1.bf16.msra.mxu0 0
        %1201 = vmatprep.subr.bf16.mxu0 0
        %1202 = vmatpush1.bf16.msra.mxu0 0
        %1203 = vmatprep.subr.bf16.mxu0 0
        %1204 = vmatpush1.bf16.msra.mxu0 0
        %1205 = vmatprep.subr.bf16.mxu0 0
        %1206 = vmatpush1.bf16.msra.mxu0 0
        %1207 = vmatprep.subr.bf16.mxu0 0
        %1208 = vmatpush1.bf16.msra.mxu0 0
        %1209 = vmatprep.subr.bf16.mxu0 0
        %1210 = vmatpush1.bf16.msra.mxu0 0
        %1211 = vmatprep.subr.bf16.mxu0 0
        %1212 = vmatpush1.bf16.msra.mxu0 0
        %1213 = vmatprep.subr.bf16.mxu0 0
        %1214 = vmatpush1.bf16.msra.mxu0 0
        %1215 = vmatprep.subr.bf16.mxu0 0
        %1216 = vmatpush1.bf16.msra.mxu0 0
        %1217 = vmatprep.subr.bf16.mxu0 0
        %1218 = vmatpush1.bf16.msra.mxu0 0
        %1219 = vmatprep.subr.bf16.mxu0 0
        %1220 = vmatpush1.bf16.msra.mxu0 0
        %1221 = vmatprep.subr.bf16.mxu0 0
        %1222 = vmatpush1.bf16.msra.mxu0 0
        %1223 = vmatprep.subr.bf16.mxu0 0
        %1224 = vmatpush1.bf16.msra.mxu0 0
        %1225 = vmatprep.mubr.bf16.mxu0 0
        %1226 = vmatmul.mubr.bf16.gmra.mrb[0].mxu0 %v1191
        %v1227 = vpop.f32.mrb[0].mxu0
        %v1228 = vadd.f32 %v1177, %v1227
        %v1229 = vpop.f32.mrb[0].mxu0
        %v1230 = vpop.f32.mrb[0].mxu0
        %v1231 = vpop.f32.mrb[0].mxu0
        %1232 = vdwg.mxu0
        %v1233 = vadd.f32 %v506, %v1228
        %v1234 = vsel %vm551, %v1233, 0.0
        %1235 = vadd.xlane.f32.xlu0 %v1234
        %v1236 = vpop.xlane.xlu0 %1235
        %v1237 = vrcp.pop 32.0
        %v1238 = vmul.f32 %v1236, %v1237
        %v1239 = vsub.f32 %v1233, %v1238
        %v1240 = vmul.f32 %v1239, %v1239
        %v1241 = vsel %vm551, %v1240, 0.0
        %1242 = vadd.xlane.f32.xlu0 %v1241
        %v1243 = vpop.xlane.xlu0 %1242
        %v1244 = vmul.f32 %v1243, %v1237
        %v1245 = vadd.f32 %v1244, 1e-05
        %v1246 = vrsqrt.pop %v1245
        %v1247 = vmul.f32 %v1239, %v1246
        %v1248 = vlaneseq
        %v1249 = vshrl.u32 %v1248, 7
        %v1250 = vsub.s32 5, %v1249
        %v1251 = vrot.slane %v528, %v1250
        %v1252 = vmul.f32 %v1247, %v1251
        %v1253 = vlaneseq
        %v1254 = vshrl.u32 %v1253, 7
        %v1255 = vsub.s32 6, %v1254
        %v1256 = vrot.slane %v528, %v1255
        %v1257 = vadd.f32 %v1252, %v1256
        %v1258 = vadd.f32 %v1257, %v508
        %v1259 = vpack.c.bf16 %v1258, %v1258
        %v1260 = vpack.c.bf16 %v1257, %v1257
        %v1262 = vsel %vm551, %v1259, 0
        %1264 = vmatprep.subr.bf16.mxu0 0
        %1265 = vmatpush1.bf16.msra.mxu0 %v547
        %1266 = vmatprep.subr.bf16.mxu0 0
        %1267 = vmatpush1.bf16.msra.mxu0 %v548
        %1268 = vmatprep.subr.bf16.mxu0 0
        %1269 = vmatpush1.bf16.msra.mxu0 0
        %1270 = vmatprep.subr.bf16.mxu0 0
        %1271 = vmatpush1.bf16.msra.mxu0 0
        %1272 = vmatprep.subr.bf16.mxu0 0
        %1273 = vmatpush1.bf16.msra.mxu0 0
        %1274 = vmatprep.subr.bf16.mxu0 0
        %1275 = vmatpush1.bf16.msra.mxu0 0
        %1276 = vmatprep.subr.bf16.mxu0 0
        %1277 = vmatpush1.bf16.msra.mxu0 0
        %1278 = vmatprep.subr.bf16.mxu0 0
        %1279 = vmatpush1.bf16.msra.mxu0 0
        %1280 = vmatprep.subr.bf16.mxu0 0
        %1281 = vmatpush1.bf16.msra.mxu0 0
        %1282 = vmatprep.subr.bf16.mxu0 0
        %1283 = vmatpush1.bf16.msra.mxu0 0
        %1284 = vmatprep.subr.bf16.mxu0 0
        %1285 = vmatpush1.bf16.msra.mxu0 0
        %1286 = vmatprep.subr.bf16.mxu0 0
        %1287 = vmatpush1.bf16.msra.mxu0 0
        %1288 = vmatprep.subr.bf16.mxu0 0
        %1289 = vmatpush1.bf16.msra.mxu0 0
        %1290 = vmatprep.subr.bf16.mxu0 0
        %1291 = vmatpush1.bf16.msra.mxu0 0
        %1292 = vmatprep.subr.bf16.mxu0 0
        %1293 = vmatpush1.bf16.msra.mxu0 0
        %1294 = vmatprep.subr.bf16.mxu0 0
        %1295 = vmatpush1.bf16.msra.mxu0 0
        %1296 = vmatprep.mubr.bf16.mxu0 0
        %1297 = vmatmul.mubr.bf16.gmra.mrb[0].mxu0 %v1262
        %v1298 = vpop.f32.mrb[0].mxu0
        %v1299 = vadd.f32 %v538, %v1298
        %v1300 = vpop.f32.mrb[0].mxu0
        %v1301 = vpop.f32.mrb[0].mxu0
        %v1302 = vpop.f32.mrb[0].mxu0
        %1303 = vdwg.mxu0
        %v1304 = vmul.f32 %v1299, 0.35355338
        %1305 = vmatprep.subr.bf16.mxu0 0
        %1306 = vmatpush1.bf16.msra.mxu0 %v608
        %1307 = vmatprep.subr.bf16.mxu0 0
        %1308 = vmatpush1.bf16.msra.mxu0 %v609
        %1309 = vmatprep.subr.bf16.mxu0 0
        %1310 = vmatpush1.bf16.msra.mxu0 0
        %1311 = vmatprep.subr.bf16.mxu0 0
        %1312 = vmatpush1.bf16.msra.mxu0 0
        %1313 = vmatprep.subr.bf16.mxu0 0
        %1314 = vmatpush1.bf16.msra.mxu0 0
        %1315 = vmatprep.subr.bf16.mxu0 0
        %1316 = vmatpush1.bf16.msra.mxu0 0
        %1317 = vmatprep.subr.bf16.mxu0 0
        %1318 = vmatpush1.bf16.msra.mxu0 0
        %1319 = vmatprep.subr.bf16.mxu0 0
        %1320 = vmatpush1.bf16.msra.mxu0 0
        %1321 = vmatprep.subr.bf16.mxu0 0
        %1322 = vmatpush1.bf16.msra.mxu0 0
        %1323 = vmatprep.subr.bf16.mxu0 0
        %1324 = vmatpush1.bf16.msra.mxu0 0
        %1325 = vmatprep.subr.bf16.mxu0 0
        %1326 = vmatpush1.bf16.msra.mxu0 0
        %1327 = vmatprep.subr.bf16.mxu0 0
        %1328 = vmatpush1.bf16.msra.mxu0 0
        %1329 = vmatprep.subr.bf16.mxu0 0
        %1330 = vmatpush1.bf16.msra.mxu0 0
        %1331 = vmatprep.subr.bf16.mxu0 0
        %1332 = vmatpush1.bf16.msra.mxu0 0
        %1333 = vmatprep.subr.bf16.mxu0 0
        %1334 = vmatpush1.bf16.msra.mxu0 0
        %1335 = vmatprep.subr.bf16.mxu0 0
        %1336 = vmatpush1.bf16.msra.mxu0 0
        %1337 = vmatprep.mubr.bf16.mxu0 0
        %1338 = vmatmul.mubr.bf16.gmra.mrb[0].mxu0 %v1262
        %v1339 = vpop.f32.mrb[0].mxu0
        %v1340 = vadd.f32 %v599, %v1339
        %v1341 = vpop.f32.mrb[0].mxu0
        %v1342 = vpop.f32.mrb[0].mxu0
        %v1343 = vpop.f32.mrb[0].mxu0
        %1344 = vdwg.mxu0
        %v1346 = vsel %vm551, %v1260, 0
        %1348 = vmatprep.subr.bf16.mxu0 0
        %1349 = vmatpush1.bf16.msra.mxu0 %v667
        %1350 = vmatprep.subr.bf16.mxu0 0
        %1351 = vmatpush1.bf16.msra.mxu0 %v668
        %1352 = vmatprep.subr.bf16.mxu0 0
        %1353 = vmatpush1.bf16.msra.mxu0 0
        %1354 = vmatprep.subr.bf16.mxu0 0
        %1355 = vmatpush1.bf16.msra.mxu0 0
        %1356 = vmatprep.subr.bf16.mxu0 0
        %1357 = vmatpush1.bf16.msra.mxu0 0
        %1358 = vmatprep.subr.bf16.mxu0 0
        %1359 = vmatpush1.bf16.msra.mxu0 0
        %1360 = vmatprep.subr.bf16.mxu0 0
        %1361 = vmatpush1.bf16.msra.mxu0 0
        %1362 = vmatprep.subr.bf16.mxu0 0
        %1363 = vmatpush1.bf16.msra.mxu0 0
        %1364 = vmatprep.subr.bf16.mxu0 0
        %1365 = vmatpush1.bf16.msra.mxu0 0
        %1366 = vmatprep.subr.bf16.mxu0 0
        %1367 = vmatpush1.bf16.msra.mxu0 0
        %1368 = vmatprep.subr.bf16.mxu0 0
        %1369 = vmatpush1.bf16.msra.mxu0 0
        %1370 = vmatprep.subr.bf16.mxu0 0
        %1371 = vmatpush1.bf16.msra.mxu0 0
        %1372 = vmatprep.subr.bf16.mxu0 0
        %1373 = vmatpush1.bf16.msra.mxu0 0
        %1374 = vmatprep.subr.bf16.mxu0 0
        %1375 = vmatpush1.bf16.msra.mxu0 0
        %1376 = vmatprep.subr.bf16.mxu0 0
        %1377 = vmatpush1.bf16.msra.mxu0 0
        %1378 = vmatprep.subr.bf16.mxu0 0
        %1379 = vmatpush1.bf16.msra.mxu0 0
        %1380 = vmatprep.mubr.bf16.mxu0 0
        %1381 = vmatmul.mubr.bf16.gmra.mrb[0].mxu0 %v1346
        %v1382 = vpop.f32.mrb[0].mxu0
        %v1383 = vadd.f32 %v658, %v1382
        %v1384 = vpop.f32.mrb[0].mxu0
        %v1385 = vpop.f32.mrb[0].mxu0
        %v1386 = vpop.f32.mrb[0].mxu0
        %1387 = vdwg.mxu0
        %v1388 = vpack.c.bf16 %v1304, %v1304
        %v1389 = vpack.c.bf16 %v1340, %v1340
        %v1390 = vpack.c.bf16 %v1383, %v1383
        %v1392 = vsel %vm717, %v1388, 0
        %v1395 = vsel %vm717, %v1389, 0
        %1397 = vmatprep.subr.bf16.mxu0 0
        %1398 = vmatpush1.bf16.xpose.msra.mxu0 %v1395
        %1399 = vmatprep.subr.bf16.mxu0 0
        %1400 = vmatpush1.bf16.xpose.msra.mxu0 0
        %1401 = vmatprep.subr.bf16.mxu0 0
        %1402 = vmatpush1.bf16.xpose.msra.mxu0 0
        %1403 = vmatprep.subr.bf16.mxu0 0
        %1404 = vmatpush1.bf16.xpose.msra.mxu0 0
        %1405 = vmatprep.subr.bf16.mxu0 0
        %1406 = vmatpush1.bf16.xpose.msra.mxu0 0
        %1407 = vmatprep.subr.bf16.mxu0 0
        %1408 = vmatpush1.bf16.xpose.msra.mxu0 0
        %1409 = vmatprep.subr.bf16.mxu0 0
        %1410 = vmatpush1.bf16.xpose.msra.mxu0 0
        %1411 = vmatprep.subr.bf16.mxu0 0
        %1412 = vmatpush1.bf16.xpose.msra.mxu0 0
        %1413 = vmatprep.subr.bf16.mxu0 0
        %1414 = vmatpush1.bf16.xpose.msra.mxu0 0
        %1415 = vmatprep.subr.bf16.mxu0 0
        %1416 = vmatpush1.bf16.xpose.msra.mxu0 0
        %1417 = vmatprep.subr.bf16.mxu0 0
        %1418 = vmatpush1.bf16.xpose.msra.mxu0 0
        %1419 = vmatprep.subr.bf16.mxu0 0
        %1420 = vmatpush1.bf16.xpose.msra.mxu0 0
        %1421 = vmatprep.subr.bf16.mxu0 0
        %1422 = vmatpush1.bf16.xpose.msra.mxu0 0
        %1423 = vmatprep.subr.bf16.mxu0 0
        %1424 = vmatpush1.bf16.xpose.msra.mxu0 0
        %1425 = vmatprep.subr.bf16.mxu0 0
        %1426 = vmatpush1.bf16.xpose.msra.mxu0 0
        %1427 = vmatprep.subr.bf16.mxu0 0
        %1428 = vmatpush1.bf16.xpose.msra.mxu0 0
        %1429 = vmatprep.mubr.bf16.mxu0 0
        %1430 = vmatmul.mubr.bf16.gmra.mrb[0].mxu0 %v1392
        %v1431 = vpop.f32.mrb[0].mxu0
        %v1432 = vadd.f32 0.0, %v1431
        %v1433 = vpop.f32.mrb[0].mxu0
        %v1434 = vpop.f32.mrb[0].mxu0
        %v1435 = vpop.f32.mrb[0].mxu0
        %1436 = vdwg.mxu0
        %v1437 = vsel %vm717, %v1432, -inf
        %1438 = vmax.xlane.f32.xlu0 %v1437
        %v1439 = vpop.xlane.xlu0 %1438
        %v1440 = vsub.f32 %v1432, %v1439
        %v1441 = vmul.f32 %v1440, 1.442695
        %v1442 = vpow.pop %v1441
        %v1443 = vsel %vm717, %v1442, 0.0
        %1444 = vadd.xlane.f32.xlu0 %v1443
        %v1445 = vpop.xlane.xlu0 %1444
        %v1446 = vrcp.pop %v1445
        %v1447 = vmul.f32 %v1442, %v1446
        %v1448 = vpack.c.bf16 %v1447, %v1447
        %v1450 = vsel %vm717, %v1448, 0
        %v1453 = vsel %vm779, %v1390, 0
        %1455 = vmatprep.subr.bf16.mxu0 0
        %1456 = vmatpush1.bf16.msra.mxu0 %v1453
        %1457 = vmatprep.subr.bf16.mxu0 0
        %1458 = vmatpush1.bf16.msra.mxu0 0
        %1459 = vmatprep.subr.bf16.mxu0 0
        %1460 = vmatpush1.bf16.msra.mxu0 0
        %1461 = vmatprep.subr.bf16.mxu0 0
        %1462 = vmatpush1.bf16.msra.mxu0 0
        %1463 = vmatprep.subr.bf16.mxu0 0
        %1464 = vmatpush1.bf16.msra.mxu0 0
        %1465 = vmatprep.subr.bf16.mxu0 0
        %1466 = vmatpush1.bf16.msra.mxu0 0
        %1467 = vmatprep.subr.bf16.mxu0 0
        %1468 = vmatpush1.bf16.msra.mxu0 0
        %1469 = vmatprep.subr.bf16.mxu0 0
        %1470 = vmatpush1.bf16.msra.mxu0 0
        %1471 = vmatprep.subr.bf16.mxu0 0
        %1472 = vmatpush1.bf16.msra.mxu0 0
        %1473 = vmatprep.subr.bf16.mxu0 0
        %1474 = vmatpush1.bf16.msra.mxu0 0
        %1475 = vmatprep.subr.bf16.mxu0 0
        %1476 = vmatpush1.bf16.msra.mxu0 0
        %1477 = vmatprep.subr.bf16.mxu0 0
        %1478 = vmatpush1.bf16.msra.mxu0 0
        %1479 = vmatprep.subr.bf16.mxu0 0
        %1480 = vmatpush1.bf16.msra.mxu0 0
        %1481 = vmatprep.subr.bf16.mxu0 0
        %1482 = vmatpush1.bf16.msra.mxu0 0
        %1483 = vmatprep.subr.bf16.mxu0 0
        %1484 = vmatpush1.bf16.msra.mxu0 0
        %1485 = vmatprep.subr.bf16.mxu0 0
        %1486 = vmatpush1.bf16.msra.mxu0 0
        %1487 = vmatprep.mubr.bf16.mxu0 0
        %1488 = vmatmul.mubr.bf16.gmra.mrb[0].mxu0 %v1450
        %v1489 = vpop.f32.mrb[0].mxu0
        %v1490 = vadd.f32 0.0, %v1489
        %v1491 = vpop.f32.mrb[0].mxu0
        %v1492 = vpop.f32.mrb[0].mxu0
        %v1493 = vpop.f32.mrb[0].mxu0
        %1494 = vdwg.mxu0
        %1496 = vrot.lane.b32.xlu0 %v1388, 120
        %v1497 = vpop.permute.xlu0 %1496
        %1499 = vrot.lane.b32.xlu0 %v1389, 120
        %v1500 = vpop.permute.xlu0 %1499
        %v1502 = vsel %vm717, %v1497, 0
        %v1505 = vsel %vm717, %v1500, 0
        %1507 = vmatprep.subr.bf16.mxu0 0
        %1508 = vmatpush1.bf16.xpose.msra.mxu0 %v1505
        %1509 = vmatprep.subr.bf16.mxu0 0
        %1510 = vmatpush1.bf16.xpose.msra.mxu0 0
        %1511 = vmatprep.subr.bf16.mxu0 0
        %1512 = vmatpush1.bf16.xpose.msra.mxu0 0
        %1513 = vmatprep.subr.bf16.mxu0 0
        %1514 = vmatpush1.bf16.xpose.msra.mxu0 0
        %1515 = vmatprep.subr.bf16.mxu0 0
        %1516 = vmatpush1.bf16.xpose.msra.mxu0 0
        %1517 = vmatprep.subr.bf16.mxu0 0
        %1518 = vmatpush1.bf16.xpose.msra.mxu0 0
        %1519 = vmatprep.subr.bf16.mxu0 0
        %1520 = vmatpush1.bf16.xpose.msra.mxu0 0
        %1521 = vmatprep.subr.bf16.mxu0 0
        %1522 = vmatpush1.bf16.xpose.msra.mxu0 0
        %1523 = vmatprep.subr.bf16.mxu0 0
        %1524 = vmatpush1.bf16.xpose.msra.mxu0 0
        %1525 = vmatprep.subr.bf16.mxu0 0
        %1526 = vmatpush1.bf16.xpose.msra.mxu0 0
        %1527 = vmatprep.subr.bf16.mxu0 0
        %1528 = vmatpush1.bf16.xpose.msra.mxu0 0
        %1529 = vmatprep.subr.bf16.mxu0 0
        %1530 = vmatpush1.bf16.xpose.msra.mxu0 0
        %1531 = vmatprep.subr.bf16.mxu0 0
        %1532 = vmatpush1.bf16.xpose.msra.mxu0 0
        %1533 = vmatprep.subr.bf16.mxu0 0
        %1534 = vmatpush1.bf16.xpose.msra.mxu0 0
        %1535 = vmatprep.subr.bf16.mxu0 0
        %1536 = vmatpush1.bf16.xpose.msra.mxu0 0
        %1537 = vmatprep.subr.bf16.mxu0 0
        %1538 = vmatpush1.bf16.xpose.msra.mxu0 0
        %1539 = vmatprep.mubr.bf16.mxu0 0
        %1540 = vmatmul.mubr.bf16.gmra.mrb[0].mxu0 %v1502
        %v1541 = vpop.f32.mrb[0].mxu0
        %v1542 = vadd.f32 0.0, %v1541
        %v1543 = vpop.f32.mrb[0].mxu0
        %v1544 = vpop.f32.mrb[0].mxu0
        %v1545 = vpop.f32.mrb[0].mxu0
        %1546 = vdwg.mxu0
        %v1547 = vsel %vm717, %v1542, -inf
        %1548 = vmax.xlane.f32.xlu0 %v1547
        %v1549 = vpop.xlane.xlu0 %1548
        %v1550 = vsub.f32 %v1542, %v1549
        %v1551 = vmul.f32 %v1550, 1.442695
        %v1552 = vpow.pop %v1551
        %v1553 = vsel %vm717, %v1552, 0.0
        %1554 = vadd.xlane.f32.xlu0 %v1553
        %v1555 = vpop.xlane.xlu0 %1554
        %v1556 = vrcp.pop %v1555
        %v1557 = vmul.f32 %v1552, %v1556
        %v1558 = vpack.c.bf16 %v1557, %v1557
        %1560 = vrot.lane.b32.xlu0 %v1390, 120
        %v1561 = vpop.permute.xlu0 %1560
        %v1563 = vsel %vm717, %v1558, 0
        %v1566 = vsel %vm779, %v1561, 0
        %1568 = vmatprep.subr.bf16.mxu0 0
        %1569 = vmatpush1.bf16.msra.mxu0 %v1566
        %1570 = vmatprep.subr.bf16.mxu0 0
        %1571 = vmatpush1.bf16.msra.mxu0 0
        %1572 = vmatprep.subr.bf16.mxu0 0
        %1573 = vmatpush1.bf16.msra.mxu0 0
        %1574 = vmatprep.subr.bf16.mxu0 0
        %1575 = vmatpush1.bf16.msra.mxu0 0
        %1576 = vmatprep.subr.bf16.mxu0 0
        %1577 = vmatpush1.bf16.msra.mxu0 0
        %1578 = vmatprep.subr.bf16.mxu0 0
        %1579 = vmatpush1.bf16.msra.mxu0 0
        %1580 = vmatprep.subr.bf16.mxu0 0
        %1581 = vmatpush1.bf16.msra.mxu0 0
        %1582 = vmatprep.subr.bf16.mxu0 0
        %1583 = vmatpush1.bf16.msra.mxu0 0
        %1584 = vmatprep.subr.bf16.mxu0 0
        %1585 = vmatpush1.bf16.msra.mxu0 0
        %1586 = vmatprep.subr.bf16.mxu0 0
        %1587 = vmatpush1.bf16.msra.mxu0 0
        %1588 = vmatprep.subr.bf16.mxu0 0
        %1589 = vmatpush1.bf16.msra.mxu0 0
        %1590 = vmatprep.subr.bf16.mxu0 0
        %1591 = vmatpush1.bf16.msra.mxu0 0
        %1592 = vmatprep.subr.bf16.mxu0 0
        %1593 = vmatpush1.bf16.msra.mxu0 0
        %1594 = vmatprep.subr.bf16.mxu0 0
        %1595 = vmatpush1.bf16.msra.mxu0 0
        %1596 = vmatprep.subr.bf16.mxu0 0
        %1597 = vmatpush1.bf16.msra.mxu0 0
        %1598 = vmatprep.subr.bf16.mxu0 0
        %1599 = vmatpush1.bf16.msra.mxu0 0
        %1600 = vmatprep.mubr.bf16.mxu0 0
        %1601 = vmatmul.mubr.bf16.gmra.mrb[0].mxu0 %v1563
        %v1602 = vpop.f32.mrb[0].mxu0
        %v1603 = vadd.f32 0.0, %v1602
        %v1604 = vpop.f32.mrb[0].mxu0
        %v1605 = vpop.f32.mrb[0].mxu0
        %v1606 = vpop.f32.mrb[0].mxu0
        %1607 = vdwg.mxu0
        %1608 = vrot.lane.b32.xlu0 %v1388, 112
        %v1609 = vpop.permute.xlu0 %1608
        %1610 = vrot.lane.b32.xlu0 %v1389, 112
        %v1611 = vpop.permute.xlu0 %1610
        %v1613 = vsel %vm717, %v1609, 0
        %v1616 = vsel %vm717, %v1611, 0
        %1618 = vmatprep.subr.bf16.mxu0 0
        %1619 = vmatpush1.bf16.xpose.msra.mxu0 %v1616
        %1620 = vmatprep.subr.bf16.mxu0 0
        %1621 = vmatpush1.bf16.xpose.msra.mxu0 0
        %1622 = vmatprep.subr.bf16.mxu0 0
        %1623 = vmatpush1.bf16.xpose.msra.mxu0 0
        %1624 = vmatprep.subr.bf16.mxu0 0
        %1625 = vmatpush1.bf16.xpose.msra.mxu0 0
        %1626 = vmatprep.subr.bf16.mxu0 0
        %1627 = vmatpush1.bf16.xpose.msra.mxu0 0
        %1628 = vmatprep.subr.bf16.mxu0 0
        %1629 = vmatpush1.bf16.xpose.msra.mxu0 0
        %1630 = vmatprep.subr.bf16.mxu0 0
        %1631 = vmatpush1.bf16.xpose.msra.mxu0 0
        %1632 = vmatprep.subr.bf16.mxu0 0
        %1633 = vmatpush1.bf16.xpose.msra.mxu0 0
        %1634 = vmatprep.subr.bf16.mxu0 0
        %1635 = vmatpush1.bf16.xpose.msra.mxu0 0
        %1636 = vmatprep.subr.bf16.mxu0 0
        %1637 = vmatpush1.bf16.xpose.msra.mxu0 0
        %1638 = vmatprep.subr.bf16.mxu0 0
        %1639 = vmatpush1.bf16.xpose.msra.mxu0 0
        %1640 = vmatprep.subr.bf16.mxu0 0
        %1641 = vmatpush1.bf16.xpose.msra.mxu0 0
        %1642 = vmatprep.subr.bf16.mxu0 0
        %1643 = vmatpush1.bf16.xpose.msra.mxu0 0
        %1644 = vmatprep.subr.bf16.mxu0 0
        %1645 = vmatpush1.bf16.xpose.msra.mxu0 0
        %1646 = vmatprep.subr.bf16.mxu0 0
        %1647 = vmatpush1.bf16.xpose.msra.mxu0 0
        %1648 = vmatprep.subr.bf16.mxu0 0
        %1649 = vmatpush1.bf16.xpose.msra.mxu0 0
        %1650 = vmatprep.mubr.bf16.mxu0 0
        %1651 = vmatmul.mubr.bf16.gmra.mrb[0].mxu0 %v1613
        %v1652 = vpop.f32.mrb[0].mxu0
        %v1653 = vadd.f32 0.0, %v1652
        %v1654 = vpop.f32.mrb[0].mxu0
        %v1655 = vpop.f32.mrb[0].mxu0
        %v1656 = vpop.f32.mrb[0].mxu0
        %1657 = vdwg.mxu0
        %v1658 = vsel %vm717, %v1653, -inf
        %1659 = vmax.xlane.f32.xlu0 %v1658
        %v1660 = vpop.xlane.xlu0 %1659
        %v1661 = vsub.f32 %v1653, %v1660
        %v1662 = vmul.f32 %v1661, 1.442695
        %v1663 = vpow.pop %v1662
        %v1664 = vsel %vm717, %v1663, 0.0
        %1665 = vadd.xlane.f32.xlu0 %v1664
        %v1666 = vpop.xlane.xlu0 %1665
        %v1667 = vrcp.pop %v1666
        %v1668 = vmul.f32 %v1663, %v1667
        %v1669 = vpack.c.bf16 %v1668, %v1668
        %1670 = vrot.lane.b32.xlu0 %v1390, 112
        %v1671 = vpop.permute.xlu0 %1670
        %v1673 = vsel %vm717, %v1669, 0
        %v1676 = vsel %vm779, %v1671, 0
        %1678 = vmatprep.subr.bf16.mxu0 0
        %1679 = vmatpush1.bf16.msra.mxu0 %v1676
        %1680 = vmatprep.subr.bf16.mxu0 0
        %1681 = vmatpush1.bf16.msra.mxu0 0
        %1682 = vmatprep.subr.bf16.mxu0 0
        %1683 = vmatpush1.bf16.msra.mxu0 0
        %1684 = vmatprep.subr.bf16.mxu0 0
        %1685 = vmatpush1.bf16.msra.mxu0 0
        %1686 = vmatprep.subr.bf16.mxu0 0
        %1687 = vmatpush1.bf16.msra.mxu0 0
        %1688 = vmatprep.subr.bf16.mxu0 0
        %1689 = vmatpush1.bf16.msra.mxu0 0
        %1690 = vmatprep.subr.bf16.mxu0 0
        %1691 = vmatpush1.bf16.msra.mxu0 0
        %1692 = vmatprep.subr.bf16.mxu0 0
        %1693 = vmatpush1.bf16.msra.mxu0 0
        %1694 = vmatprep.subr.bf16.mxu0 0
        %1695 = vmatpush1.bf16.msra.mxu0 0
        %1696 = vmatprep.subr.bf16.mxu0 0
        %1697 = vmatpush1.bf16.msra.mxu0 0
        %1698 = vmatprep.subr.bf16.mxu0 0
        %1699 = vmatpush1.bf16.msra.mxu0 0
        %1700 = vmatprep.subr.bf16.mxu0 0
        %1701 = vmatpush1.bf16.msra.mxu0 0
        %1702 = vmatprep.subr.bf16.mxu0 0
        %1703 = vmatpush1.bf16.msra.mxu0 0
        %1704 = vmatprep.subr.bf16.mxu0 0
        %1705 = vmatpush1.bf16.msra.mxu0 0
        %1706 = vmatprep.subr.bf16.mxu0 0
        %1707 = vmatpush1.bf16.msra.mxu0 0
        %1708 = vmatprep.subr.bf16.mxu0 0
        %1709 = vmatpush1.bf16.msra.mxu0 0
        %1710 = vmatprep.mubr.bf16.mxu0 0
        %1711 = vmatmul.mubr.bf16.gmra.mrb[0].mxu0 %v1673
        %v1712 = vpop.f32.mrb[0].mxu0
        %v1713 = vadd.f32 0.0, %v1712
        %v1714 = vpop.f32.mrb[0].mxu0
        %v1715 = vpop.f32.mrb[0].mxu0
        %v1716 = vpop.f32.mrb[0].mxu0
        %1717 = vdwg.mxu0
        %1718 = vrot.lane.b32.xlu0 %v1388, 104
        %v1719 = vpop.permute.xlu0 %1718
        %1720 = vrot.lane.b32.xlu0 %v1389, 104
        %v1721 = vpop.permute.xlu0 %1720
        %v1723 = vsel %vm717, %v1719, 0
        %v1726 = vsel %vm717, %v1721, 0
        %1728 = vmatprep.subr.bf16.mxu0 0
        %1729 = vmatpush1.bf16.xpose.msra.mxu0 %v1726
        %1730 = vmatprep.subr.bf16.mxu0 0
        %1731 = vmatpush1.bf16.xpose.msra.mxu0 0
        %1732 = vmatprep.subr.bf16.mxu0 0
        %1733 = vmatpush1.bf16.xpose.msra.mxu0 0
        %1734 = vmatprep.subr.bf16.mxu0 0
        %1735 = vmatpush1.bf16.xpose.msra.mxu0 0
        %1736 = vmatprep.subr.bf16.mxu0 0
        %1737 = vmatpush1.bf16.xpose.msra.mxu0 0
        %1738 = vmatprep.subr.bf16.mxu0 0
        %1739 = vmatpush1.bf16.xpose.msra.mxu0 0
        %1740 = vmatprep.subr.bf16.mxu0 0
        %1741 = vmatpush1.bf16.xpose.msra.mxu0 0
        %1742 = vmatprep.subr.bf16.mxu0 0
        %1743 = vmatpush1.bf16.xpose.msra.mxu0 0
        %1744 = vmatprep.subr.bf16.mxu0 0
        %1745 = vmatpush1.bf16.xpose.msra.mxu0 0
        %1746 = vmatprep.subr.bf16.mxu0 0
        %1747 = vmatpush1.bf16.xpose.msra.mxu0 0
        %1748 = vmatprep.subr.bf16.mxu0 0
        %1749 = vmatpush1.bf16.xpose.msra.mxu0 0
        %1750 = vmatprep.subr.bf16.mxu0 0
        %1751 = vmatpush1.bf16.xpose.msra.mxu0 0
        %1752 = vmatprep.subr.bf16.mxu0 0
        %1753 = vmatpush1.bf16.xpose.msra.mxu0 0
        %1754 = vmatprep.subr.bf16.mxu0 0
        %1755 = vmatpush1.bf16.xpose.msra.mxu0 0
        %1756 = vmatprep.subr.bf16.mxu0 0
        %1757 = vmatpush1.bf16.xpose.msra.mxu0 0
        %1758 = vmatprep.subr.bf16.mxu0 0
        %1759 = vmatpush1.bf16.xpose.msra.mxu0 0
        %1760 = vmatprep.mubr.bf16.mxu0 0
        %1761 = vmatmul.mubr.bf16.gmra.mrb[0].mxu0 %v1723
        %v1762 = vpop.f32.mrb[0].mxu0
        %v1763 = vadd.f32 0.0, %v1762
        %v1764 = vpop.f32.mrb[0].mxu0
        %v1765 = vpop.f32.mrb[0].mxu0
        %v1766 = vpop.f32.mrb[0].mxu0
        %1767 = vdwg.mxu0
        %v1768 = vsel %vm717, %v1763, -inf
        %1769 = vmax.xlane.f32.xlu0 %v1768
        %v1770 = vpop.xlane.xlu0 %1769
        %v1771 = vsub.f32 %v1763, %v1770
        %v1772 = vmul.f32 %v1771, 1.442695
        %v1773 = vpow.pop %v1772
        %v1774 = vsel %vm717, %v1773, 0.0
        %1775 = vadd.xlane.f32.xlu0 %v1774
        %v1776 = vpop.xlane.xlu0 %1775
        %v1777 = vrcp.pop %v1776
        %v1778 = vmul.f32 %v1773, %v1777
        %v1779 = vpack.c.bf16 %v1778, %v1778
        %1780 = vrot.lane.b32.xlu0 %v1390, 104
        %v1781 = vpop.permute.xlu0 %1780
        %v1783 = vsel %vm717, %v1779, 0
        %v1786 = vsel %vm779, %v1781, 0
        %1788 = vmatprep.subr.bf16.mxu0 0
        %1789 = vmatpush1.bf16.msra.mxu0 %v1786
        %1790 = vmatprep.subr.bf16.mxu0 0
        %1791 = vmatpush1.bf16.msra.mxu0 0
        %1792 = vmatprep.subr.bf16.mxu0 0
        %1793 = vmatpush1.bf16.msra.mxu0 0
        %1794 = vmatprep.subr.bf16.mxu0 0
        %1795 = vmatpush1.bf16.msra.mxu0 0
        %1796 = vmatprep.subr.bf16.mxu0 0
        %1797 = vmatpush1.bf16.msra.mxu0 0
        %1798 = vmatprep.subr.bf16.mxu0 0
        %1799 = vmatpush1.bf16.msra.mxu0 0
        %1800 = vmatprep.subr.bf16.mxu0 0
        %1801 = vmatpush1.bf16.msra.mxu0 0
        %1802 = vmatprep.subr.bf16.mxu0 0
        %1803 = vmatpush1.bf16.msra.mxu0 0
        %1804 = vmatprep.subr.bf16.mxu0 0
        %1805 = vmatpush1.bf16.msra.mxu0 0
        %1806 = vmatprep.subr.bf16.mxu0 0
        %1807 = vmatpush1.bf16.msra.mxu0 0
        %1808 = vmatprep.subr.bf16.mxu0 0
        %1809 = vmatpush1.bf16.msra.mxu0 0
        %1810 = vmatprep.subr.bf16.mxu0 0
        %1811 = vmatpush1.bf16.msra.mxu0 0
        %1812 = vmatprep.subr.bf16.mxu0 0
        %1813 = vmatpush1.bf16.msra.mxu0 0
        %1814 = vmatprep.subr.bf16.mxu0 0
        %1815 = vmatpush1.bf16.msra.mxu0 0
        %1816 = vmatprep.subr.bf16.mxu0 0
        %1817 = vmatpush1.bf16.msra.mxu0 0
        %1818 = vmatprep.subr.bf16.mxu0 0
        %1819 = vmatpush1.bf16.msra.mxu0 0
        %1820 = vmatprep.mubr.bf16.mxu0 0
        %1821 = vmatmul.mubr.bf16.gmra.mrb[0].mxu0 %v1783
        %v1822 = vpop.f32.mrb[0].mxu0
        %v1823 = vadd.f32 0.0, %v1822
        %v1824 = vpop.f32.mrb[0].mxu0
        %v1825 = vpop.f32.mrb[0].mxu0
        %v1826 = vpop.f32.mrb[0].mxu0
        %1827 = vdwg.mxu0
        %1829 = vrot.lane.b32.xlu0 %v1603, 8
        %v1830 = vpop.permute.xlu0 %1829
        %1833 = vrot.lane.b32.xlu0 %v1713, 16
        %v1834 = vpop.permute.xlu0 %1833
        %1837 = vrot.lane.b32.xlu0 %v1823, 24
        %v1838 = vpop.permute.xlu0 %1837
        %v1840 = vsel %vm717, %v1490, %v1830
        %v1841 = vsel %vm1169, %v1840, %v1834
        %v1842 = vsel %vm1171, %v1841, %v1838
        %v1843 = vpack.c.bf16 %v1842, %v1842
        %v1845 = vsel %vm551, %v1843, 0
        %1847 = vmatprep.subr.bf16.mxu0 0
        %1848 = vmatpush1.bf16.msra.mxu0 %v1186
        %1849 = vmatprep.subr.bf16.mxu0 0
        %1850 = vmatpush1.bf16.msra.mxu0 %v1187
        %1851 = vmatprep.subr.bf16.mxu0 0
        %1852 = vmatpush1.bf16.msra.mxu0 0
        %1853 = vmatprep.subr.bf16.mxu0 0
        %1854 = vmatpush1.bf16.msra.mxu0 0
        %1855 = vmatprep.subr.bf16.mxu0 0
        %1856 = vmatpush1.bf16.msra.mxu0 0
        %1857 = vmatprep.subr.bf16.mxu0 0
        %1858 = vmatpush1.bf16.msra.mxu0 0
        %1859 = vmatprep.subr.bf16.mxu0 0
        %1860 = vmatpush1.bf16.msra.mxu0 0
        %1861 = vmatprep.subr.bf16.mxu0 0
        %1862 = vmatpush1.bf16.msra.mxu0 0
        %1863 = vmatprep.subr.bf16.mxu0 0
        %1864 = vmatpush1.bf16.msra.mxu0 0
        %1865 = vmatprep.subr.bf16.mxu0 0
        %1866 = vmatpush1.bf16.msra.mxu0 0
        %1867 = vmatprep.subr.bf16.mxu0 0
        %1868 = vmatpush1.bf16.msra.mxu0 0
        %1869 = vmatprep.subr.bf16.mxu0 0
        %1870 = vmatpush1.bf16.msra.mxu0 0
        %1871 = vmatprep.subr.bf16.mxu0 0
        %1872 = vmatpush1.bf16.msra.mxu0 0
        %1873 = vmatprep.subr.bf16.mxu0 0
        %1874 = vmatpush1.bf16.msra.mxu0 0
        %1875 = vmatprep.subr.bf16.mxu0 0
        %1876 = vmatpush1.bf16.msra.mxu0 0
        %1877 = vmatprep.subr.bf16.mxu0 0
        %1878 = vmatpush1.bf16.msra.mxu0 0
        %1879 = vmatprep.mubr.bf16.mxu0 0
        %1880 = vmatmul.mubr.bf16.gmra.mrb[0].mxu0 %v1845
        %v1881 = vpop.f32.mrb[0].mxu0
        %v1882 = vadd.f32 %v1177, %v1881
        %v1883 = vpop.f32.mrb[0].mxu0
        %v1884 = vpop.f32.mrb[0].mxu0
        %v1885 = vpop.f32.mrb[0].mxu0
        %1886 = vdwg.mxu0
        %v1887 = vadd.f32 %v1257, %v1882
        %v1888 = vsel %vm551, %v1887, 0.0
        %1889 = vadd.xlane.f32.xlu0 %v1888
        %v1890 = vpop.xlane.xlu0 %1889
        %v1891 = vmul.f32 %v1890, %v1237
        %v1892 = vsub.f32 %v1887, %v1891
        %v1893 = vmul.f32 %v1892, %v1892
        %v1894 = vsel %vm551, %v1893, 0.0
        %1895 = vadd.xlane.f32.xlu0 %v1894
        %v1896 = vpop.xlane.xlu0 %1895
        %v1897 = vmul.f32 %v1896, %v1237
        %v1898 = vadd.f32 %v1897, 1e-05
        %v1899 = vrsqrt.pop %v1898
        %v1900 = vmul.f32 %v1892, %v1899
        %v1901 = vlaneseq
        %v1902 = vshrl.u32 %v1901, 7
        %v1903 = vsub.s32 7, %v1902
        %v1904 = vrot.slane %v528, %v1903
        %v1905 = vmul.f32 %v1900, %v1904
        %v1906 = vlaneseq
        %v1907 = vshrl.u32 %v1906, 7
        %v1908 = vsub.s32 0, %v1907
        %v1909 = vrot.slane %v529, %v1908
        %v1910 = vadd.f32 %v1905, %v1909
        %v1911 = vpack.c.bf16 %v1910, %v1910
        %v1912 = vld [vmem:[%s408] sm:$0xf]
        %v1913 = vld [vmem:[%s408 + $0x4] sm:$0xf]
        %v1914 = vld [vmem:[%s408 + $0x8] sm:$0xf]
        %v1915 = vld [vmem:[%s408 + $0xc] sm:$0xf]
        %v1916 = vld [vmem:[%s488] sm:$0x1]
        %v1918 = vlaneseq
        %v1919 = vshrl.u32 %v1918, 7
        %v1920 = vsub.s32 0, %v1919
        %v1921 = vrot.slane %v1916, %v1920
        %v1927 = vunpack.c.l.b16 %v1912
        %v1928 = vunpack.c.l.b16 %v1913
        %v1929 = vunpack.c.l.b16 %v1914
        %v1930 = vunpack.c.l.b16 %v1915
        %v1931 = vpack.c.b16 %v1928, %v1927
        %v1932 = vpack.c.b16 %v1930, %v1929
        %v1936 = vsel %vm551, %v1911, 0
        %1938 = vmatprep.subr.bf16.mxu0 0
        %1939 = vmatpush1.bf16.msra.mxu0 %v1931
        %1940 = vmatprep.subr.bf16.mxu0 0
        %1941 = vmatpush1.bf16.msra.mxu0 %v1932
        %1942 = vmatprep.subr.bf16.mxu0 0
        %1943 = vmatpush1.bf16.msra.mxu0 0
        %1944 = vmatprep.subr.bf16.mxu0 0
        %1945 = vmatpush1.bf16.msra.mxu0 0
        %1946 = vmatprep.subr.bf16.mxu0 0
        %1947 = vmatpush1.bf16.msra.mxu0 0
        %1948 = vmatprep.subr.bf16.mxu0 0
        %1949 = vmatpush1.bf16.msra.mxu0 0
        %1950 = vmatprep.subr.bf16.mxu0 0
        %1951 = vmatpush1.bf16.msra.mxu0 0
        %1952 = vmatprep.subr.bf16.mxu0 0
        %1953 = vmatpush1.bf16.msra.mxu0 0
        %1954 = vmatprep.subr.bf16.mxu0 0
        %1955 = vmatpush1.bf16.msra.mxu0 0
        %1956 = vmatprep.subr.bf16.mxu0 0
        %1957 = vmatpush1.bf16.msra.mxu0 0
        %1958 = vmatprep.subr.bf16.mxu0 0
        %1959 = vmatpush1.bf16.msra.mxu0 0
        %1960 = vmatprep.subr.bf16.mxu0 0
        %1961 = vmatpush1.bf16.msra.mxu0 0
        %1962 = vmatprep.subr.bf16.mxu0 0
        %1963 = vmatpush1.bf16.msra.mxu0 0
        %1964 = vmatprep.subr.bf16.mxu0 0
        %1965 = vmatpush1.bf16.msra.mxu0 0
        %1966 = vmatprep.subr.bf16.mxu0 0
        %1967 = vmatpush1.bf16.msra.mxu0 0
        %1968 = vmatprep.subr.bf16.mxu0 0
        %1969 = vmatpush1.bf16.msra.mxu0 0
        %1970 = vmatprep.mubr.bf16.mxu0 0
        %1971 = vmatmul.mubr.bf16.gmra.mrb[0].mxu0 %v1936
        %v1972 = vpop.f32.mrb[0].mxu0
        %v1973 = vadd.f32 %v1921, %v1972
        %v1974 = vpop.f32.mrb[0].mxu0
        %v1975 = vpop.f32.mrb[0].mxu0
        %v1976 = vpop.f32.mrb[0].mxu0
        %1977 = vdwg.mxu0
        %v1978 = vmax.f32 %v1973, 0.0
        %v1979 = vpack.c.bf16 %v1978, %v1978
        %v1980 = vld [vmem:[%s493] sm:$0xf]
        %v1981 = vld [vmem:[%s493 + $0x4] sm:$0xf]
        %v1982 = vld [vmem:[%s493 + $0x8] sm:$0xf]
        %v1983 = vld [vmem:[%s493 + $0xc] sm:$0xf]
        %v1984 = vld [vmem:[%s493 + $0x10] sm:$0xf]
        %v1985 = vld [vmem:[%s493 + $0x14] sm:$0xf]
        %v1986 = vld [vmem:[%s493 + $0x18] sm:$0xf]
        %v1987 = vld [vmem:[%s493 + $0x1c] sm:$0xf]
        %v1988 = vlaneseq
        %v1989 = vshrl.u32 %v1988, 7
        %v1990 = vsub.s32 4, %v1989
        %v1991 = vrot.slane %v528, %v1990
        %v2000 = vunpack.c.l.b16 %v1980
        %v2001 = vunpack.c.l.b16 %v1981
        %v2002 = vunpack.c.l.b16 %v1982
        %v2003 = vunpack.c.l.b16 %v1983
        %v2004 = vunpack.c.l.b16 %v1984
        %v2005 = vunpack.c.l.b16 %v1985
        %v2006 = vunpack.c.l.b16 %v1986
        %v2007 = vunpack.c.l.b16 %v1987
        %v2008 = vpack.c.b16 %v2001, %v2000
        %v2009 = vpack.c.b16 %v2003, %v2002
        %v2010 = vpack.c.b16 %v2005, %v2004
        %v2011 = vpack.c.b16 %v2007, %v2006
        %vm2016 = vcmask 523264
        %v2018 = vsel %vm2016, %v1979, 0
        %2020 = vmatprep.subr.bf16.mxu0 0
        %2021 = vmatpush1.bf16.msra.mxu0 %v2008
        %2022 = vmatprep.subr.bf16.mxu0 0
        %2023 = vmatpush1.bf16.msra.mxu0 %v2009
        %2024 = vmatprep.subr.bf16.mxu0 0
        %2025 = vmatpush1.bf16.msra.mxu0 %v2010
        %2026 = vmatprep.subr.bf16.mxu0 0
        %2027 = vmatpush1.bf16.msra.mxu0 %v2011
        %2028 = vmatprep.subr.bf16.mxu0 0
        %2029 = vmatpush1.bf16.msra.mxu0 0
        %2030 = vmatprep.subr.bf16.mxu0 0
        %2031 = vmatpush1.bf16.msra.mxu0 0
        %2032 = vmatprep.subr.bf16.mxu0 0
        %2033 = vmatpush1.bf16.msra.mxu0 0
        %2034 = vmatprep.subr.bf16.mxu0 0
        %2035 = vmatpush1.bf16.msra.mxu0 0
        %2036 = vmatprep.subr.bf16.mxu0 0
        %2037 = vmatpush1.bf16.msra.mxu0 0
        %2038 = vmatprep.subr.bf16.mxu0 0
        %2039 = vmatpush1.bf16.msra.mxu0 0
        %2040 = vmatprep.subr.bf16.mxu0 0
        %2041 = vmatpush1.bf16.msra.mxu0 0
        %2042 = vmatprep.subr.bf16.mxu0 0
        %2043 = vmatpush1.bf16.msra.mxu0 0
        %2044 = vmatprep.subr.bf16.mxu0 0
        %2045 = vmatpush1.bf16.msra.mxu0 0
        %2046 = vmatprep.subr.bf16.mxu0 0
        %2047 = vmatpush1.bf16.msra.mxu0 0
        %2048 = vmatprep.subr.bf16.mxu0 0
        %2049 = vmatpush1.bf16.msra.mxu0 0
        %2050 = vmatprep.subr.bf16.mxu0 0
        %2051 = vmatpush1.bf16.msra.mxu0 0
        %2052 = vmatprep.mubr.bf16.mxu0 0
        %2053 = vmatmul.mubr.bf16.gmra.mrb[0].mxu0 %v2018
        %v2054 = vpop.f32.mrb[0].mxu0
        %v2055 = vadd.f32 %v1991, %v2054
        %v2056 = vpop.f32.mrb[0].mxu0
        %v2057 = vpop.f32.mrb[0].mxu0
        %v2058 = vpop.f32.mrb[0].mxu0
        %2059 = vdwg.mxu0
        %v2060 = vadd.f32 %v1910, %v2055
        %v2061 = vsel %vm551, %v2060, 0.0
        %2062 = vadd.xlane.f32.xlu0 %v2061
        %v2063 = vpop.xlane.xlu0 %2062
        %v2064 = vmul.f32 %v2063, %v1237
        %v2065 = vsub.f32 %v2060, %v2064
        %v2066 = vmul.f32 %v2065, %v2065
        %v2067 = vsel %vm551, %v2066, 0.0
        %2068 = vadd.xlane.f32.xlu0 %v2067
        %v2069 = vpop.xlane.xlu0 %2068
        %v2070 = vmul.f32 %v2069, %v1237
        %v2071 = vadd.f32 %v2070, 1e-05
        %v2072 = vrsqrt.pop %v2071
        %v2073 = vmul.f32 %v2065, %v2072
        %v2074 = vlaneseq
        %v2075 = vshrl.u32 %v2074, 7
        %v2076 = vsub.s32 1, %v2075
        %v2077 = vrot.slane %v529, %v2076
        %v2078 = vmul.f32 %v2073, %v2077
        %v2079 = vlaneseq
        %v2080 = vshrl.u32 %v2079, 7
        %v2081 = vsub.s32 2, %v2080
        %v2082 = vrot.slane %v529, %v2081
        %v2083 = vadd.f32 %v2078, %v2082
        %2084 = vst.msk [vmem:[%s497] sm:$0xff] %vm551, %v2083
        %p2085 = scmp.lt.s32.totalorder %s29, 1
        %s2086 = scalar_select %p2085, %s29, 1
        %s2087 = smul.addr %s2086, 8
        %s2088 = scalar_lea.vmem %s8, %s2087
        // Predicated region
        $region69: #{transformer_forward.2} parent=51 // pred_check
          %p2089 = pneg %p263
        $region70: #{transformer_forward.2} parent=51 // pred_check_branch
          %2091 = sbr.rel (%p2089) target = $region72
        $region71: #{transformer_forward.2} parent=51 // pred_region
          _
        $region72: #{transformer_forward.2} parent=51 // pred_fallthru
          _
      $region52: #{transformer_forward.2} parent=5 // pred_fallthru
        _
      %p2092 = scmp.le.s32.totalorder 2, %s20
      // Predicated region
      $region73: #{transformer_forward.2} parent=5 // pred_check
        %p2093 = pneg %p2092
      $region74: #{transformer_forward.2} parent=5 // pred_check_branch
        %2095 = sbr.rel (%p2093) target = $region76
      $region75: #{transformer_forward.2} parent=5 // pred_region
        %s2096 = ssub.s32 %s20, 2
        // Predicated region
        $region77: #{transformer_forward.2} parent=75 // pred_check
          %p2097 = pneg %p269
        $region78: #{transformer_forward.2} parent=75 // pred_check_branch
          %2099 = sbr.rel (%p2097) target = $region80
        $region79: #{transformer_forward.2} parent=75 // pred_region
          %p2100 = scmp.lt.s32.totalorder %s31, 1
          %s2101 = scalar_select %p2100, %s31, 1
          %s2102 = smul.addr %s2101, 8
          %s2103 = scalar_lea.vmem %s8, %s2102
        $region80: #{transformer_forward.2} parent=75 // pred_fallthru
          _
      $region76: #{transformer_forward.2} parent=5 // pred_fallthru
        _
    $region6: #{transformer_forward.2} parent=1 // loop_footer
      %s24 = sadd.s32 1, %s20
    $region7: #{transformer_forward.2} parent=1 // loop_footer_branch
      %19 = sbr.rel target = $region3
    $region8: #{transformer_forward.2} parent=1 // loop_exit
      _
    %2104 = vsyncpa [#allocation3], 1
    %s2105 = scalar_lea.sflag [#allocation3], 1
    %2106 = vsyncpa %s2105, 1
    %2107 = vsyncpa [#allocation5], 1
    %s2108 = scalar_lea.sflag [#allocation5], 1
    %2109 = vsyncpa %s2108, 1

// kernel: transformer_forward.3
$region0: #{transformer_forward.3}
  #allocation0 [shape = 'u32[]', space=smem, size = 0x4, offset = 0x4, fixed_abs, tag = 'smem constant byte address 0x4 - core index']
  #allocation1 [shape = 'u32[144,128]{1,0:T(1,128)}', space=vmem, size = 0x12000, scoped, tag = 'internal scratch']
  %s0 = inlined_call_operand.vmem [shape: f32[2,8,32], index: 0, kind: input, shape index: {}]
  %s1 = inlined_call_operand.vmem [shape: f32[2,8,32], index: 1, kind: input, shape index: {}]
  %s2 = inlined_call_operand.vmem [shape: f32[8,32], index: 2, kind: input, shape index: {}]
  %s3 = inlined_call_operand.vmem [shape: bf16[2,4,32,32], index: 3, kind: input, shape index: {}]
  %s4 = inlined_call_operand.vmem [shape: bf16[2,4,32,32], index: 4, kind: input, shape index: {}]
  %s5 = inlined_call_operand.vmem [shape: f32[2,15,32], index: 5, kind: input, shape index: {}]
  %s6 = inlined_call_operand.vmem [shape: bf16[2,32,64], index: 6, kind: input, shape index: {}]
  %s7 = inlined_call_operand.vmem [shape: f32[2,1,64], index: 7, kind: input, shape index: {}]
  %s8 = inlined_call_operand.vmem [shape: bf16[2,64,32], index: 8, kind: input, shape index: {}]
  %s9 = inlined_call_operand.vmem [shape: f32[2,32], index: 9, kind: input, shape index: {}]
  %s10 = inlined_call_operand.hbm [shape: f32[2,8,32], index: 10, kind: output, shape index: {}]
  %s11 = sld [smem:[#allocation0]]
  $region85: #{transformer_forward.3} parent=0
    _
  %s13 = ssub.s32 1, %s11
  %s14 = scalar_select 0, %s13, %s11
  $region1: #{transformer_forward.3} parent=0
    #allocation2 [shape = 'u8[8192]{0}', space=vmem, size = 0x2000, scoped, tag = 'output window, operand 0']
    #allocation3 [shape = 's32[2]{0}', space=sflag, size = 0x8, scoped, tag = 'scoped memory for transformer_forward.3']
    %15 = vsyncpa [#allocation3], 0
    %s16 = scalar_lea.sflag [#allocation3], 1
    %17 = vsyncpa %s16, 0
    loop: start=0, step=1, limit=6
    $region2: #{transformer_forward.3} parent=1 // loop_pre_header
      _
    $region3: #{transformer_forward.3} parent=1 // loop_header
      %s19 = sphi 0, %s23
      %p20 = scmp.ge.s32.totalorder %s19, 6
      %s26 = sphi 0, %s38
      %s27 = sphi 0, %s34
      %s28 = sphi 0, %s26
      %s29 = sphi 0, %s27
      %s30 = sphi 0, %s28
      %s31 = sphi 0, %s29
      %s41 = sphi 0, %s43
      %s44 = sphi 0, %s41
      %s45 = sphi 0, %s44
      %s61 = sphi 0, %s45
      %s67 = sphi 0, %s69
      %s70 = sphi 0, %s67
      %s71 = sphi 0, %s70
      %s87 = sphi 0, %s71
      %s91 = sphi 0, %s91
      %s93 = sphi 0, %s91
      %s94 = sphi 0, %s93
      %s108 = sphi 0, %s94
      %s114 = sphi 0, %s116
      %s117 = sphi 0, %s114
      %s118 = sphi 0, %s117
      %s134 = sphi 0, %s118
      %s140 = sphi 0, %s142
      %s143 = sphi 0, %s140
      %s144 = sphi 0, %s143
      %s160 = sphi 0, %s144
      %s166 = sphi 0, %s168
      %s169 = sphi 0, %s166
      %s170 = sphi 0, %s169
      %s186 = sphi 0, %s170
      %s192 = sphi 0, %s194
      %s195 = sphi 0, %s192
      %s196 = sphi 0, %s195
      %s212 = sphi 0, %s196
      %s218 = sphi 0, %s220
      %s221 = sphi 0, %s218
      %s222 = sphi 0, %s221
      %s238 = sphi 0, %s222
      %s244 = sphi 0, %s246
      %s247 = sphi 0, %s244
      %s248 = sphi 0, %s247
      %s264 = sphi 0, %s248
      %s268 = sphi 0, %s268
      %s270 = sphi 0, %s268
      %s271 = sphi 0, %s270
      %s285 = sphi 0, %s271
      %s291 = sphi 0, %s293
      %s294 = sphi 0, %s291
      %s295 = sphi 0, %s294
      %s311 = sphi 0, %s295
    $region4: #{transformer_forward.3} parent=1 // loop_header_branch
      %22 = sbr.rel (%p20) target = $region8
    $region5: #{transformer_forward.3} parent=1 // loop_body
      %s24 = ssub.s32 %s19, 1
      %s25 = ssub.s32 %s19, 2
      %s32 = sadd.s32 1, %s27
      %p33 = scmp.ge.s32.totalorder %s32, 2
      %s34 = scalar_select %p33, 0, %s32
      %s35 = sadd.s32 1, %s26
      %s36 = scalar_select %p33, %s35, %s26
      %p37 = scmp.ge.s32.totalorder %s36, 2
      %s38 = scalar_select %p37, 0, %s36
      %s39 = ssub.s32 %s26, %s38
      %p40 = scmp.eq.s32.totalorder %s39, 0
      %s42 = sadd.s32 %s41, 1
      %s43 = scalar_select %p40, %s41, %s42
      %p46 = pneg %p40
      %p47 = scmp.eq.s32.totalorder %s19, 3
      %p48 = por %p46, %p47
      %p49 = scmp.ne.s32.totalorder %s41, %s44
      %p50 = scmp.eq.s32.totalorder %s19, 0
      %p51 = por %p49, %p50
      %p52 = scmp.ne.s32.totalorder %s41, %s44
      %p53 = scmp.eq.s32.totalorder %s24, 3
      %p54 = por %p52, %p53
      %p55 = scmp.ne.s32.totalorder %s44, %s45
      %p56 = scmp.eq.s32.totalorder %s24, 0
      %p57 = por %p55, %p56
      %p58 = scmp.ne.s32.totalorder %s44, %s45
      %p59 = scmp.eq.s32.totalorder %s25, 3
      %p60 = por %p58, %p59
      %p62 = scmp.ne.s32.totalorder %s45, %s61
      %p63 = scmp.eq.s32.totalorder %s25, 0
      %p64 = por %p62, %p63
      %s65 = ssub.s32 %s26, %s38
      %p66 = scmp.eq.s32.totalorder %s65, 0
      %s68 = sadd.s32 %s67, 1
      %s69 = scalar_select %p66, %s67, %s68
      %p72 = pneg %p66
      %p73 = scmp.eq.s32.totalorder %s19, 3
      %p74 = por %p72, %p73
      %p75 = scmp.ne.s32.totalorder %s67, %s70
      %p76 = scmp.eq.s32.totalorder %s19, 0
      %p77 = por %p75, %p76
      %p78 = scmp.ne.s32.totalorder %s67, %s70
      %p79 = scmp.eq.s32.totalorder %s24, 3
      %p80 = por %p78, %p79
      %p81 = scmp.ne.s32.totalorder %s70, %s71
      %p82 = scmp.eq.s32.totalorder %s24, 0
      %p83 = por %p81, %p82
      %p84 = scmp.ne.s32.totalorder %s70, %s71
      %p85 = scmp.eq.s32.totalorder %s25, 3
      %p86 = por %p84, %p85
      %p88 = scmp.ne.s32.totalorder %s71, %s87
      %p89 = scmp.eq.s32.totalorder %s25, 0
      %p90 = por %p88, %p89
      %s92 = sadd.s32 %s91, 1
      %p95 = scmp.eq.s32.totalorder %s19, 3
      %p96 = scmp.ne.s32.totalorder %s91, %s93
      %p97 = scmp.eq.s32.totalorder %s19, 0
      %p98 = por %p96, %p97
      %p99 = scmp.ne.s32.totalorder %s91, %s93
      %p100 = scmp.eq.s32.totalorder %s24, 3
      %p101 = por %p99, %p100
      %p102 = scmp.ne.s32.totalorder %s93, %s94
      %p103 = scmp.eq.s32.totalorder %s24, 0
      %p104 = por %p102, %p103
      %p105 = scmp.ne.s32.totalorder %s93, %s94
      %p106 = scmp.eq.s32.totalorder %s25, 3
      %p107 = por %p105, %p106
      %p109 = scmp.ne.s32.totalorder %s94, %s108
      %p110 = scmp.eq.s32.totalorder %s25, 0
      %p111 = por %p109, %p110
      %s112 = ssub.s32 %s27, %s34
      %p113 = scmp.eq.s32.totalorder %s112, 0
      %s115 = sadd.s32 %s114, 1
      %s116 = scalar_select %p113, %s114, %s115
      %p119 = pneg %p113
      %p120 = scmp.eq.s32.totalorder %s19, 3
      %p121 = por %p119, %p120
      %p122 = scmp.ne.s32.totalorder %s114, %s117
      %p123 = scmp.eq.s32.totalorder %s19, 0
      %p124 = por %p122, %p123
      %p125 = scmp.ne.s32.totalorder %s114, %s117
      %p126 = scmp.eq.s32.totalorder %s24, 3
      %p127 = por %p125, %p126
      %p128 = scmp.ne.s32.totalorder %s117, %s118
      %p129 = scmp.eq.s32.totalorder %s24, 0
      %p130 = por %p128, %p129
      %p131 = scmp.ne.s32.totalorder %s117, %s118
      %p132 = scmp.eq.s32.totalorder %s25, 3
      %p133 = por %p131, %p132
      %p135 = scmp.ne.s32.totalorder %s118, %s134
      %p136 = scmp.eq.s32.totalorder %s25, 0
      %p137 = por %p135, %p136
      %s138 = ssub.s32 %s27, %s34
      %p139 = scmp.eq.s32.totalorder %s138, 0
      %s141 = sadd.s32 %s140, 1
      %s142 = scalar_select %p139, %s140, %s141
      %p145 = pneg %p139
      %p146 = scmp.eq.s32.totalorder %s19, 3
      %p147 = por %p145, %p146
      %p148 = scmp.ne.s32.totalorder %s140, %s143
      %p149 = scmp.eq.s32.totalorder %s19, 0
      %p150 = por %p148, %p149
      %p151 = scmp.ne.s32.totalorder %s140, %s143
      %p152 = scmp.eq.s32.totalorder %s24, 3
      %p153 = por %p151, %p152
      %p154 = scmp.ne.s32.totalorder %s143, %s144
      %p155 = scmp.eq.s32.totalorder %s24, 0
      %p156 = por %p154, %p155
      %p157 = scmp.ne.s32.totalorder %s143, %s144
      %p158 = scmp.eq.s32.totalorder %s25, 3
      %p159 = por %p157, %p158
      %p161 = scmp.ne.s32.totalorder %s144, %s160
      %p162 = scmp.eq.s32.totalorder %s25, 0
      %p163 = por %p161, %p162
      %s164 = ssub.s32 %s27, %s34
      %p165 = scmp.eq.s32.totalorder %s164, 0
      %s167 = sadd.s32 %s166, 1
      %s168 = scalar_select %p165, %s166, %s167
      %p171 = pneg %p165
      %p172 = scmp.eq.s32.totalorder %s19, 3
      %p173 = por %p171, %p172
      %p174 = scmp.ne.s32.totalorder %s166, %s169
      %p175 = scmp.eq.s32.totalorder %s19, 0
      %p176 = por %p174, %p175
      %p177 = scmp.ne.s32.totalorder %s166, %s169
      %p178 = scmp.eq.s32.totalorder %s24, 3
      %p179 = por %p177, %p178
      %p180 = scmp.ne.s32.totalorder %s169, %s170
      %p181 = scmp.eq.s32.totalorder %s24, 0
      %p182 = por %p180, %p181
      %p183 = scmp.ne.s32.totalorder %s169, %s170
      %p184 = scmp.eq.s32.totalorder %s25, 3
      %p185 = por %p183, %p184
      %p187 = scmp.ne.s32.totalorder %s170, %s186
      %p188 = scmp.eq.s32.totalorder %s25, 0
      %p189 = por %p187, %p188
      %s190 = ssub.s32 %s27, %s34
      %p191 = scmp.eq.s32.totalorder %s190, 0
      %s193 = sadd.s32 %s192, 1
      %s194 = scalar_select %p191, %s192, %s193
      %p197 = pneg %p191
      %p198 = scmp.eq.s32.totalorder %s19, 3
      %p199 = por %p197, %p198
      %p200 = scmp.ne.s32.totalorder %s192, %s195
      %p201 = scmp.eq.s32.totalorder %s19, 0
      %p202 = por %p200, %p201
      %p203 = scmp.ne.s32.totalorder %s192, %s195
      %p204 = scmp.eq.s32.totalorder %s24, 3
      %p205 = por %p203, %p204
      %p206 = scmp.ne.s32.totalorder %s195, %s196
      %p207 = scmp.eq.s32.totalorder %s24, 0
      %p208 = por %p206, %p207
      %p209 = scmp.ne.s32.totalorder %s195, %s196
      %p210 = scmp.eq.s32.totalorder %s25, 3
      %p211 = por %p209, %p210
      %p213 = scmp.ne.s32.totalorder %s196, %s212
      %p214 = scmp.eq.s32.totalorder %s25, 0
      %p215 = por %p213, %p214
      %s216 = ssub.s32 %s27, %s34
      %p217 = scmp.eq.s32.totalorder %s216, 0
      %s219 = sadd.s32 %s218, 1
      %s220 = scalar_select %p217, %s218, %s219
      %p223 = pneg %p217
      %p224 = scmp.eq.s32.totalorder %s19, 3
      %p225 = por %p223, %p224
      %p226 = scmp.ne.s32.totalorder %s218, %s221
      %p227 = scmp.eq.s32.totalorder %s19, 0
      %p228 = por %p226, %p227
      %p229 = scmp.ne.s32.totalorder %s218, %s221
      %p230 = scmp.eq.s32.totalorder %s24, 3
      %p231 = por %p229, %p230
      %p232 = scmp.ne.s32.totalorder %s221, %s222
      %p233 = scmp.eq.s32.totalorder %s24, 0
      %p234 = por %p232, %p233
      %p235 = scmp.ne.s32.totalorder %s221, %s222
      %p236 = scmp.eq.s32.totalorder %s25, 3
      %p237 = por %p235, %p236
      %p239 = scmp.ne.s32.totalorder %s222, %s238
      %p240 = scmp.eq.s32.totalorder %s25, 0
      %p241 = por %p239, %p240
      %s242 = ssub.s32 %s27, %s34
      %p243 = scmp.eq.s32.totalorder %s242, 0
      %s245 = sadd.s32 %s244, 1
      %s246 = scalar_select %p243, %s244, %s245
      %p249 = pneg %p243
      %p250 = scmp.eq.s32.totalorder %s19, 3
      %p251 = por %p249, %p250
      %p252 = scmp.ne.s32.totalorder %s244, %s247
      %p253 = scmp.eq.s32.totalorder %s19, 0
      %p254 = por %p252, %p253
      %p255 = scmp.ne.s32.totalorder %s244, %s247
      %p256 = scmp.eq.s32.totalorder %s24, 3
      %p257 = por %p255, %p256
      %p258 = scmp.ne.s32.totalorder %s247, %s248
      %p259 = scmp.eq.s32.totalorder %s24, 0
      %p260 = por %p258, %p259
      %p261 = scmp.ne.s32.totalorder %s247, %s248
      %p262 = scmp.eq.s32.totalorder %s25, 3
      %p263 = por %p261, %p262
      %p265 = scmp.ne.s32.totalorder %s248, %s264
      %p266 = scmp.eq.s32.totalorder %s25, 0
      %p267 = por %p265, %p266
      %s269 = sadd.s32 %s268, 1
      %p272 = scmp.eq.s32.totalorder %s19, 3
      %p273 = scmp.ne.s32.totalorder %s268, %s270
      %p274 = scmp.eq.s32.totalorder %s19, 0
      %p275 = por %p273, %p274
      %p276 = scmp.ne.s32.totalorder %s268, %s270
      %p277 = scmp.eq.s32.totalorder %s24, 3
      %p278 = por %p276, %p277
      %p279 = scmp.ne.s32.totalorder %s270, %s271
      %p280 = scmp.eq.s32.totalorder %s24, 0
      %p281 = por %p279, %p280
      %p282 = scmp.ne.s32.totalorder %s270, %s271
      %p283 = scmp.eq.s32.totalorder %s25, 3
      %p284 = por %p282, %p283
      %p286 = scmp.ne.s32.totalorder %s271, %s285
      %p287 = scmp.eq.s32.totalorder %s25, 0
      %p288 = por %p286, %p287
      %s289 = ssub.s32 %s26, %s38
      %p290 = scmp.eq.s32.totalorder %s289, 0
      %s292 = sadd.s32 %s291, 1
      %s293 = scalar_select %p290, %s291, %s292
      %p296 = pneg %p290
      %p297 = scmp.eq.s32.totalorder %s19, 3
      %p298 = por %p296, %p297
      %p299 = scmp.ne.s32.totalorder %s291, %s294
      %p300 = scmp.eq.s32.totalorder %s19, 0
      %p301 = por %p299, %p300
      %p302 = scmp.ne.s32.totalorder %s291, %s294
      %p303 = scmp.eq.s32.totalorder %s24, 3
      %p304 = por %p302, %p303
      %p305 = scmp.ne.s32.totalorder %s294, %s295
      %p306 = scmp.eq.s32.totalorder %s24, 0
      %p307 = por %p305, %p306
      %p308 = scmp.ne.s32.totalorder %s294, %s295
      %p309 = scmp.eq.s32.totalorder %s25, 3
      %p310 = por %p308, %p309
      %p312 = scmp.ne.s32.totalorder %s295, %s311
      %p313 = scmp.eq.s32.totalorder %s25, 0
      %p314 = por %p312, %p313
      %p315 = scmp.le.s32.totalorder 1, %s19
      %p316 = scmp.lt.s32.totalorder %s19, 5
      %p317 = pnand %p315, %p316
      %p318 = pneg %p317
      // Predicated region
      $region9: #{transformer_forward.3} parent=5 // pred_check
        _
      $region10: #{transformer_forward.3} parent=5 // pred_check_branch
        %320 = sbr.rel (%p317) target = $region12
      $region11: #{transformer_forward.3} parent=5 // pred_region
        %s321 = ssub.s32 %s19, 1
        // Predicated region
        $region13: #{transformer_forward.3} parent=11 // pred_check
          %p322 = pneg %p104
        $region14: #{transformer_forward.3} parent=11 // pred_check_branch
          %324 = sbr.rel (%p322) target = $region16
        $region15: #{transformer_forward.3} parent=11 // pred_region
          _
        $region16: #{transformer_forward.3} parent=11 // pred_fallthru
          _
        // Predicated region
        $region17: #{transformer_forward.3} parent=11 // pred_check
          %p325 = pneg %p281
        $region18: #{transformer_forward.3} parent=11 // pred_check_branch
          %327 = sbr.rel (%p325) target = $region20
        $region19: #{transformer_forward.3} parent=11 // pred_region
          _
        $region20: #{transformer_forward.3} parent=11 // pred_fallthru
          _
      $region12: #{transformer_forward.3} parent=5 // pred_fallthru
        _
      %p328 = scmp.lt.s32.totalorder %s19, 4
      // Predicated region
      $region21: #{transformer_forward.3} parent=5 // pred_check
        %p329 = pneg %p328
      $region22: #{transformer_forward.3} parent=5 // pred_check_branch
        %331 = sbr.rel (%p329) target = $region24
      $region23: #{transformer_forward.3} parent=5 // pred_region
        // Predicated region
        $region25: #{transformer_forward.3} parent=23 // pred_check
          %p332 = pneg %p51
        $region26: #{transformer_forward.3} parent=23 // pred_check_branch
          %334 = sbr.rel (%p332) target = $region28
        $region27: #{transformer_forward.3} parent=23 // pred_region
          %p335 = scmp.lt.s32.totalorder %s26, 1
          %s336 = scalar_select %p335, %s26, 1
          %s337 = smul.addr %s336, 8
          %s338 = scalar_lea.vmem %s0, %s337
        $region28: #{transformer_forward.3} parent=23 // pred_fallthru
          _
        // Predicated region
        $region29: #{transformer_forward.3} parent=23 // pred_check
          %p339 = pneg %p77
        $region30: #{transformer_forward.3} parent=23 // pred_check_branch
          %341 = sbr.rel (%p339) target = $region32
        $region31: #{transformer_forward.3} parent=23 // pred_region
          %p342 = scmp.lt.s32.totalorder %s26, 1
          %s343 = scalar_select %p342, %s26, 1
          %s344 = smul.addr %s343, 8
          %s345 = scalar_lea.vmem %s1, %s344
        $region32: #{transformer_forward.3} parent=23 // pred_fallthru
          _
        // Predicated region
        $region33: #{transformer_forward.3} parent=23 // pred_check
          %p346 = pneg %p124
        $region34: #{transformer_forward.3} parent=23 // pred_check_branch
          %348 = sbr.rel (%p346) target = $region36
        $region35: #{transformer_forward.3} parent=23 // pred_region
          %p349 = scmp.lt.s32.totalorder %s27, 1
          %s350 = scalar_select %p349, %s27, 1
          %s351 = smul.addr %s350, 16
          %s352 = smul.addr %s351, 4
          %s353 = scalar_lea.vmem %s3, %s352
        $region36: #{transformer_forward.3} parent=23 // pred_fallthru
          _
        // Predicated region
        $region37: #{transformer_forward.3} parent=23 // pred_check
          %p354 = pneg %p150
        $region38: #{transformer_forward.3} parent=23 // pred_check_branch
          %356 = sbr.rel (%p354) target = $region40
        $region39: #{transformer_forward.3} parent=23 // pred_region
          %p357 = scmp.lt.s32.totalorder %s27, 1
          %s358 = scalar_select %p357, %s27, 1
          %s359 = smul.addr %s358, 16
          %s360 = smul.addr %s359, 4
          %s361 = scalar_lea.vmem %s4, %s360
        $region40: #{transformer_forward.3} parent=23 // pred_fallthru
          _
        // Predicated region
        $region41: #{transformer_forward.3} parent=23 // pred_check
          %p362 = pneg %p176
        $region42: #{transformer_forward.3} parent=23 // pred_check_branch
          %364 = sbr.rel (%p362) target = $region44
        $region43: #{transformer_forward.3} parent=23 // pred_region
          %p365 = scmp.lt.s32.totalorder %s27, 1
          %s366 = scalar_select %p365, %s27, 1
          %s367 = smul.addr %s366, 2
          %s368 = smul.addr %s367, 8
          %s369 = scalar_lea.vmem %s5, %s368
        $region44: #{transformer_forward.3} parent=23 // pred_fallthru
          _
        // Predicated region
        $region45: #{transformer_forward.3} parent=23 // pred_check
          %p370 = pneg %p202
        $region46: #{transformer_forward.3} parent=23 // pred_check_branch
          %372 = sbr.rel (%p370) target = $region48
        $region47: #{transformer_forward.3} parent=23 // pred_region
          %p373 = scmp.lt.s32.totalorder %s27, 1
          %s374 = scalar_select %p373, %s27, 1
          %s375 = smul.addr %s374, 4
          %s376 = smul.addr %s375, 4
          %s377 = scalar_lea.vmem %s6, %s376
        $region48: #{transformer_forward.3} parent=23 // pred_fallthru
          _
        // Predicated region
        $region49: #{transformer_forward.3} parent=23 // pred_check
          %p378 = pneg %p228
        $region50: #{transformer_forward.3} parent=23 // pred_check_branch
          %380 = sbr.rel (%p378) target = $region52
        $region51: #{transformer_forward.3} parent=23 // pred_region
          %p381 = scmp.lt.s32.totalorder %s27, 1
          %s382 = scalar_select %p381, %s27, 1
          %s383 = scalar_lea.vmem %s7, %s382
        $region52: #{transformer_forward.3} parent=23 // pred_fallthru
          _
        // Predicated region
        $region53: #{transformer_forward.3} parent=23 // pred_check
          %p384 = pneg %p254
        $region54: #{transformer_forward.3} parent=23 // pred_check_branch
          %386 = sbr.rel (%p384) target = $region56
        $region55: #{transformer_forward.3} parent=23 // pred_region
          %p387 = scmp.lt.s32.totalorder %s27, 1
          %s388 = scalar_select %p387, %s27, 1
          %s389 = smul.addr %s388, 8
          %s390 = smul.addr %s389, 4
          %s391 = scalar_lea.vmem %s8, %s390
        $region56: #{transformer_forward.3} parent=23 // pred_fallthru
          _
      $region24: #{transformer_forward.3} parent=5 // pred_fallthru
        _
      %p392 = scmp.le.s32.totalorder 1, %s19
      %p393 = scmp.lt.s32.totalorder %s19, 5
      %p394 = pnand %p392, %p393
      %p395 = pneg %p394
      // Predicated region
      $region57: #{transformer_forward.3} parent=5 // pred_check
        _
      $region58: #{transformer_forward.3} parent=5 // pred_check_branch
        %397 = sbr.rel (%p394) target = $region60
      $region59: #{transformer_forward.3} parent=5 // pred_region
        %s398 = ssub.s32 %s19, 1
        %p399 = scmp.lt.s32.totalorder %s28, 1
        %s400 = scalar_select %p399, %s28, 1
        %s401 = smul.addr %s400, 8
        %s402 = scalar_lea.vmem %s0, %s401
        %p403 = pneg %p57
        %p404 = pneg %p54
        %p405 = scmp.lt.s32.totalorder %s28, 1
        %s406 = scalar_select %p405, %s28, 1
        %s407 = smul.addr %s406, 8
        %s408 = scalar_lea.vmem %s1, %s407
        %p409 = pneg %p83
        %p410 = pneg %p80
        %p411 = pneg %p104
        %p412 = pneg %p101
        %p413 = scmp.lt.s32.totalorder %s29, 1
        %s414 = scalar_select %p413, %s29, 1
        %s415 = smul.addr %s414, 16
        %s416 = smul.addr %s415, 4
        %s417 = scalar_lea.vmem %s3, %s416
        %p418 = pneg %p130
        %p419 = pneg %p127
        %p420 = scmp.lt.s32.totalorder %s29, 1
        %s421 = scalar_select %p420, %s29, 1
        %s422 = smul.addr %s421, 16
        %s423 = smul.addr %s422, 4
        %s424 = scalar_lea.vmem %s4, %s423
        %p425 = pneg %p156
        %p426 = pneg %p153
        %p427 = scmp.lt.s32.totalorder %s29, 1
        %s428 = scalar_select %p427, %s29, 1
        %s429 = smul.addr %s428, 2
        %s430 = smul.addr %s429, 8
        %s431 = scalar_lea.vmem %s5, %s430
        %p432 = pneg %p182
        %p433 = pneg %p179
        %p434 = scmp.lt.s32.totalorder %s29, 1
        %s435 = scalar_select %p434, %s29, 1
        %s436 = smul.addr %s435, 4
        %s437 = smul.addr %s436, 4
        %s438 = scalar_lea.vmem %s6, %s437
        %p439 = pneg %p208
        %p440 = pneg %p205
        %p441 = scmp.lt.s32.totalorder %s29, 1
        %s442 = scalar_select %p441, %s29, 1
        %s443 = scalar_lea.vmem %s7, %s442
        %p444 = pneg %p234
        %p445 = pneg %p231
        %p446 = scmp.lt.s32.totalorder %s29, 1
        %s447 = scalar_select %p446, %s29, 1
        %s448 = smul.addr %s447, 8
        %s449 = smul.addr %s448, 4
        %s450 = scalar_lea.vmem %s8, %s449
        %p451 = pneg %p260
        %p452 = pneg %p257
        %p453 = pneg %p281
        %p454 = pneg %p278
        %p455 = pneg %p307
        %p456 = pneg %p304
        %s457 = sand.u32 %s294, 1
        %s458 = scalar_lea.sflag [#allocation3], %s457
        %s459 = sand.u32 %s294, 1
        %s460 = smul.addr %s459, 8
        %s461 = scalar_lea.vmem [#allocation2], %s460
        %p462 = scmp.lt.s32.totalorder %s28, 1
        %s463 = scalar_select %p462, %s28, 1
        %s464 = smul.addr %s463, 8
        %s465 = scalar_lea.vmem %s0, %s464
        %p466 = scmp.lt.s32.totalorder %s28, 1
        %s467 = scalar_select %p466, %s28, 1
        %s468 = smul.addr %s467, 8
        %s469 = scalar_lea.vmem %s1, %s468
        %p470 = scmp.lt.s32.totalorder %s29, 1
        %s471 = scalar_select %p470, %s29, 1
        %s472 = smul.addr %s471, 16
        %s473 = smul.addr %s472, 4
        %s474 = scalar_lea.vmem %s3, %s473
        %p475 = scmp.lt.s32.totalorder %s29, 1
        %s476 = scalar_select %p475, %s29, 1
        %s477 = smul.addr %s476, 16
        %s478 = smul.addr %s477, 4
        %s479 = scalar_lea.vmem %s4, %s478
        %p480 = scmp.lt.s32.totalorder %s29, 1
        %s481 = scalar_select %p480, %s29, 1
        %s482 = smul.addr %s481, 2
        %s483 = smul.addr %s482, 8
        %s484 = scalar_lea.vmem %s5, %s483
        %p485 = scmp.lt.s32.totalorder %s29, 1
        %s486 = scalar_select %p485, %s29, 1
        %s487 = smul.addr %s486, 4
        %s488 = smul.addr %s487, 4
        %s489 = scalar_lea.vmem %s6, %s488
        %p490 = scmp.lt.s32.totalorder %s29, 1
        %s491 = scalar_select %p490, %s29, 1
        %s492 = scalar_lea.vmem %s7, %s491
        %p493 = scmp.lt.s32.totalorder %s29, 1
        %s494 = scalar_select %p493, %s29, 1
        %s495 = smul.addr %s494, 8
        %s496 = smul.addr %s495, 4
        %s497 = scalar_lea.vmem %s8, %s496
        %p499 = scmp.eq.s32.totalorder %s29, 0
        // Predicated region
        $region61: #{transformer_forward.3} parent=59 // pred_check
          %p500 = pneg %p499
        $region62: #{transformer_forward.3} parent=59 // pred_check_branch
          %502 = sbr.rel (%p500) target = $region64
        $region63: #{transformer_forward.3} parent=59 // pred_region
          %vm503 = vcmask 261120
          %504 = vst.msk [vmem:[%s461] sm:$0xff] %vm503, 0.0
        $region64: #{transformer_forward.3} parent=59 // pred_fallthru
          _
        %v505 = vld [vmem:[%s461] sm:$0xff]
        %v506 = vld [vmem:[%s465] sm:$0xff]
        %v507 = vld [vmem:[%s469] sm:$0xff]
        %v508 = vld [vmem:[%s2] sm:$0xff]
        %v509 = vld [vmem:[%s484] sm:$0xff]
        %v510 = vld [vmem:[%s484 + $0x8] sm:$0x7f]
        %v511 = vadd.f32 %v505, %v508
        %v512 = vld [vmem:[%s474] sm:$0xf]
        %v513 = vld [vmem:[%s474 + $0x4] sm:$0xf]
        %v514 = vld [vmem:[%s474 + $0x8] sm:$0xf]
        %v515 = vld [vmem:[%s474 + $0xc] sm:$0xf]
        %s516 = scalar_lea.vmem %s474, 16
        %v517 = vld [vmem:[%s516] sm:$0xf]
        %v518 = vld [vmem:[%s516 + $0x4] sm:$0xf]
        %v519 = vld [vmem:[%s516 + $0x8] sm:$0xf]
        %v520 = vld [vmem:[%s516 + $0xc] sm:$0xf]
        %s521 = scalar_lea.vmem %s474, 32
        %v522 = vld [vmem:[%s521] sm:$0xf]
        %v523 = vld [vmem:[%s521 + $0x4] sm:$0xf]
        %v524 = vld [vmem:[%s521 + $0x8] sm:$0xf]
        %v525 = vld [vmem:[%s521 + $0xc] sm:$0xf]
        %s526 = scalar_lea.vmem %s474, 48
        %v527 = vld [vmem:[%s526] sm:$0xf]
        %v528 = vld [vmem:[%s526 + $0x4] sm:$0xf]
        %v529 = vld [vmem:[%s526 + $0x8] sm:$0xf]
        %v530 = vld [vmem:[%s526 + $0xc] sm:$0xf]
        %v531 = vpack.c.bf16 %v511, %v511
        %v532 = vpack.c.bf16 %v505, %v505
        %v533 = vlaneseq
        %v534 = vshrl.u32 %v533, 7
        %v535 = vsub.s32 0, %v534
        %v536 = vrot.slane %v509, %v535
        %v541 = vunpack.c.l.b16 %v512
        %v542 = vunpack.c.l.b16 %v513
        %v543 = vunpack.c.l.b16 %v514
        %v544 = vunpack.c.l.b16 %v515
        %v545 = vpack.c.b16 %v542, %v541
        %v546 = vpack.c.b16 %v544, %v543
        %vm549 = vcmask 261120
        %v551 = vsel %vm549, %v531, 0
        %553 = vmatprep.subr.bf16.mxu0 0
        %554 = vmatpush1.bf16.msra.mxu0 %v545
        %555 = vmatprep.subr.bf16.mxu0 0
        %556 = vmatpush1.bf16.msra.mxu0 %v546
        %557 = vmatprep.subr.bf16.mxu0 0
        %558 = vmatpush1.bf16.msra.mxu0 0
        %559 = vmatprep.subr.bf16.mxu0 0
        %560 = vmatpush1.bf16.msra.mxu0 0
        %561 = vmatprep.subr.bf16.mxu0 0
        %562 = vmatpush1.bf16.msra.mxu0 0
        %563 = vmatprep.subr.bf16.mxu0 0
        %564 = vmatpush1.bf16.msra.mxu0 0
        %565 = vmatprep.subr.bf16.mxu0 0
        %566 = vmatpush1.bf16.msra.mxu0 0
        %567 = vmatprep.subr.bf16.mxu0 0
        %568 = vmatpush1.bf16.msra.mxu0 0
        %569 = vmatprep.subr.bf16.mxu0 0
        %570 = vmatpush1.bf16.msra.mxu0 0
        %571 = vmatprep.subr.bf16.mxu0 0
        %572 = vmatpush1.bf16.msra.mxu0 0
        %573 = vmatprep.subr.bf16.mxu0 0
        %574 = vmatpush1.bf16.msra.mxu0 0
        %575 = vmatprep.subr.bf16.mxu0 0
        %576 = vmatpush1.bf16.msra.mxu0 0
        %577 = vmatprep.subr.bf16.mxu0 0
        %578 = vmatpush1.bf16.msra.mxu0 0
        %579 = vmatprep.subr.bf16.mxu0 0
        %580 = vmatpush1.bf16.msra.mxu0 0
        %581 = vmatprep.subr.bf16.mxu0 0
        %582 = vmatpush1.bf16.msra.mxu0 0
        %583 = vmatprep.subr.bf16.mxu0 0
        %584 = vmatpush1.bf16.msra.mxu0 0
        %585 = vmatprep.mubr.bf16.mxu0 0
        %586 = vmatmul.mubr.bf16.gmra.mrb[0].mxu0 %v551
        %v587 = vpop.f32.mrb[0].mxu0
        %v588 = vadd.f32 %v536, %v587
        %v589 = vpop.f32.mrb[0].mxu0
        %v590 = vpop.f32.mrb[0].mxu0
        %v591 = vpop.f32.mrb[0].mxu0
        %592 = vdwg.mxu0
        %v593 = vmul.f32 %v588, 0.35355338
        %v594 = vlaneseq
        %v595 = vshrl.u32 %v594, 7
        %v596 = vsub.s32 1, %v595
        %v597 = vrot.slane %v509, %v596
        %v602 = vunpack.c.l.b16 %v517
        %v603 = vunpack.c.l.b16 %v518
        %v604 = vunpack.c.l.b16 %v519
        %v605 = vunpack.c.l.b16 %v520
        %v606 = vpack.c.b16 %v603, %v602
        %v607 = vpack.c.b16 %v605, %v604
        %610 = vmatprep.subr.bf16.mxu0 0
        %611 = vmatpush1.bf16.msra.mxu0 %v606
        %612 = vmatprep.subr.bf16.mxu0 0
        %613 = vmatpush1.bf16.msra.mxu0 %v607
        %614 = vmatprep.subr.bf16.mxu0 0
        %615 = vmatpush1.bf16.msra.mxu0 0
        %616 = vmatprep.subr.bf16.mxu0 0
        %617 = vmatpush1.bf16.msra.mxu0 0
        %618 = vmatprep.subr.bf16.mxu0 0
        %619 = vmatpush1.bf16.msra.mxu0 0
        %620 = vmatprep.subr.bf16.mxu0 0
        %621 = vmatpush1.bf16.msra.mxu0 0
        %622 = vmatprep.subr.bf16.mxu0 0
        %623 = vmatpush1.bf16.msra.mxu0 0
        %624 = vmatprep.subr.bf16.mxu0 0
        %625 = vmatpush1.bf16.msra.mxu0 0
        %626 = vmatprep.subr.bf16.mxu0 0
        %627 = vmatpush1.bf16.msra.mxu0 0
        %628 = vmatprep.subr.bf16.mxu0 0
        %629 = vmatpush1.bf16.msra.mxu0 0
        %630 = vmatprep.subr.bf16.mxu0 0
        %631 = vmatpush1.bf16.msra.mxu0 0
        %632 = vmatprep.subr.bf16.mxu0 0
        %633 = vmatpush1.bf16.msra.mxu0 0
        %634 = vmatprep.subr.bf16.mxu0 0
        %635 = vmatpush1.bf16.msra.mxu0 0
        %636 = vmatprep.subr.bf16.mxu0 0
        %637 = vmatpush1.bf16.msra.mxu0 0
        %638 = vmatprep.subr.bf16.mxu0 0
        %639 = vmatpush1.bf16.msra.mxu0 0
        %640 = vmatprep.subr.bf16.mxu0 0
        %641 = vmatpush1.bf16.msra.mxu0 0
        %642 = vmatprep.mubr.bf16.mxu0 0
        %643 = vmatmul.mubr.bf16.gmra.mrb[0].mxu0 %v551
        %v644 = vpop.f32.mrb[0].mxu0
        %v645 = vadd.f32 %v597, %v644
        %v646 = vpop.f32.mrb[0].mxu0
        %v647 = vpop.f32.mrb[0].mxu0
        %v648 = vpop.f32.mrb[0].mxu0
        %649 = vdwg.mxu0
        %v650 = vlaneseq
        %v651 = vshrl.u32 %v650, 7
        %v652 = vsub.s32 2, %v651
        %v653 = vrot.slane %v509, %v652
        %v658 = vunpack.c.l.b16 %v522
        %v659 = vunpack.c.l.b16 %v523
        %v660 = vunpack.c.l.b16 %v524
        %v661 = vunpack.c.l.b16 %v525
        %v662 = vpack.c.b16 %v659, %v658
        %v663 = vpack.c.b16 %v661, %v660
        %v667 = vsel %vm549, %v532, 0
        %669 = vmatprep.subr.bf16.mxu0 0
        %670 = vmatpush1.bf16.msra.mxu0 %v662
        %671 = vmatprep.subr.bf16.mxu0 0
        %672 = vmatpush1.bf16.msra.mxu0 %v663
        %673 = vmatprep.subr.bf16.mxu0 0
        %674 = vmatpush1.bf16.msra.mxu0 0
        %675 = vmatprep.subr.bf16.mxu0 0
        %676 = vmatpush1.bf16.msra.mxu0 0
        %677 = vmatprep.subr.bf16.mxu0 0
        %678 = vmatpush1.bf16.msra.mxu0 0
        %679 = vmatprep.subr.bf16.mxu0 0
        %680 = vmatpush1.bf16.msra.mxu0 0
        %681 = vmatprep.subr.bf16.mxu0 0
        %682 = vmatpush1.bf16.msra.mxu0 0
        %683 = vmatprep.subr.bf16.mxu0 0
        %684 = vmatpush1.bf16.msra.mxu0 0
        %685 = vmatprep.subr.bf16.mxu0 0
        %686 = vmatpush1.bf16.msra.mxu0 0
        %687 = vmatprep.subr.bf16.mxu0 0
        %688 = vmatpush1.bf16.msra.mxu0 0
        %689 = vmatprep.subr.bf16.mxu0 0
        %690 = vmatpush1.bf16.msra.mxu0 0
        %691 = vmatprep.subr.bf16.mxu0 0
        %692 = vmatpush1.bf16.msra.mxu0 0
        %693 = vmatprep.subr.bf16.mxu0 0
        %694 = vmatpush1.bf16.msra.mxu0 0
        %695 = vmatprep.subr.bf16.mxu0 0
        %696 = vmatpush1.bf16.msra.mxu0 0
        %697 = vmatprep.subr.bf16.mxu0 0
        %698 = vmatpush1.bf16.msra.mxu0 0
        %699 = vmatprep.subr.bf16.mxu0 0
        %700 = vmatpush1.bf16.msra.mxu0 0
        %701 = vmatprep.mubr.bf16.mxu0 0
        %702 = vmatmul.mubr.bf16.gmra.mrb[0].mxu0 %v667
        %v703 = vpop.f32.mrb[0].mxu0
        %v704 = vadd.f32 %v653, %v703
        %v705 = vpop.f32.mrb[0].mxu0
        %v706 = vpop.f32.mrb[0].mxu0
        %v707 = vpop.f32.mrb[0].mxu0
        %708 = vdwg.mxu0
        %v709 = vpack.c.bf16 %v593, %v593
        %v710 = vpack.c.bf16 %v645, %v645
        %v711 = vpack.c.bf16 %v704, %v704
        %vm712 = vcmask 64512
        %v714 = vsel %vm712, %v709, 0
        %v717 = vsel %vm712, %v710, 0
        %719 = vmatprep.subr.bf16.mxu0 0
        %720 = vmatpush1.bf16.xpose.msra.mxu0 %v717
        %721 = vmatprep.subr.bf16.mxu0 0
        %722 = vmatpush1.bf16.xpose.msra.mxu0 0
        %723 = vmatprep.subr.bf16.mxu0 0
        %724 = vmatpush1.bf16.xpose.msra.mxu0 0
        %725 = vmatprep.subr.bf16.mxu0 0
        %726 = vmatpush1.bf16.xpose.msra.mxu0 0
        %727 = vmatprep.subr.bf16.mxu0 0
        %728 = vmatpush1.bf16.xpose.msra.mxu0 0
        %729 = vmatprep.subr.bf16.mxu0 0
        %730 = vmatpush1.bf16.xpose.msra.mxu0 0
        %731 = vmatprep.subr.bf16.mxu0 0
        %732 = vmatpush1.bf16.xpose.msra.mxu0 0
        %733 = vmatprep.subr.bf16.mxu0 0
        %734 = vmatpush1.bf16.xpose.msra.mxu0 0
        %735 = vmatprep.subr.bf16.mxu0 0
        %736 = vmatpush1.bf16.xpose.msra.mxu0 0
        %737 = vmatprep.subr.bf16.mxu0 0
        %738 = vmatpush1.bf16.xpose.msra.mxu0 0
        %739 = vmatprep.subr.bf16.mxu0 0
        %740 = vmatpush1.bf16.xpose.msra.mxu0 0
        %741 = vmatprep.subr.bf16.mxu0 0
        %742 = vmatpush1.bf16.xpose.msra.mxu0 0
        %743 = vmatprep.subr.bf16.mxu0 0
        %744 = vmatpush1.bf16.xpose.msra.mxu0 0
        %745 = vmatprep.subr.bf16.mxu0 0
        %746 = vmatpush1.bf16.xpose.msra.mxu0 0
        %747 = vmatprep.subr.bf16.mxu0 0
        %748 = vmatpush1.bf16.xpose.msra.mxu0 0
        %749 = vmatprep.subr.bf16.mxu0 0
        %750 = vmatpush1.bf16.xpose.msra.mxu0 0
        %751 = vmatprep.mubr.bf16.mxu0 0
        %752 = vmatmul.mubr.bf16.gmra.mrb[0].mxu0 %v714
        %v753 = vpop.f32.mrb[0].mxu0
        %v754 = vadd.f32 0.0, %v753
        %v755 = vpop.f32.mrb[0].mxu0
        %v756 = vpop.f32.mrb[0].mxu0
        %v757 = vpop.f32.mrb[0].mxu0
        %758 = vdwg.mxu0
        %v759 = vsel %vm712, %v754, -inf
        %760 = vmax.xlane.f32.xlu0 %v759
        %v761 = vpop.xlane.xlu0 %760
        %v762 = vsub.f32 %v754, %v761
        %v763 = vmul.f32 %v762, 1.442695
        %v764 = vpow.pop %v763
        %v765 = vsel %vm712, %v764, 0.0
        %766 = vadd.xlane.f32.xlu0 %v765
        %v767 = vpop.xlane.xlu0 %766
        %v768 = vrcp.pop %v767
        %v769 = vmul.f32 %v764, %v768
        %v770 = vpack.c.bf16 %v769, %v769
        %v772 = vsel %vm712, %v770, 0
        %vm774 = vcmask 1043456
        %v776 = vsel %vm774, %v711, 0
        %778 = vmatprep.subr.bf16.mxu0 0
        %779 = vmatpush1.bf16.msra.mxu0 %v776
        %780 = vmatprep.subr.bf16.mxu0 0
        %781 = vmatpush1.bf16.msra.mxu0 0
        %782 = vmatprep.subr.bf16.mxu0 0
        %783 = vmatpush1.bf16.msra.mxu0 0
        %784 = vmatprep.subr.bf16.mxu0 0
        %785 = vmatpush1.bf16.msra.mxu0 0
        %786 = vmatprep.subr.bf16.mxu0 0
        %787 = vmatpush1.bf16.msra.mxu0 0
        %788 = vmatprep.subr.bf16.mxu0 0
        %789 = vmatpush1.bf16.msra.mxu0 0
        %790 = vmatprep.subr.bf16.mxu0 0
        %791 = vmatpush1.bf16.msra.mxu0 0
        %792 = vmatprep.subr.bf16.mxu0 0
        %793 = vmatpush1.bf16.msra.mxu0 0
        %794 = vmatprep.subr.bf16.mxu0 0
        %795 = vmatpush1.bf16.msra.mxu0 0
        %796 = vmatprep.subr.bf16.mxu0 0
        %797 = vmatpush1.bf16.msra.mxu0 0
        %798 = vmatprep.subr.bf16.mxu0 0
        %799 = vmatpush1.bf16.msra.mxu0 0
        %800 = vmatprep.subr.bf16.mxu0 0
        %801 = vmatpush1.bf16.msra.mxu0 0
        %802 = vmatprep.subr.bf16.mxu0 0
        %803 = vmatpush1.bf16.msra.mxu0 0
        %804 = vmatprep.subr.bf16.mxu0 0
        %805 = vmatpush1.bf16.msra.mxu0 0
        %806 = vmatprep.subr.bf16.mxu0 0
        %807 = vmatpush1.bf16.msra.mxu0 0
        %808 = vmatprep.subr.bf16.mxu0 0
        %809 = vmatpush1.bf16.msra.mxu0 0
        %810 = vmatprep.mubr.bf16.mxu0 0
        %811 = vmatmul.mubr.bf16.gmra.mrb[0].mxu0 %v772
        %v812 = vpop.f32.mrb[0].mxu0
        %v813 = vadd.f32 0.0, %v812
        %v814 = vpop.f32.mrb[0].mxu0
        %v815 = vpop.f32.mrb[0].mxu0
        %v816 = vpop.f32.mrb[0].mxu0
        %817 = vdwg.mxu0
        %819 = vrot.lane.b32.xlu0 %v709, 120
        %v820 = vpop.permute.xlu0 %819
        %822 = vrot.lane.b32.xlu0 %v710, 120
        %v823 = vpop.permute.xlu0 %822
        %v825 = vsel %vm712, %v820, 0
        %v828 = vsel %vm712, %v823, 0
        %830 = vmatprep.subr.bf16.mxu0 0
        %831 = vmatpush1.bf16.xpose.msra.mxu0 %v828
        %832 = vmatprep.subr.bf16.mxu0 0
        %833 = vmatpush1.bf16.xpose.msra.mxu0 0
        %834 = vmatprep.subr.bf16.mxu0 0
        %835 = vmatpush1.bf16.xpose.msra.mxu0 0
        %836 = vmatprep.subr.bf16.mxu0 0
        %837 = vmatpush1.bf16.xpose.msra.mxu0 0
        %838 = vmatprep.subr.bf16.mxu0 0
        %839 = vmatpush1.bf16.xpose.msra.mxu0 0
        %840 = vmatprep.subr.bf16.mxu0 0
        %841 = vmatpush1.bf16.xpose.msra.mxu0 0
        %842 = vmatprep.subr.bf16.mxu0 0
        %843 = vmatpush1.bf16.xpose.msra.mxu0 0
        %844 = vmatprep.subr.bf16.mxu0 0
        %845 = vmatpush1.bf16.xpose.msra.mxu0 0
        %846 = vmatprep.subr.bf16.mxu0 0
        %847 = vmatpush1.bf16.xpose.msra.mxu0 0
        %848 = vmatprep.subr.bf16.mxu0 0
        %849 = vmatpush1.bf16.xpose.msra.mxu0 0
        %850 = vmatprep.subr.bf16.mxu0 0
        %851 = vmatpush1.bf16.xpose.msra.mxu0 0
        %852 = vmatprep.subr.bf16.mxu0 0
        %853 = vmatpush1.bf16.xpose.msra.mxu0 0
        %854 = vmatprep.subr.bf16.mxu0 0
        %855 = vmatpush1.bf16.xpose.msra.mxu0 0
        %856 = vmatprep.subr.bf16.mxu0 0
        %857 = vmatpush1.bf16.xpose.msra.mxu0 0
        %858 = vmatprep.subr.bf16.mxu0 0
        %859 = vmatpush1.bf16.xpose.msra.mxu0 0
        %860 = vmatprep.subr.bf16.mxu0 0
        %861 = vmatpush1.bf16.xpose.msra.mxu0 0
        %862 = vmatprep.mubr.bf16.mxu0 0
        %863 = vmatmul.mubr.bf16.gmra.mrb[0].mxu0 %v825
        %v864 = vpop.f32.mrb[0].mxu0
        %v865 = vadd.f32 0.0, %v864
        %v866 = vpop.f32.mrb[0].mxu0
        %v867 = vpop.f32.mrb[0].mxu0
        %v868 = vpop.f32.mrb[0].mxu0
        %869 = vdwg.mxu0
        %v870 = vsel %vm712, %v865, -inf
        %871 = vmax.xlane.f32.xlu0 %v870
        %v872 = vpop.xlane.xlu0 %871
        %v873 = vsub.f32 %v865, %v872
        %v874 = vmul.f32 %v873, 1.442695
        %v875 = vpow.pop %v874
        %v876 = vsel %vm712, %v875, 0.0
        %877 = vadd.xlane.f32.xlu0 %v876
        %v878 = vpop.xlane.xlu0 %877
        %v879 = vrcp.pop %v878
        %v880 = vmul.f32 %v875, %v879
        %v881 = vpack.c.bf16 %v880, %v880
        %883 = vrot.lane.b32.xlu0 %v711, 120
        %v884 = vpop.permute.xlu0 %883
        %v886 = vsel %vm712, %v881, 0
        %v889 = vsel %vm774, %v884, 0
        %891 = vmatprep.subr.bf16.mxu0 0
        %892 = vmatpush1.bf16.msra.mxu0 %v889
        %893 = vmatprep.subr.bf16.mxu0 0
        %894 = vmatpush1.bf16.msra.mxu0 0
        %895 = vmatprep.subr.bf16.mxu0 0
        %896 = vmatpush1.bf16.msra.mxu0 0
        %897 = vmatprep.subr.bf16.mxu0 0
        %898 = vmatpush1.bf16.msra.mxu0 0
        %899 = vmatprep.subr.bf16.mxu0 0
        %900 = vmatpush1.bf16.msra.mxu0 0
        %901 = vmatprep.subr.bf16.mxu0 0
        %902 = vmatpush1.bf16.msra.mxu0 0
        %903 = vmatprep.subr.bf16.mxu0 0
        %904 = vmatpush1.bf16.msra.mxu0 0
        %905 = vmatprep.subr.bf16.mxu0 0
        %906 = vmatpush1.bf16.msra.mxu0 0
        %907 = vmatprep.subr.bf16.mxu0 0
        %908 = vmatpush1.bf16.msra.mxu0 0
        %909 = vmatprep.subr.bf16.mxu0 0
        %910 = vmatpush1.bf16.msra.mxu0 0
        %911 = vmatprep.subr.bf16.mxu0 0
        %912 = vmatpush1.bf16.msra.mxu0 0
        %913 = vmatprep.subr.bf16.mxu0 0
        %914 = vmatpush1.bf16.msra.mxu0 0
        %915 = vmatprep.subr.bf16.mxu0 0
        %916 = vmatpush1.bf16.msra.mxu0 0
        %917 = vmatprep.subr.bf16.mxu0 0
        %918 = vmatpush1.bf16.msra.mxu0 0
        %919 = vmatprep.subr.bf16.mxu0 0
        %920 = vmatpush1.bf16.msra.mxu0 0
        %921 = vmatprep.subr.bf16.mxu0 0
        %922 = vmatpush1.bf16.msra.mxu0 0
        %923 = vmatprep.mubr.bf16.mxu0 0
        %924 = vmatmul.mubr.bf16.gmra.mrb[0].mxu0 %v886
        %v925 = vpop.f32.mrb[0].mxu0
        %v926 = vadd.f32 0.0, %v925
        %v927 = vpop.f32.mrb[0].mxu0
        %v928 = vpop.f32.mrb[0].mxu0
        %v929 = vpop.f32.mrb[0].mxu0
        %930 = vdwg.mxu0
        %931 = vrot.lane.b32.xlu0 %v709, 112
        %v932 = vpop.permute.xlu0 %931
        %933 = vrot.lane.b32.xlu0 %v710, 112
        %v934 = vpop.permute.xlu0 %933
        %v936 = vsel %vm712, %v932, 0
        %v939 = vsel %vm712, %v934, 0
        %941 = vmatprep.subr.bf16.mxu0 0
        %942 = vmatpush1.bf16.xpose.msra.mxu0 %v939
        %943 = vmatprep.subr.bf16.mxu0 0
        %944 = vmatpush1.bf16.xpose.msra.mxu0 0
        %945 = vmatprep.subr.bf16.mxu0 0
        %946 = vmatpush1.bf16.xpose.msra.mxu0 0
        %947 = vmatprep.subr.bf16.mxu0 0
        %948 = vmatpush1.bf16.xpose.msra.mxu0 0
        %949 = vmatprep.subr.bf16.mxu0 0
        %950 = vmatpush1.bf16.xpose.msra.mxu0 0
        %951 = vmatprep.subr.bf16.mxu0 0
        %952 = vmatpush1.bf16.xpose.msra.mxu0 0
        %953 = vmatprep.subr.bf16.mxu0 0
        %954 = vmatpush1.bf16.xpose.msra.mxu0 0
        %955 = vmatprep.subr.bf16.mxu0 0
        %956 = vmatpush1.bf16.xpose.msra.mxu0 0
        %957 = vmatprep.subr.bf16.mxu0 0
        %958 = vmatpush1.bf16.xpose.msra.mxu0 0
        %959 = vmatprep.subr.bf16.mxu0 0
        %960 = vmatpush1.bf16.xpose.msra.mxu0 0
        %961 = vmatprep.subr.bf16.mxu0 0
        %962 = vmatpush1.bf16.xpose.msra.mxu0 0
        %963 = vmatprep.subr.bf16.mxu0 0
        %964 = vmatpush1.bf16.xpose.msra.mxu0 0
        %965 = vmatprep.subr.bf16.mxu0 0
        %966 = vmatpush1.bf16.xpose.msra.mxu0 0
        %967 = vmatprep.subr.bf16.mxu0 0
        %968 = vmatpush1.bf16.xpose.msra.mxu0 0
        %969 = vmatprep.subr.bf16.mxu0 0
        %970 = vmatpush1.bf16.xpose.msra.mxu0 0
        %971 = vmatprep.subr.bf16.mxu0 0
        %972 = vmatpush1.bf16.xpose.msra.mxu0 0
        %973 = vmatprep.mubr.bf16.mxu0 0
        %974 = vmatmul.mubr.bf16.gmra.mrb[0].mxu0 %v936
        %v975 = vpop.f32.mrb[0].mxu0
        %v976 = vadd.f32 0.0, %v975
        %v977 = vpop.f32.mrb[0].mxu0
        %v978 = vpop.f32.mrb[0].mxu0
        %v979 = vpop.f32.mrb[0].mxu0
        %980 = vdwg.mxu0
        %v981 = vsel %vm712, %v976, -inf
        %982 = vmax.xlane.f32.xlu0 %v981
        %v983 = vpop.xlane.xlu0 %982
        %v984 = vsub.f32 %v976, %v983
        %v985 = vmul.f32 %v984, 1.442695
        %v986 = vpow.pop %v985
        %v987 = vsel %vm712, %v986, 0.0
        %988 = vadd.xlane.f32.xlu0 %v987
        %v989 = vpop.xlane.xlu0 %988
        %v990 = vrcp.pop %v989
        %v991 = vmul.f32 %v986, %v990
        %v992 = vpack.c.bf16 %v991, %v991
        %993 = vrot.lane.b32.xlu0 %v711, 112
        %v994 = vpop.permute.xlu0 %993
        %v996 = vsel %vm712, %v992, 0
        %v999 = vsel %vm774, %v994, 0
        %1001 = vmatprep.subr.bf16.mxu0 0
        %1002 = vmatpush1.bf16.msra.mxu0 %v999
        %1003 = vmatprep.subr.bf16.mxu0 0
        %1004 = vmatpush1.bf16.msra.mxu0 0
        %1005 = vmatprep.subr.bf16.mxu0 0
        %1006 = vmatpush1.bf16.msra.mxu0 0
        %1007 = vmatprep.subr.bf16.mxu0 0
        %1008 = vmatpush1.bf16.msra.mxu0 0
        %1009 = vmatprep.subr.bf16.mxu0 0
        %1010 = vmatpush1.bf16.msra.mxu0 0
        %1011 = vmatprep.subr.bf16.mxu0 0
        %1012 = vmatpush1.bf16.msra.mxu0 0
        %1013 = vmatprep.subr.bf16.mxu0 0
        %1014 = vmatpush1.bf16.msra.mxu0 0
        %1015 = vmatprep.subr.bf16.mxu0 0
        %1016 = vmatpush1.bf16.msra.mxu0 0
        %1017 = vmatprep.subr.bf16.mxu0 0
        %1018 = vmatpush1.bf16.msra.mxu0 0
        %1019 = vmatprep.subr.bf16.mxu0 0
        %1020 = vmatpush1.bf16.msra.mxu0 0
        %1021 = vmatprep.subr.bf16.mxu0 0
        %1022 = vmatpush1.bf16.msra.mxu0 0
        %1023 = vmatprep.subr.bf16.mxu0 0
        %1024 = vmatpush1.bf16.msra.mxu0 0
        %1025 = vmatprep.subr.bf16.mxu0 0
        %1026 = vmatpush1.bf16.msra.mxu0 0
        %1027 = vmatprep.subr.bf16.mxu0 0
        %1028 = vmatpush1.bf16.msra.mxu0 0
        %1029 = vmatprep.subr.bf16.mxu0 0
        %1030 = vmatpush1.bf16.msra.mxu0 0
        %1031 = vmatprep.subr.bf16.mxu0 0
        %1032 = vmatpush1.bf16.msra.mxu0 0
        %1033 = vmatprep.mubr.bf16.mxu0 0
        %1034 = vmatmul.mubr.bf16.gmra.mrb[0].mxu0 %v996
        %v1035 = vpop.f32.mrb[0].mxu0
        %v1036 = vadd.f32 0.0, %v1035
        %v1037 = vpop.f32.mrb[0].mxu0
        %v1038 = vpop.f32.mrb[0].mxu0
        %v1039 = vpop.f32.mrb[0].mxu0
        %1040 = vdwg.mxu0
        %1041 = vrot.lane.b32.xlu0 %v709, 104
        %v1042 = vpop.permute.xlu0 %1041
        %1043 = vrot.lane.b32.xlu0 %v710, 104
        %v1044 = vpop.permute.xlu0 %1043
        %v1046 = vsel %vm712, %v1042, 0
        %v1049 = vsel %vm712, %v1044, 0
        %1051 = vmatprep.subr.bf16.mxu0 0
        %1052 = vmatpush1.bf16.xpose.msra.mxu0 %v1049
        %1053 = vmatprep.subr.bf16.mxu0 0
        %1054 = vmatpush1.bf16.xpose.msra.mxu0 0
        %1055 = vmatprep.subr.bf16.mxu0 0
        %1056 = vmatpush1.bf16.xpose.msra.mxu0 0
        %1057 = vmatprep.subr.bf16.mxu0 0
        %1058 = vmatpush1.bf16.xpose.msra.mxu0 0
        %1059 = vmatprep.subr.bf16.mxu0 0
        %1060 = vmatpush1.bf16.xpose.msra.mxu0 0
        %1061 = vmatprep.subr.bf16.mxu0 0
        %1062 = vmatpush1.bf16.xpose.msra.mxu0 0
        %1063 = vmatprep.subr.bf16.mxu0 0
        %1064 = vmatpush1.bf16.xpose.msra.mxu0 0
        %1065 = vmatprep.subr.bf16.mxu0 0
        %1066 = vmatpush1.bf16.xpose.msra.mxu0 0
        %1067 = vmatprep.subr.bf16.mxu0 0
        %1068 = vmatpush1.bf16.xpose.msra.mxu0 0
        %1069 = vmatprep.subr.bf16.mxu0 0
        %1070 = vmatpush1.bf16.xpose.msra.mxu0 0
        %1071 = vmatprep.subr.bf16.mxu0 0
        %1072 = vmatpush1.bf16.xpose.msra.mxu0 0
        %1073 = vmatprep.subr.bf16.mxu0 0
        %1074 = vmatpush1.bf16.xpose.msra.mxu0 0
        %1075 = vmatprep.subr.bf16.mxu0 0
        %1076 = vmatpush1.bf16.xpose.msra.mxu0 0
        %1077 = vmatprep.subr.bf16.mxu0 0
        %1078 = vmatpush1.bf16.xpose.msra.mxu0 0
        %1079 = vmatprep.subr.bf16.mxu0 0
        %1080 = vmatpush1.bf16.xpose.msra.mxu0 0
        %1081 = vmatprep.subr.bf16.mxu0 0
        %1082 = vmatpush1.bf16.xpose.msra.mxu0 0
        %1083 = vmatprep.mubr.bf16.mxu0 0
        %1084 = vmatmul.mubr.bf16.gmra.mrb[0].mxu0 %v1046
        %v1085 = vpop.f32.mrb[0].mxu0
        %v1086 = vadd.f32 0.0, %v1085
        %v1087 = vpop.f32.mrb[0].mxu0
        %v1088 = vpop.f32.mrb[0].mxu0
        %v1089 = vpop.f32.mrb[0].mxu0
        %1090 = vdwg.mxu0
        %v1091 = vsel %vm712, %v1086, -inf
        %1092 = vmax.xlane.f32.xlu0 %v1091
        %v1093 = vpop.xlane.xlu0 %1092
        %v1094 = vsub.f32 %v1086, %v1093
        %v1095 = vmul.f32 %v1094, 1.442695
        %v1096 = vpow.pop %v1095
        %v1097 = vsel %vm712, %v1096, 0.0
        %1098 = vadd.xlane.f32.xlu0 %v1097
        %v1099 = vpop.xlane.xlu0 %1098
        %v1100 = vrcp.pop %v1099
        %v1101 = vmul.f32 %v1096, %v1100
        %v1102 = vpack.c.bf16 %v1101, %v1101
        %1103 = vrot.lane.b32.xlu0 %v711, 104
        %v1104 = vpop.permute.xlu0 %1103
        %v1106 = vsel %vm712, %v1102, 0
        %v1109 = vsel %vm774, %v1104, 0
        %1111 = vmatprep.subr.bf16.mxu0 0
        %1112 = vmatpush1.bf16.msra.mxu0 %v1109
        %1113 = vmatprep.subr.bf16.mxu0 0
        %1114 = vmatpush1.bf16.msra.mxu0 0
        %1115 = vmatprep.subr.bf16.mxu0 0
        %1116 = vmatpush1.bf16.msra.mxu0 0
        %1117 = vmatprep.subr.bf16.mxu0 0
        %1118 = vmatpush1.bf16.msra.mxu0 0
        %1119 = vmatprep.subr.bf16.mxu0 0
        %1120 = vmatpush1.bf16.msra.mxu0 0
        %1121 = vmatprep.subr.bf16.mxu0 0
        %1122 = vmatpush1.bf16.msra.mxu0 0
        %1123 = vmatprep.subr.bf16.mxu0 0
        %1124 = vmatpush1.bf16.msra.mxu0 0
        %1125 = vmatprep.subr.bf16.mxu0 0
        %1126 = vmatpush1.bf16.msra.mxu0 0
        %1127 = vmatprep.subr.bf16.mxu0 0
        %1128 = vmatpush1.bf16.msra.mxu0 0
        %1129 = vmatprep.subr.bf16.mxu0 0
        %1130 = vmatpush1.bf16.msra.mxu0 0
        %1131 = vmatprep.subr.bf16.mxu0 0
        %1132 = vmatpush1.bf16.msra.mxu0 0
        %1133 = vmatprep.subr.bf16.mxu0 0
        %1134 = vmatpush1.bf16.msra.mxu0 0
        %1135 = vmatprep.subr.bf16.mxu0 0
        %1136 = vmatpush1.bf16.msra.mxu0 0
        %1137 = vmatprep.subr.bf16.mxu0 0
        %1138 = vmatpush1.bf16.msra.mxu0 0
        %1139 = vmatprep.subr.bf16.mxu0 0
        %1140 = vmatpush1.bf16.msra.mxu0 0
        %1141 = vmatprep.subr.bf16.mxu0 0
        %1142 = vmatpush1.bf16.msra.mxu0 0
        %1143 = vmatprep.mubr.bf16.mxu0 0
        %1144 = vmatmul.mubr.bf16.gmra.mrb[0].mxu0 %v1106
        %v1145 = vpop.f32.mrb[0].mxu0
        %v1146 = vadd.f32 0.0, %v1145
        %v1147 = vpop.f32.mrb[0].mxu0
        %v1148 = vpop.f32.mrb[0].mxu0
        %v1149 = vpop.f32.mrb[0].mxu0
        %1150 = vdwg.mxu0
        %1152 = vrot.lane.b32.xlu0 %v926, 8
        %v1153 = vpop.permute.xlu0 %1152
        %1156 = vrot.lane.b32.xlu0 %v1036, 16
        %v1157 = vpop.permute.xlu0 %1156
        %1160 = vrot.lane.b32.xlu0 %v1146, 24
        %v1161 = vpop.permute.xlu0 %1160
        %v1163 = vsel %vm712, %v813, %v1153
        %vm1164 = vcmask 130048
        %v1165 = vsel %vm1164, %v1163, %v1157
        %vm1166 = vcmask 195584
        %v1167 = vsel %vm1166, %v1165, %v1161
        %v1168 = vpack.c.bf16 %v1167, %v1167
        %v1169 = vlaneseq
        %v1170 = vshrl.u32 %v1169, 7
        %v1171 = vsub.s32 3, %v1170
        %v1172 = vrot.slane %v509, %v1171
        %v1177 = vunpack.c.l.b16 %v527
        %v1178 = vunpack.c.l.b16 %v528
        %v1179 = vunpack.c.l.b16 %v529
        %v1180 = vunpack.c.l.b16 %v530
        %v1181 = vpack.c.b16 %v1178, %v1177
        %v1182 = vpack.c.b16 %v1180, %v1179
        %v1186 = vsel %vm549, %v1168, 0
        %1188 = vmatprep.subr.bf16.mxu0 0
        %1189 = vmatpush1.bf16.msra.mxu0 %v1181
        %1190 = vmatprep.subr.bf16.mxu0 0
        %1191 = vmatpush1.bf16.msra.mxu0 %v1182
        %1192 = vmatprep.subr.bf16.mxu0 0
        %1193 = vmatpush1.bf16.msra.mxu0 0
        %1194 = vmatprep.subr.bf16.mxu0 0
        %1195 = vmatpush1.bf16.msra.mxu0 0
        %1196 = vmatprep.subr.bf16.mxu0 0
        %1197 = vmatpush1.bf16.msra.mxu0 0
        %1198 = vmatprep.subr.bf16.mxu0 0
        %1199 = vmatpush1.bf16.msra.mxu0 0
        %1200 = vmatprep.subr.bf16.mxu0 0
        %1201 = vmatpush1.bf16.msra.mxu0 0
        %1202 = vmatprep.subr.bf16.mxu0 0
        %1203 = vmatpush1.bf16.msra.mxu0 0
        %1204 = vmatprep.subr.bf16.mxu0 0
        %1205 = vmatpush1.bf16.msra.mxu0 0
        %1206 = vmatprep.subr.bf16.mxu0 0
        %1207 = vmatpush1.bf16.msra.mxu0 0
        %1208 = vmatprep.subr.bf16.mxu0 0
        %1209 = vmatpush1.bf16.msra.mxu0 0
        %1210 = vmatprep.subr.bf16.mxu0 0
        %1211 = vmatpush1.bf16.msra.mxu0 0
        %1212 = vmatprep.subr.bf16.mxu0 0
        %1213 = vmatpush1.bf16.msra.mxu0 0
        %1214 = vmatprep.subr.bf16.mxu0 0
        %1215 = vmatpush1.bf16.msra.mxu0 0
        %1216 = vmatprep.subr.bf16.mxu0 0
        %1217 = vmatpush1.bf16.msra.mxu0 0
        %1218 = vmatprep.subr.bf16.mxu0 0
        %1219 = vmatpush1.bf16.msra.mxu0 0
        %1220 = vmatprep.mubr.bf16.mxu0 0
        %1221 = vmatmul.mubr.bf16.gmra.mrb[0].mxu0 %v1186
        %v1222 = vpop.f32.mrb[0].mxu0
        %v1223 = vadd.f32 %v1172, %v1222
        %v1224 = vpop.f32.mrb[0].mxu0
        %v1225 = vpop.f32.mrb[0].mxu0
        %v1226 = vpop.f32.mrb[0].mxu0
        %1227 = vdwg.mxu0
        %v1228 = vadd.f32 %v505, %v1223
        %v1229 = vsel %vm549, %v1228, 0.0
        %1230 = vadd.xlane.f32.xlu0 %v1229
        %v1231 = vpop.xlane.xlu0 %1230
        %v1232 = vrcp.pop 32.0
        %v1233 = vmul.f32 %v1231, %v1232
        %v1234 = vsub.f32 %v1228, %v1233
        %v1235 = vmul.f32 %v1234, %v1234
        %v1236 = vsel %vm549, %v1235, 0.0
        %1237 = vadd.xlane.f32.xlu0 %v1236
        %v1238 = vpop.xlane.xlu0 %1237
        %v1239 = vmul.f32 %v1238, %v1232
        %v1240 = vadd.f32 %v1239, 1e-05
        %v1241 = vrsqrt.pop %v1240
        %v1242 = vmul.f32 %v1234, %v1241
        %v1243 = vlaneseq
        %v1244 = vshrl.u32 %v1243, 7
        %v1245 = vsub.s32 1, %v1244
        %v1246 = vrot.slane %v510, %v1245
        %v1247 = vmul.f32 %v1242, %v1246
        %v1248 = vlaneseq
        %v1249 = vshrl.u32 %v1248, 7
        %v1250 = vsub.s32 2, %v1249
        %v1251 = vrot.slane %v510, %v1250
        %v1252 = vadd.f32 %v1247, %v1251
        %v1253 = vadd.f32 %v1252, %v508
        %v1254 = vadd.f32 %v506, %v507
        %v1255 = vld [vmem:[%s479] sm:$0xf]
        %v1256 = vld [vmem:[%s479 + $0x4] sm:$0xf]
        %v1257 = vld [vmem:[%s479 + $0x8] sm:$0xf]
        %v1258 = vld [vmem:[%s479 + $0xc] sm:$0xf]
        %s1259 = scalar_lea.vmem %s479, 16
        %v1260 = vld [vmem:[%s1259] sm:$0xf]
        %v1261 = vld [vmem:[%s1259 + $0x4] sm:$0xf]
        %v1262 = vld [vmem:[%s1259 + $0x8] sm:$0xf]
        %v1263 = vld [vmem:[%s1259 + $0xc] sm:$0xf]
        %s1264 = scalar_lea.vmem %s479, 32
        %v1265 = vld [vmem:[%s1264] sm:$0xf]
        %v1266 = vld [vmem:[%s1264 + $0x4] sm:$0xf]
        %v1267 = vld [vmem:[%s1264 + $0x8] sm:$0xf]
        %v1268 = vld [vmem:[%s1264 + $0xc] sm:$0xf]
        %s1269 = scalar_lea.vmem %s479, 48
        %v1270 = vld [vmem:[%s1269] sm:$0xf]
        %v1271 = vld [vmem:[%s1269 + $0x4] sm:$0xf]
        %v1272 = vld [vmem:[%s1269 + $0x8] sm:$0xf]
        %v1273 = vld [vmem:[%s1269 + $0xc] sm:$0xf]
        %v1274 = vpack.c.bf16 %v1253, %v1253
        %v1275 = vpack.c.bf16 %v1254, %v1254
        %v1276 = vpack.c.bf16 %v506, %v506
        %v1277 = vlaneseq
        %v1278 = vshrl.u32 %v1277, 7
        %v1279 = vsub.s32 4, %v1278
        %v1280 = vrot.slane %v509, %v1279
        %v1285 = vunpack.c.l.b16 %v1255
        %v1286 = vunpack.c.l.b16 %v1256
        %v1287 = vunpack.c.l.b16 %v1257
        %v1288 = vunpack.c.l.b16 %v1258
        %v1289 = vpack.c.b16 %v1286, %v1285
        %v1290 = vpack.c.b16 %v1288, %v1287
        %v1294 = vsel %vm549, %v1274, 0
        %1296 = vmatprep.subr.bf16.mxu0 0
        %1297 = vmatpush1.bf16.msra.mxu0 %v1289
        %1298 = vmatprep.subr.bf16.mxu0 0
        %1299 = vmatpush1.bf16.msra.mxu0 %v1290
        %1300 = vmatprep.subr.bf16.mxu0 0
        %1301 = vmatpush1.bf16.msra.mxu0 0
        %1302 = vmatprep.subr.bf16.mxu0 0
        %1303 = vmatpush1.bf16.msra.mxu0 0
        %1304 = vmatprep.subr.bf16.mxu0 0
        %1305 = vmatpush1.bf16.msra.mxu0 0
        %1306 = vmatprep.subr.bf16.mxu0 0
        %1307 = vmatpush1.bf16.msra.mxu0 0
        %1308 = vmatprep.subr.bf16.mxu0 0
        %1309 = vmatpush1.bf16.msra.mxu0 0
        %1310 = vmatprep.subr.bf16.mxu0 0
        %1311 = vmatpush1.bf16.msra.mxu0 0
        %1312 = vmatprep.subr.bf16.mxu0 0
        %1313 = vmatpush1.bf16.msra.mxu0 0
        %1314 = vmatprep.subr.bf16.mxu0 0
        %1315 = vmatpush1.bf16.msra.mxu0 0
        %1316 = vmatprep.subr.bf16.mxu0 0
        %1317 = vmatpush1.bf16.msra.mxu0 0
        %1318 = vmatprep.subr.bf16.mxu0 0
        %1319 = vmatpush1.bf16.msra.mxu0 0
        %1320 = vmatprep.subr.bf16.mxu0 0
        %1321 = vmatpush1.bf16.msra.mxu0 0
        %1322 = vmatprep.subr.bf16.mxu0 0
        %1323 = vmatpush1.bf16.msra.mxu0 0
        %1324 = vmatprep.subr.bf16.mxu0 0
        %1325 = vmatpush1.bf16.msra.mxu0 0
        %1326 = vmatprep.subr.bf16.mxu0 0
        %1327 = vmatpush1.bf16.msra.mxu0 0
        %1328 = vmatprep.mubr.bf16.mxu0 0
        %1329 = vmatmul.mubr.bf16.gmra.mrb[0].mxu0 %v1294
        %v1330 = vpop.f32.mrb[0].mxu0
        %v1331 = vadd.f32 %v1280, %v1330
        %v1332 = vpop.f32.mrb[0].mxu0
        %v1333 = vpop.f32.mrb[0].mxu0
        %v1334 = vpop.f32.mrb[0].mxu0
        %1335 = vdwg.mxu0
        %v1336 = vmul.f32 %v1331, 0.35355338
        %v1337 = vlaneseq
        %v1338 = vshrl.u32 %v1337, 7
        %v1339 = vsub.s32 5, %v1338
        %v1340 = vrot.slane %v509, %v1339
        %v1345 = vunpack.c.l.b16 %v1260
        %v1346 = vunpack.c.l.b16 %v1261
        %v1347 = vunpack.c.l.b16 %v1262
        %v1348 = vunpack.c.l.b16 %v1263
        %v1349 = vpack.c.b16 %v1346, %v1345
        %v1350 = vpack.c.b16 %v1348, %v1347
        %v1354 = vsel %vm549, %v1275, 0
        %1356 = vmatprep.subr.bf16.mxu0 0
        %1357 = vmatpush1.bf16.msra.mxu0 %v1349
        %1358 = vmatprep.subr.bf16.mxu0 0
        %1359 = vmatpush1.bf16.msra.mxu0 %v1350
        %1360 = vmatprep.subr.bf16.mxu0 0
        %1361 = vmatpush1.bf16.msra.mxu0 0
        %1362 = vmatprep.subr.bf16.mxu0 0
        %1363 = vmatpush1.bf16.msra.mxu0 0
        %1364 = vmatprep.subr.bf16.mxu0 0
        %1365 = vmatpush1.bf16.msra.mxu0 0
        %1366 = vmatprep.subr.bf16.mxu0 0
        %1367 = vmatpush1.bf16.msra.mxu0 0
        %1368 = vmatprep.subr.bf16.mxu0 0
        %1369 = vmatpush1.bf16.msra.mxu0 0
        %1370 = vmatprep.subr.bf16.mxu0 0
        %1371 = vmatpush1.bf16.msra.mxu0 0
        %1372 = vmatprep.subr.bf16.mxu0 0
        %1373 = vmatpush1.bf16.msra.mxu0 0
        %1374 = vmatprep.subr.bf16.mxu0 0
        %1375 = vmatpush1.bf16.msra.mxu0 0
        %1376 = vmatprep.subr.bf16.mxu0 0
        %1377 = vmatpush1.bf16.msra.mxu0 0
        %1378 = vmatprep.subr.bf16.mxu0 0
        %1379 = vmatpush1.bf16.msra.mxu0 0
        %1380 = vmatprep.subr.bf16.mxu0 0
        %1381 = vmatpush1.bf16.msra.mxu0 0
        %1382 = vmatprep.subr.bf16.mxu0 0
        %1383 = vmatpush1.bf16.msra.mxu0 0
        %1384 = vmatprep.subr.bf16.mxu0 0
        %1385 = vmatpush1.bf16.msra.mxu0 0
        %1386 = vmatprep.subr.bf16.mxu0 0
        %1387 = vmatpush1.bf16.msra.mxu0 0
        %1388 = vmatprep.mubr.bf16.mxu0 0
        %1389 = vmatmul.mubr.bf16.gmra.mrb[0].mxu0 %v1354
        %v1390 = vpop.f32.mrb[0].mxu0
        %v1391 = vadd.f32 %v1340, %v1390
        %v1392 = vpop.f32.mrb[0].mxu0
        %v1393 = vpop.f32.mrb[0].mxu0
        %v1394 = vpop.f32.mrb[0].mxu0
        %1395 = vdwg.mxu0
        %v1396 = vlaneseq
        %v1397 = vshrl.u32 %v1396, 7
        %v1398 = vsub.s32 6, %v1397
        %v1399 = vrot.slane %v509, %v1398
        %v1404 = vunpack.c.l.b16 %v1265
        %v1405 = vunpack.c.l.b16 %v1266
        %v1406 = vunpack.c.l.b16 %v1267
        %v1407 = vunpack.c.l.b16 %v1268
        %v1408 = vpack.c.b16 %v1405, %v1404
        %v1409 = vpack.c.b16 %v1407, %v1406
        %v1413 = vsel %vm549, %v1276, 0
        %1415 = vmatprep.subr.bf16.mxu0 0
        %1416 = vmatpush1.bf16.msra.mxu0 %v1408
        %1417 = vmatprep.subr.bf16.mxu0 0
        %1418 = vmatpush1.bf16.msra.mxu0 %v1409
        %1419 = vmatprep.subr.bf16.mxu0 0
        %1420 = vmatpush1.bf16.msra.mxu0 0
        %1421 = vmatprep.subr.bf16.mxu0 0
        %1422 = vmatpush1.bf16.msra.mxu0 0
        %1423 = vmatprep.subr.bf16.mxu0 0
        %1424 = vmatpush1.bf16.msra.mxu0 0
        %1425 = vmatprep.subr.bf16.mxu0 0
        %1426 = vmatpush1.bf16.msra.mxu0 0
        %1427 = vmatprep.subr.bf16.mxu0 0
        %1428 = vmatpush1.bf16.msra.mxu0 0
        %1429 = vmatprep.subr.bf16.mxu0 0
        %1430 = vmatpush1.bf16.msra.mxu0 0
        %1431 = vmatprep.subr.bf16.mxu0 0
        %1432 = vmatpush1.bf16.msra.mxu0 0
        %1433 = vmatprep.subr.bf16.mxu0 0
        %1434 = vmatpush1.bf16.msra.mxu0 0
        %1435 = vmatprep.subr.bf16.mxu0 0
        %1436 = vmatpush1.bf16.msra.mxu0 0
        %1437 = vmatprep.subr.bf16.mxu0 0
        %1438 = vmatpush1.bf16.msra.mxu0 0
        %1439 = vmatprep.subr.bf16.mxu0 0
        %1440 = vmatpush1.bf16.msra.mxu0 0
        %1441 = vmatprep.subr.bf16.mxu0 0
        %1442 = vmatpush1.bf16.msra.mxu0 0
        %1443 = vmatprep.subr.bf16.mxu0 0
        %1444 = vmatpush1.bf16.msra.mxu0 0
        %1445 = vmatprep.subr.bf16.mxu0 0
        %1446 = vmatpush1.bf16.msra.mxu0 0
        %1447 = vmatprep.mubr.bf16.mxu0 0
        %1448 = vmatmul.mubr.bf16.gmra.mrb[0].mxu0 %v1413
        %v1449 = vpop.f32.mrb[0].mxu0
        %v1450 = vadd.f32 %v1399, %v1449
        %v1451 = vpop.f32.mrb[0].mxu0
        %v1452 = vpop.f32.mrb[0].mxu0
        %v1453 = vpop.f32.mrb[0].mxu0
        %1454 = vdwg.mxu0
        %v1455 = vpack.c.bf16 %v1336, %v1336
        %v1456 = vpack.c.bf16 %v1391, %v1391
        %v1457 = vpack.c.bf16 %v1450, %v1450
        %v1459 = vsel %vm712, %v1455, 0
        %v1462 = vsel %vm712, %v1456, 0
        %1464 = vmatprep.subr.bf16.mxu0 0
        %1465 = vmatpush1.bf16.xpose.msra.mxu0 %v1462
        %1466 = vmatprep.subr.bf16.mxu0 0
        %1467 = vmatpush1.bf16.xpose.msra.mxu0 0
        %1468 = vmatprep.subr.bf16.mxu0 0
        %1469 = vmatpush1.bf16.xpose.msra.mxu0 0
        %1470 = vmatprep.subr.bf16.mxu0 0
        %1471 = vmatpush1.bf16.xpose.msra.mxu0 0
        %1472 = vmatprep.subr.bf16.mxu0 0
        %1473 = vmatpush1.bf16.xpose.msra.mxu0 0
        %1474 = vmatprep.subr.bf16.mxu0 0
        %1475 = vmatpush1.bf16.xpose.msra.mxu0 0
        %1476 = vmatprep.subr.bf16.mxu0 0
        %1477 = vmatpush1.bf16.xpose.msra.mxu0 0
        %1478 = vmatprep.subr.bf16.mxu0 0
        %1479 = vmatpush1.bf16.xpose.msra.mxu0 0
        %1480 = vmatprep.subr.bf16.mxu0 0
        %1481 = vmatpush1.bf16.xpose.msra.mxu0 0
        %1482 = vmatprep.subr.bf16.mxu0 0
        %1483 = vmatpush1.bf16.xpose.msra.mxu0 0
        %1484 = vmatprep.subr.bf16.mxu0 0
        %1485 = vmatpush1.bf16.xpose.msra.mxu0 0
        %1486 = vmatprep.subr.bf16.mxu0 0
        %1487 = vmatpush1.bf16.xpose.msra.mxu0 0
        %1488 = vmatprep.subr.bf16.mxu0 0
        %1489 = vmatpush1.bf16.xpose.msra.mxu0 0
        %1490 = vmatprep.subr.bf16.mxu0 0
        %1491 = vmatpush1.bf16.xpose.msra.mxu0 0
        %1492 = vmatprep.subr.bf16.mxu0 0
        %1493 = vmatpush1.bf16.xpose.msra.mxu0 0
        %1494 = vmatprep.subr.bf16.mxu0 0
        %1495 = vmatpush1.bf16.xpose.msra.mxu0 0
        %1496 = vmatprep.mubr.bf16.mxu0 0
        %1497 = vmatmul.mubr.bf16.gmra.mrb[0].mxu0 %v1459
        %v1498 = vpop.f32.mrb[0].mxu0
        %v1499 = vadd.f32 0.0, %v1498
        %v1500 = vpop.f32.mrb[0].mxu0
        %v1501 = vpop.f32.mrb[0].mxu0
        %v1502 = vpop.f32.mrb[0].mxu0
        %1503 = vdwg.mxu0
        %v1504 = vsel %vm712, %v1499, -inf
        %1505 = vmax.xlane.f32.xlu0 %v1504
        %v1506 = vpop.xlane.xlu0 %1505
        %v1507 = vsub.f32 %v1499, %v1506
        %v1508 = vmul.f32 %v1507, 1.442695
        %v1509 = vpow.pop %v1508
        %v1510 = vsel %vm712, %v1509, 0.0
        %1511 = vadd.xlane.f32.xlu0 %v1510
        %v1512 = vpop.xlane.xlu0 %1511
        %v1513 = vrcp.pop %v1512
        %v1514 = vmul.f32 %v1509, %v1513
        %v1515 = vpack.c.bf16 %v1514, %v1514
        %v1517 = vsel %vm712, %v1515, 0
        %v1520 = vsel %vm774, %v1457, 0
        %1522 = vmatprep.subr.bf16.mxu0 0
        %1523 = vmatpush1.bf16.msra.mxu0 %v1520
        %1524 = vmatprep.subr.bf16.mxu0 0
        %1525 = vmatpush1.bf16.msra.mxu0 0
        %1526 = vmatprep.subr.bf16.mxu0 0
        %1527 = vmatpush1.bf16.msra.mxu0 0
        %1528 = vmatprep.subr.bf16.mxu0 0
        %1529 = vmatpush1.bf16.msra.mxu0 0
        %1530 = vmatprep.subr.bf16.mxu0 0
        %1531 = vmatpush1.bf16.msra.mxu0 0
        %1532 = vmatprep.subr.bf16.mxu0 0
        %1533 = vmatpush1.bf16.msra.mxu0 0
        %1534 = vmatprep.subr.bf16.mxu0 0
        %1535 = vmatpush1.bf16.msra.mxu0 0
        %1536 = vmatprep.subr.bf16.mxu0 0
        %1537 = vmatpush1.bf16.msra.mxu0 0
        %1538 = vmatprep.subr.bf16.mxu0 0
        %1539 = vmatpush1.bf16.msra.mxu0 0
        %1540 = vmatprep.subr.bf16.mxu0 0
        %1541 = vmatpush1.bf16.msra.mxu0 0
        %1542 = vmatprep.subr.bf16.mxu0 0
        %1543 = vmatpush1.bf16.msra.mxu0 0
        %1544 = vmatprep.subr.bf16.mxu0 0
        %1545 = vmatpush1.bf16.msra.mxu0 0
        %1546 = vmatprep.subr.bf16.mxu0 0
        %1547 = vmatpush1.bf16.msra.mxu0 0
        %1548 = vmatprep.subr.bf16.mxu0 0
        %1549 = vmatpush1.bf16.msra.mxu0 0
        %1550 = vmatprep.subr.bf16.mxu0 0
        %1551 = vmatpush1.bf16.msra.mxu0 0
        %1552 = vmatprep.subr.bf16.mxu0 0
        %1553 = vmatpush1.bf16.msra.mxu0 0
        %1554 = vmatprep.mubr.bf16.mxu0 0
        %1555 = vmatmul.mubr.bf16.gmra.mrb[0].mxu0 %v1517
        %v1556 = vpop.f32.mrb[0].mxu0
        %v1557 = vadd.f32 0.0, %v1556
        %v1558 = vpop.f32.mrb[0].mxu0
        %v1559 = vpop.f32.mrb[0].mxu0
        %v1560 = vpop.f32.mrb[0].mxu0
        %1561 = vdwg.mxu0
        %1563 = vrot.lane.b32.xlu0 %v1455, 120
        %v1564 = vpop.permute.xlu0 %1563
        %1566 = vrot.lane.b32.xlu0 %v1456, 120
        %v1567 = vpop.permute.xlu0 %1566
        %v1569 = vsel %vm712, %v1564, 0
        %v1572 = vsel %vm712, %v1567, 0
        %1574 = vmatprep.subr.bf16.mxu0 0
        %1575 = vmatpush1.bf16.xpose.msra.mxu0 %v1572
        %1576 = vmatprep.subr.bf16.mxu0 0
        %1577 = vmatpush1.bf16.xpose.msra.mxu0 0
        %1578 = vmatprep.subr.bf16.mxu0 0
        %1579 = vmatpush1.bf16.xpose.msra.mxu0 0
        %1580 = vmatprep.subr.bf16.mxu0 0
        %1581 = vmatpush1.bf16.xpose.msra.mxu0 0
        %1582 = vmatprep.subr.bf16.mxu0 0
        %1583 = vmatpush1.bf16.xpose.msra.mxu0 0
        %1584 = vmatprep.subr.bf16.mxu0 0
        %1585 = vmatpush1.bf16.xpose.msra.mxu0 0
        %1586 = vmatprep.subr.bf16.mxu0 0
        %1587 = vmatpush1.bf16.xpose.msra.mxu0 0
        %1588 = vmatprep.subr.bf16.mxu0 0
        %1589 = vmatpush1.bf16.xpose.msra.mxu0 0
        %1590 = vmatprep.subr.bf16.mxu0 0
        %1591 = vmatpush1.bf16.xpose.msra.mxu0 0
        %1592 = vmatprep.subr.bf16.mxu0 0
        %1593 = vmatpush1.bf16.xpose.msra.mxu0 0
        %1594 = vmatprep.subr.bf16.mxu0 0
        %1595 = vmatpush1.bf16.xpose.msra.mxu0 0
        %1596 = vmatprep.subr.bf16.mxu0 0
        %1597 = vmatpush1.bf16.xpose.msra.mxu0 0
        %1598 = vmatprep.subr.bf16.mxu0 0
        %1599 = vmatpush1.bf16.xpose.msra.mxu0 0
        %1600 = vmatprep.subr.bf16.mxu0 0
        %1601 = vmatpush1.bf16.xpose.msra.mxu0 0
        %1602 = vmatprep.subr.bf16.mxu0 0
        %1603 = vmatpush1.bf16.xpose.msra.mxu0 0
        %1604 = vmatprep.subr.bf16.mxu0 0
        %1605 = vmatpush1.bf16.xpose.msra.mxu0 0
        %1606 = vmatprep.mubr.bf16.mxu0 0
        %1607 = vmatmul.mubr.bf16.gmra.mrb[0].mxu0 %v1569
        %v1608 = vpop.f32.mrb[0].mxu0
        %v1609 = vadd.f32 0.0, %v1608
        %v1610 = vpop.f32.mrb[0].mxu0
        %v1611 = vpop.f32.mrb[0].mxu0
        %v1612 = vpop.f32.mrb[0].mxu0
        %1613 = vdwg.mxu0
        %v1614 = vsel %vm712, %v1609, -inf
        %1615 = vmax.xlane.f32.xlu0 %v1614
        %v1616 = vpop.xlane.xlu0 %1615
        %v1617 = vsub.f32 %v1609, %v1616
        %v1618 = vmul.f32 %v1617, 1.442695
        %v1619 = vpow.pop %v1618
        %v1620 = vsel %vm712, %v1619, 0.0
        %1621 = vadd.xlane.f32.xlu0 %v1620
        %v1622 = vpop.xlane.xlu0 %1621
        %v1623 = vrcp.pop %v1622
        %v1624 = vmul.f32 %v1619, %v1623
        %v1625 = vpack.c.bf16 %v1624, %v1624
        %1627 = vrot.lane.b32.xlu0 %v1457, 120
        %v1628 = vpop.permute.xlu0 %1627
        %v1630 = vsel %vm712, %v1625, 0
        %v1633 = vsel %vm774, %v1628, 0
        %1635 = vmatprep.subr.bf16.mxu0 0
        %1636 = vmatpush1.bf16.msra.mxu0 %v1633
        %1637 = vmatprep.subr.bf16.mxu0 0
        %1638 = vmatpush1.bf16.msra.mxu0 0
        %1639 = vmatprep.subr.bf16.mxu0 0
        %1640 = vmatpush1.bf16.msra.mxu0 0
        %1641 = vmatprep.subr.bf16.mxu0 0
        %1642 = vmatpush1.bf16.msra.mxu0 0
        %1643 = vmatprep.subr.bf16.mxu0 0
        %1644 = vmatpush1.bf16.msra.mxu0 0
        %1645 = vmatprep.subr.bf16.mxu0 0
        %1646 = vmatpush1.bf16.msra.mxu0 0
        %1647 = vmatprep.subr.bf16.mxu0 0
        %1648 = vmatpush1.bf16.msra.mxu0 0
        %1649 = vmatprep.subr.bf16.mxu0 0
        %1650 = vmatpush1.bf16.msra.mxu0 0
        %1651 = vmatprep.subr.bf16.mxu0 0
        %1652 = vmatpush1.bf16.msra.mxu0 0
        %1653 = vmatprep.subr.bf16.mxu0 0
        %1654 = vmatpush1.bf16.msra.mxu0 0
        %1655 = vmatprep.subr.bf16.mxu0 0
        %1656 = vmatpush1.bf16.msra.mxu0 0
        %1657 = vmatprep.subr.bf16.mxu0 0
        %1658 = vmatpush1.bf16.msra.mxu0 0
        %1659 = vmatprep.subr.bf16.mxu0 0
        %1660 = vmatpush1.bf16.msra.mxu0 0
        %1661 = vmatprep.subr.bf16.mxu0 0
        %1662 = vmatpush1.bf16.msra.mxu0 0
        %1663 = vmatprep.subr.bf16.mxu0 0
        %1664 = vmatpush1.bf16.msra.mxu0 0
        %1665 = vmatprep.subr.bf16.mxu0 0
        %1666 = vmatpush1.bf16.msra.mxu0 0
        %1667 = vmatprep.mubr.bf16.mxu0 0
        %1668 = vmatmul.mubr.bf16.gmra.mrb[0].mxu0 %v1630
        %v1669 = vpop.f32.mrb[0].mxu0
        %v1670 = vadd.f32 0.0, %v1669
        %v1671 = vpop.f32.mrb[0].mxu0
        %v1672 = vpop.f32.mrb[0].mxu0
        %v1673 = vpop.f32.mrb[0].mxu0
        %1674 = vdwg.mxu0
        %1675 = vrot.lane.b32.xlu0 %v1455, 112
        %v1676 = vpop.permute.xlu0 %1675
        %1677 = vrot.lane.b32.xlu0 %v1456, 112
        %v1678 = vpop.permute.xlu0 %1677
        %v1680 = vsel %vm712, %v1676, 0
        %v1683 = vsel %vm712, %v1678, 0
        %1685 = vmatprep.subr.bf16.mxu0 0
        %1686 = vmatpush1.bf16.xpose.msra.mxu0 %v1683
        %1687 = vmatprep.subr.bf16.mxu0 0
        %1688 = vmatpush1.bf16.xpose.msra.mxu0 0
        %1689 = vmatprep.subr.bf16.mxu0 0
        %1690 = vmatpush1.bf16.xpose.msra.mxu0 0
        %1691 = vmatprep.subr.bf16.mxu0 0
        %1692 = vmatpush1.bf16.xpose.msra.mxu0 0
        %1693 = vmatprep.subr.bf16.mxu0 0
        %1694 = vmatpush1.bf16.xpose.msra.mxu0 0
        %1695 = vmatprep.subr.bf16.mxu0 0
        %1696 = vmatpush1.bf16.xpose.msra.mxu0 0
        %1697 = vmatprep.subr.bf16.mxu0 0
        %1698 = vmatpush1.bf16.xpose.msra.mxu0 0
        %1699 = vmatprep.subr.bf16.mxu0 0
        %1700 = vmatpush1.bf16.xpose.msra.mxu0 0
        %1701 = vmatprep.subr.bf16.mxu0 0
        %1702 = vmatpush1.bf16.xpose.msra.mxu0 0
        %1703 = vmatprep.subr.bf16.mxu0 0
        %1704 = vmatpush1.bf16.xpose.msra.mxu0 0
        %1705 = vmatprep.subr.bf16.mxu0 0
        %1706 = vmatpush1.bf16.xpose.msra.mxu0 0
        %1707 = vmatprep.subr.bf16.mxu0 0
        %1708 = vmatpush1.bf16.xpose.msra.mxu0 0
        %1709 = vmatprep.subr.bf16.mxu0 0
        %1710 = vmatpush1.bf16.xpose.msra.mxu0 0
        %1711 = vmatprep.subr.bf16.mxu0 0
        %1712 = vmatpush1.bf16.xpose.msra.mxu0 0
        %1713 = vmatprep.subr.bf16.mxu0 0
        %1714 = vmatpush1.bf16.xpose.msra.mxu0 0
        %1715 = vmatprep.subr.bf16.mxu0 0
        %1716 = vmatpush1.bf16.xpose.msra.mxu0 0
        %1717 = vmatprep.mubr.bf16.mxu0 0
        %1718 = vmatmul.mubr.bf16.gmra.mrb[0].mxu0 %v1680
        %v1719 = vpop.f32.mrb[0].mxu0
        %v1720 = vadd.f32 0.0, %v1719
        %v1721 = vpop.f32.mrb[0].mxu0
        %v1722 = vpop.f32.mrb[0].mxu0
        %v1723 = vpop.f32.mrb[0].mxu0
        %1724 = vdwg.mxu0
        %v1725 = vsel %vm712, %v1720, -inf
        %1726 = vmax.xlane.f32.xlu0 %v1725
        %v1727 = vpop.xlane.xlu0 %1726
        %v1728 = vsub.f32 %v1720, %v1727
        %v1729 = vmul.f32 %v1728, 1.442695
        %v1730 = vpow.pop %v1729
        %v1731 = vsel %vm712, %v1730, 0.0
        %1732 = vadd.xlane.f32.xlu0 %v1731
        %v1733 = vpop.xlane.xlu0 %1732
        %v1734 = vrcp.pop %v1733
        %v1735 = vmul.f32 %v1730, %v1734
        %v1736 = vpack.c.bf16 %v1735, %v1735
        %1737 = vrot.lane.b32.xlu0 %v1457, 112
        %v1738 = vpop.permute.xlu0 %1737
        %v1740 = vsel %vm712, %v1736, 0
        %v1743 = vsel %vm774, %v1738, 0
        %1745 = vmatprep.subr.bf16.mxu0 0
        %1746 = vmatpush1.bf16.msra.mxu0 %v1743
        %1747 = vmatprep.subr.bf16.mxu0 0
        %1748 = vmatpush1.bf16.msra.mxu0 0
        %1749 = vmatprep.subr.bf16.mxu0 0
        %1750 = vmatpush1.bf16.msra.mxu0 0
        %1751 = vmatprep.subr.bf16.mxu0 0
        %1752 = vmatpush1.bf16.msra.mxu0 0
        %1753 = vmatprep.subr.bf16.mxu0 0
        %1754 = vmatpush1.bf16.msra.mxu0 0
        %1755 = vmatprep.subr.bf16.mxu0 0
        %1756 = vmatpush1.bf16.msra.mxu0 0
        %1757 = vmatprep.subr.bf16.mxu0 0
        %1758 = vmatpush1.bf16.msra.mxu0 0
        %1759 = vmatprep.subr.bf16.mxu0 0
        %1760 = vmatpush1.bf16.msra.mxu0 0
        %1761 = vmatprep.subr.bf16.mxu0 0
        %1762 = vmatpush1.bf16.msra.mxu0 0
        %1763 = vmatprep.subr.bf16.mxu0 0
        %1764 = vmatpush1.bf16.msra.mxu0 0
        %1765 = vmatprep.subr.bf16.mxu0 0
        %1766 = vmatpush1.bf16.msra.mxu0 0
        %1767 = vmatprep.subr.bf16.mxu0 0
        %1768 = vmatpush1.bf16.msra.mxu0 0
        %1769 = vmatprep.subr.bf16.mxu0 0
        %1770 = vmatpush1.bf16.msra.mxu0 0
        %1771 = vmatprep.subr.bf16.mxu0 0
        %1772 = vmatpush1.bf16.msra.mxu0 0
        %1773 = vmatprep.subr.bf16.mxu0 0
        %1774 = vmatpush1.bf16.msra.mxu0 0
        %1775 = vmatprep.subr.bf16.mxu0 0
        %1776 = vmatpush1.bf16.msra.mxu0 0
        %1777 = vmatprep.mubr.bf16.mxu0 0
        %1778 = vmatmul.mubr.bf16.gmra.mrb[0].mxu0 %v1740
        %v1779 = vpop.f32.mrb[0].mxu0
        %v1780 = vadd.f32 0.0, %v1779
        %v1781 = vpop.f32.mrb[0].mxu0
        %v1782 = vpop.f32.mrb[0].mxu0
        %v1783 = vpop.f32.mrb[0].mxu0
        %1784 = vdwg.mxu0
        %1785 = vrot.lane.b32.xlu0 %v1455, 104
        %v1786 = vpop.permute.xlu0 %1785
        %1787 = vrot.lane.b32.xlu0 %v1456, 104
        %v1788 = vpop.permute.xlu0 %1787
        %v1790 = vsel %vm712, %v1786, 0
        %v1793 = vsel %vm712, %v1788, 0
        %1795 = vmatprep.subr.bf16.mxu0 0
        %1796 = vmatpush1.bf16.xpose.msra.mxu0 %v1793
        %1797 = vmatprep.subr.bf16.mxu0 0
        %1798 = vmatpush1.bf16.xpose.msra.mxu0 0
        %1799 = vmatprep.subr.bf16.mxu0 0
        %1800 = vmatpush1.bf16.xpose.msra.mxu0 0
        %1801 = vmatprep.subr.bf16.mxu0 0
        %1802 = vmatpush1.bf16.xpose.msra.mxu0 0
        %1803 = vmatprep.subr.bf16.mxu0 0
        %1804 = vmatpush1.bf16.xpose.msra.mxu0 0
        %1805 = vmatprep.subr.bf16.mxu0 0
        %1806 = vmatpush1.bf16.xpose.msra.mxu0 0
        %1807 = vmatprep.subr.bf16.mxu0 0
        %1808 = vmatpush1.bf16.xpose.msra.mxu0 0
        %1809 = vmatprep.subr.bf16.mxu0 0
        %1810 = vmatpush1.bf16.xpose.msra.mxu0 0
        %1811 = vmatprep.subr.bf16.mxu0 0
        %1812 = vmatpush1.bf16.xpose.msra.mxu0 0
        %1813 = vmatprep.subr.bf16.mxu0 0
        %1814 = vmatpush1.bf16.xpose.msra.mxu0 0
        %1815 = vmatprep.subr.bf16.mxu0 0
        %1816 = vmatpush1.bf16.xpose.msra.mxu0 0
        %1817 = vmatprep.subr.bf16.mxu0 0
        %1818 = vmatpush1.bf16.xpose.msra.mxu0 0
        %1819 = vmatprep.subr.bf16.mxu0 0
        %1820 = vmatpush1.bf16.xpose.msra.mxu0 0
        %1821 = vmatprep.subr.bf16.mxu0 0
        %1822 = vmatpush1.bf16.xpose.msra.mxu0 0
        %1823 = vmatprep.subr.bf16.mxu0 0
        %1824 = vmatpush1.bf16.xpose.msra.mxu0 0
        %1825 = vmatprep.subr.bf16.mxu0 0
        %1826 = vmatpush1.bf16.xpose.msra.mxu0 0
        %1827 = vmatprep.mubr.bf16.mxu0 0
        %1828 = vmatmul.mubr.bf16.gmra.mrb[0].mxu0 %v1790
        %v1829 = vpop.f32.mrb[0].mxu0
        %v1830 = vadd.f32 0.0, %v1829
        %v1831 = vpop.f32.mrb[0].mxu0
        %v1832 = vpop.f32.mrb[0].mxu0
        %v1833 = vpop.f32.mrb[0].mxu0
        %1834 = vdwg.mxu0
        %v1835 = vsel %vm712, %v1830, -inf
        %1836 = vmax.xlane.f32.xlu0 %v1835
        %v1837 = vpop.xlane.xlu0 %1836
        %v1838 = vsub.f32 %v1830, %v1837
        %v1839 = vmul.f32 %v1838, 1.442695
        %v1840 = vpow.pop %v1839
        %v1841 = vsel %vm712, %v1840, 0.0
        %1842 = vadd.xlane.f32.xlu0 %v1841
        %v1843 = vpop.xlane.xlu0 %1842
        %v1844 = vrcp.pop %v1843
        %v1845 = vmul.f32 %v1840, %v1844
        %v1846 = vpack.c.bf16 %v1845, %v1845
        %1847 = vrot.lane.b32.xlu0 %v1457, 104
        %v1848 = vpop.permute.xlu0 %1847
        %v1850 = vsel %vm712, %v1846, 0
        %v1853 = vsel %vm774, %v1848, 0
        %1855 = vmatprep.subr.bf16.mxu0 0
        %1856 = vmatpush1.bf16.msra.mxu0 %v1853
        %1857 = vmatprep.subr.bf16.mxu0 0
        %1858 = vmatpush1.bf16.msra.mxu0 0
        %1859 = vmatprep.subr.bf16.mxu0 0
        %1860 = vmatpush1.bf16.msra.mxu0 0
        %1861 = vmatprep.subr.bf16.mxu0 0
        %1862 = vmatpush1.bf16.msra.mxu0 0
        %1863 = vmatprep.subr.bf16.mxu0 0
        %1864 = vmatpush1.bf16.msra.mxu0 0
        %1865 = vmatprep.subr.bf16.mxu0 0
        %1866 = vmatpush1.bf16.msra.mxu0 0
        %1867 = vmatprep.subr.bf16.mxu0 0
        %1868 = vmatpush1.bf16.msra.mxu0 0
        %1869 = vmatprep.subr.bf16.mxu0 0
        %1870 = vmatpush1.bf16.msra.mxu0 0
        %1871 = vmatprep.subr.bf16.mxu0 0
        %1872 = vmatpush1.bf16.msra.mxu0 0
        %1873 = vmatprep.subr.bf16.mxu0 0
        %1874 = vmatpush1.bf16.msra.mxu0 0
        %1875 = vmatprep.subr.bf16.mxu0 0
        %1876 = vmatpush1.bf16.msra.mxu0 0
        %1877 = vmatprep.subr.bf16.mxu0 0
        %1878 = vmatpush1.bf16.msra.mxu0 0
        %1879 = vmatprep.subr.bf16.mxu0 0
        %1880 = vmatpush1.bf16.msra.mxu0 0
        %1881 = vmatprep.subr.bf16.mxu0 0
        %1882 = vmatpush1.bf16.msra.mxu0 0
        %1883 = vmatprep.subr.bf16.mxu0 0
        %1884 = vmatpush1.bf16.msra.mxu0 0
        %1885 = vmatprep.subr.bf16.mxu0 0
        %1886 = vmatpush1.bf16.msra.mxu0 0
        %1887 = vmatprep.mubr.bf16.mxu0 0
        %1888 = vmatmul.mubr.bf16.gmra.mrb[0].mxu0 %v1850
        %v1889 = vpop.f32.mrb[0].mxu0
        %v1890 = vadd.f32 0.0, %v1889
        %v1891 = vpop.f32.mrb[0].mxu0
        %v1892 = vpop.f32.mrb[0].mxu0
        %v1893 = vpop.f32.mrb[0].mxu0
        %1894 = vdwg.mxu0
        %1896 = vrot.lane.b32.xlu0 %v1670, 8
        %v1897 = vpop.permute.xlu0 %1896
        %1900 = vrot.lane.b32.xlu0 %v1780, 16
        %v1901 = vpop.permute.xlu0 %1900
        %1904 = vrot.lane.b32.xlu0 %v1890, 24
        %v1905 = vpop.permute.xlu0 %1904
        %v1907 = vsel %vm712, %v1557, %v1897
        %v1908 = vsel %vm1164, %v1907, %v1901
        %v1909 = vsel %vm1166, %v1908, %v1905
        %v1910 = vpack.c.bf16 %v1909, %v1909
        %v1911 = vlaneseq
        %v1912 = vshrl.u32 %v1911, 7
        %v1913 = vsub.s32 7, %v1912
        %v1914 = vrot.slane %v509, %v1913
        %v1919 = vunpack.c.l.b16 %v1270
        %v1920 = vunpack.c.l.b16 %v1271
        %v1921 = vunpack.c.l.b16 %v1272
        %v1922 = vunpack.c.l.b16 %v1273
        %v1923 = vpack.c.b16 %v1920, %v1919
        %v1924 = vpack.c.b16 %v1922, %v1921
        %v1928 = vsel %vm549, %v1910, 0
        %1930 = vmatprep.subr.bf16.mxu0 0
        %1931 = vmatpush1.bf16.msra.mxu0 %v1923
        %1932 = vmatprep.subr.bf16.mxu0 0
        %1933 = vmatpush1.bf16.msra.mxu0 %v1924
        %1934 = vmatprep.subr.bf16.mxu0 0
        %1935 = vmatpush1.bf16.msra.mxu0 0
        %1936 = vmatprep.subr.bf16.mxu0 0
        %1937 = vmatpush1.bf16.msra.mxu0 0
        %1938 = vmatprep.subr.bf16.mxu0 0
        %1939 = vmatpush1.bf16.msra.mxu0 0
        %1940 = vmatprep.subr.bf16.mxu0 0
        %1941 = vmatpush1.bf16.msra.mxu0 0
        %1942 = vmatprep.subr.bf16.mxu0 0
        %1943 = vmatpush1.bf16.msra.mxu0 0
        %1944 = vmatprep.subr.bf16.mxu0 0
        %1945 = vmatpush1.bf16.msra.mxu0 0
        %1946 = vmatprep.subr.bf16.mxu0 0
        %1947 = vmatpush1.bf16.msra.mxu0 0
        %1948 = vmatprep.subr.bf16.mxu0 0
        %1949 = vmatpush1.bf16.msra.mxu0 0
        %1950 = vmatprep.subr.bf16.mxu0 0
        %1951 = vmatpush1.bf16.msra.mxu0 0
        %1952 = vmatprep.subr.bf16.mxu0 0
        %1953 = vmatpush1.bf16.msra.mxu0 0
        %1954 = vmatprep.subr.bf16.mxu0 0
        %1955 = vmatpush1.bf16.msra.mxu0 0
        %1956 = vmatprep.subr.bf16.mxu0 0
        %1957 = vmatpush1.bf16.msra.mxu0 0
        %1958 = vmatprep.subr.bf16.mxu0 0
        %1959 = vmatpush1.bf16.msra.mxu0 0
        %1960 = vmatprep.subr.bf16.mxu0 0
        %1961 = vmatpush1.bf16.msra.mxu0 0
        %1962 = vmatprep.mubr.bf16.mxu0 0
        %1963 = vmatmul.mubr.bf16.gmra.mrb[0].mxu0 %v1928
        %v1964 = vpop.f32.mrb[0].mxu0
        %v1965 = vadd.f32 %v1914, %v1964
        %v1966 = vpop.f32.mrb[0].mxu0
        %v1967 = vpop.f32.mrb[0].mxu0
        %v1968 = vpop.f32.mrb[0].mxu0
        %1969 = vdwg.mxu0
        %v1970 = vadd.f32 %v1252, %v1965
        %v1971 = vsel %vm549, %v1970, 0.0
        %1972 = vadd.xlane.f32.xlu0 %v1971
        %v1973 = vpop.xlane.xlu0 %1972
        %v1974 = vmul.f32 %v1973, %v1232
        %v1975 = vsub.f32 %v1970, %v1974
        %v1976 = vmul.f32 %v1975, %v1975
        %v1977 = vsel %vm549, %v1976, 0.0
        %1978 = vadd.xlane.f32.xlu0 %v1977
        %v1979 = vpop.xlane.xlu0 %1978
        %v1980 = vmul.f32 %v1979, %v1232
        %v1981 = vadd.f32 %v1980, 1e-05
        %v1982 = vrsqrt.pop %v1981
        %v1983 = vmul.f32 %v1975, %v1982
        %v1984 = vlaneseq
        %v1985 = vshrl.u32 %v1984, 7
        %v1986 = vsub.s32 3, %v1985
        %v1987 = vrot.slane %v510, %v1986
        %v1988 = vmul.f32 %v1983, %v1987
        %v1989 = vlaneseq
        %v1990 = vshrl.u32 %v1989, 7
        %v1991 = vsub.s32 4, %v1990
        %v1992 = vrot.slane %v510, %v1991
        %v1993 = vadd.f32 %v1988, %v1992
        %v1994 = vpack.c.bf16 %v1993, %v1993
        %v1995 = vld [vmem:[%s489] sm:$0xf]
        %v1996 = vld [vmem:[%s489 + $0x4] sm:$0xf]
        %v1997 = vld [vmem:[%s489 + $0x8] sm:$0xf]
        %v1998 = vld [vmem:[%s489 + $0xc] sm:$0xf]
        %v1999 = vld [vmem:[%s492] sm:$0x1]
        %v2001 = vlaneseq
        %v2002 = vshrl.u32 %v2001, 7
        %v2003 = vsub.s32 0, %v2002
        %v2004 = vrot.slane %v1999, %v2003
        %v2010 = vunpack.c.l.b16 %v1995
        %v2011 = vunpack.c.l.b16 %v1996
        %v2012 = vunpack.c.l.b16 %v1997
        %v2013 = vunpack.c.l.b16 %v1998
        %v2014 = vpack.c.b16 %v2011, %v2010
        %v2015 = vpack.c.b16 %v2013, %v2012
        %v2019 = vsel %vm549, %v1994, 0
        %2021 = vmatprep.subr.bf16.mxu0 0
        %2022 = vmatpush1.bf16.msra.mxu0 %v2014
        %2023 = vmatprep.subr.bf16.mxu0 0
        %2024 = vmatpush1.bf16.msra.mxu0 %v2015
        %2025 = vmatprep.subr.bf16.mxu0 0
        %2026 = vmatpush1.bf16.msra.mxu0 0
        %2027 = vmatprep.subr.bf16.mxu0 0
        %2028 = vmatpush1.bf16.msra.mxu0 0
        %2029 = vmatprep.subr.bf16.mxu0 0
        %2030 = vmatpush1.bf16.msra.mxu0 0
        %2031 = vmatprep.subr.bf16.mxu0 0
        %2032 = vmatpush1.bf16.msra.mxu0 0
        %2033 = vmatprep.subr.bf16.mxu0 0
        %2034 = vmatpush1.bf16.msra.mxu0 0
        %2035 = vmatprep.subr.bf16.mxu0 0
        %2036 = vmatpush1.bf16.msra.mxu0 0
        %2037 = vmatprep.subr.bf16.mxu0 0
        %2038 = vmatpush1.bf16.msra.mxu0 0
        %2039 = vmatprep.subr.bf16.mxu0 0
        %2040 = vmatpush1.bf16.msra.mxu0 0
        %2041 = vmatprep.subr.bf16.mxu0 0
        %2042 = vmatpush1.bf16.msra.mxu0 0
        %2043 = vmatprep.subr.bf16.mxu0 0
        %2044 = vmatpush1.bf16.msra.mxu0 0
        %2045 = vmatprep.subr.bf16.mxu0 0
        %2046 = vmatpush1.bf16.msra.mxu0 0
        %2047 = vmatprep.subr.bf16.mxu0 0
        %2048 = vmatpush1.bf16.msra.mxu0 0
        %2049 = vmatprep.subr.bf16.mxu0 0
        %2050 = vmatpush1.bf16.msra.mxu0 0
        %2051 = vmatprep.subr.bf16.mxu0 0
        %2052 = vmatpush1.bf16.msra.mxu0 0
        %2053 = vmatprep.mubr.bf16.mxu0 0
        %2054 = vmatmul.mubr.bf16.gmra.mrb[0].mxu0 %v2019
        %v2055 = vpop.f32.mrb[0].mxu0
        %v2056 = vadd.f32 %v2004, %v2055
        %v2057 = vpop.f32.mrb[0].mxu0
        %v2058 = vpop.f32.mrb[0].mxu0
        %v2059 = vpop.f32.mrb[0].mxu0
        %2060 = vdwg.mxu0
        %v2061 = vmax.f32 %v2056, 0.0
        %v2062 = vpack.c.bf16 %v2061, %v2061
        %v2063 = vld [vmem:[%s497] sm:$0xf]
        %v2064 = vld [vmem:[%s497 + $0x4] sm:$0xf]
        %v2065 = vld [vmem:[%s497 + $0x8] sm:$0xf]
        %v2066 = vld [vmem:[%s497 + $0xc] sm:$0xf]
        %v2067 = vld [vmem:[%s497 + $0x10] sm:$0xf]
        %v2068 = vld [vmem:[%s497 + $0x14] sm:$0xf]
        %v2069 = vld [vmem:[%s497 + $0x18] sm:$0xf]
        %v2070 = vld [vmem:[%s497 + $0x1c] sm:$0xf]
        %v2071 = vlaneseq
        %v2072 = vshrl.u32 %v2071, 7
        %v2073 = vsub.s32 0, %v2072
        %v2074 = vrot.slane %v510, %v2073
        %v2083 = vunpack.c.l.b16 %v2063
        %v2084 = vunpack.c.l.b16 %v2064
        %v2085 = vunpack.c.l.b16 %v2065
        %v2086 = vunpack.c.l.b16 %v2066
        %v2087 = vunpack.c.l.b16 %v2067
        %v2088 = vunpack.c.l.b16 %v2068
        %v2089 = vunpack.c.l.b16 %v2069
        %v2090 = vunpack.c.l.b16 %v2070
        %v2091 = vpack.c.b16 %v2084, %v2083
        %v2092 = vpack.c.b16 %v2086, %v2085
        %v2093 = vpack.c.b16 %v2088, %v2087
        %v2094 = vpack.c.b16 %v2090, %v2089
        %vm2099 = vcmask 523264
        %v2101 = vsel %vm2099, %v2062, 0
        %2103 = vmatprep.subr.bf16.mxu0 0
        %2104 = vmatpush1.bf16.msra.mxu0 %v2091
        %2105 = vmatprep.subr.bf16.mxu0 0
        %2106 = vmatpush1.bf16.msra.mxu0 %v2092
        %2107 = vmatprep.subr.bf16.mxu0 0
        %2108 = vmatpush1.bf16.msra.mxu0 %v2093
        %2109 = vmatprep.subr.bf16.mxu0 0
        %2110 = vmatpush1.bf16.msra.mxu0 %v2094
        %2111 = vmatprep.subr.bf16.mxu0 0
        %2112 = vmatpush1.bf16.msra.mxu0 0
        %2113 = vmatprep.subr.bf16.mxu0 0
        %2114 = vmatpush1.bf16.msra.mxu0 0
        %2115 = vmatprep.subr.bf16.mxu0 0
        %2116 = vmatpush1.bf16.msra.mxu0 0
        %2117 = vmatprep.subr.bf16.mxu0 0
        %2118 = vmatpush1.bf16.msra.mxu0 0
        %2119 = vmatprep.subr.bf16.mxu0 0
        %2120 = vmatpush1.bf16.msra.mxu0 0
        %2121 = vmatprep.subr.bf16.mxu0 0
        %2122 = vmatpush1.bf16.msra.mxu0 0
        %2123 = vmatprep.subr.bf16.mxu0 0
        %2124 = vmatpush1.bf16.msra.mxu0 0
        %2125 = vmatprep.subr.bf16.mxu0 0
        %2126 = vmatpush1.bf16.msra.mxu0 0
        %2127 = vmatprep.subr.bf16.mxu0 0
        %2128 = vmatpush1.bf16.msra.mxu0 0
        %2129 = vmatprep.subr.bf16.mxu0 0
        %2130 = vmatpush1.bf16.msra.mxu0 0
        %2131 = vmatprep.subr.bf16.mxu0 0
        %2132 = vmatpush1.bf16.msra.mxu0 0
        %2133 = vmatprep.subr.bf16.mxu0 0
        %2134 = vmatpush1.bf16.msra.mxu0 0
        %2135 = vmatprep.mubr.bf16.mxu0 0
        %2136 = vmatmul.mubr.bf16.gmra.mrb[0].mxu0 %v2101
        %v2137 = vpop.f32.mrb[0].mxu0
        %v2138 = vadd.f32 %v2074, %v2137
        %v2139 = vpop.f32.mrb[0].mxu0
        %v2140 = vpop.f32.mrb[0].mxu0
        %v2141 = vpop.f32.mrb[0].mxu0
        %2142 = vdwg.mxu0
        %v2143 = vadd.f32 %v1993, %v2138
        %v2144 = vsel %vm549, %v2143, 0.0
        %2145 = vadd.xlane.f32.xlu0 %v2144
        %v2146 = vpop.xlane.xlu0 %2145
        %v2147 = vmul.f32 %v2146, %v1232
        %v2148 = vsub.f32 %v2143, %v2147
        %v2149 = vmul.f32 %v2148, %v2148
        %v2150 = vsel %vm549, %v2149, 0.0
        %2151 = vadd.xlane.f32.xlu0 %v2150
        %v2152 = vpop.xlane.xlu0 %2151
        %v2153 = vmul.f32 %v2152, %v1232
        %v2154 = vadd.f32 %v2153, 1e-05
        %v2155 = vrsqrt.pop %v2154
        %v2156 = vmul.f32 %v2148, %v2155
        %v2157 = vlaneseq
        %v2158 = vshrl.u32 %v2157, 7
        %v2159 = vsub.s32 5, %v2158
        %v2160 = vrot.slane %v510, %v2159
        %v2161 = vmul.f32 %v2156, %v2160
        %v2162 = vlaneseq
        %v2163 = vshrl.u32 %v2162, 7
        %v2164 = vsub.s32 6, %v2163
        %v2165 = vrot.slane %v510, %v2164
        %v2166 = vadd.f32 %v2161, %v2165
        %p2167 = scmp.lt.s32.totalorder %s29, 1
        // Predicated region
        $region65: #{transformer_forward.3} parent=59 // pred_check
          %p2168 = pneg %p2167
        $region66: #{transformer_forward.3} parent=59 // pred_check_branch
          %2170 = sbr.rel (%p2168) target = $region68
        $region67: #{transformer_forward.3} parent=59 // pred_region
          %2171 = vst.msk [vmem:[%s461] sm:$0xff] %vm549, %v2166
        $region68: #{transformer_forward.3} parent=59 // pred_fallthru
          _
        %p2172 = scmp.eq.s32.totalorder %s29, 1
        // Predicated region
        $region69: #{transformer_forward.3} parent=59 // pred_check
          %p2173 = pneg %p2172
        $region70: #{transformer_forward.3} parent=59 // pred_check_branch
          %2175 = sbr.rel (%p2173) target = $region72
        $region71: #{transformer_forward.3} parent=59 // pred_region
          %v2176 = vld [vmem:[%s9] sm:$0x3]
          %v2177 = vsel %vm549, %v2166, 0.0
          %2178 = vadd.xlane.f32.xlu0 %v2177
          %v2179 = vpop.xlane.xlu0 %2178
          %v2180 = vmul.f32 %v2179, %v1232
          %v2181 = vsub.f32 %v2166, %v2180
          %v2182 = vmul.f32 %v2181, %v2181
          %v2183 = vsel %vm549, %v2182, 0.0
          %2184 = vadd.xlane.f32.xlu0 %v2183
          %v2185 = vpop.xlane.xlu0 %2184
          %v2186 = vmul.f32 %v2185, %v1232
          %v2187 = vadd.f32 %v2186, 1e-05
          %v2188 = vrsqrt.pop %v2187
          %v2189 = vmul.f32 %v2181, %v2188
          %v2190 = vlaneseq
          %v2191 = vshrl.u32 %v2190, 7
          %v2192 = vsub.s32 0, %v2191
          %v2193 = vrot.slane %v2176, %v2192
          %v2194 = vmul.f32 %v2189, %v2193
          %v2195 = vlaneseq
          %v2196 = vshrl.u32 %v2195, 7
          %v2197 = vsub.s32 1, %v2196
          %v2198 = vrot.slane %v2176, %v2197
          %v2199 = vadd.f32 %v2194, %v2198
          %2200 = vst.msk [vmem:[%s461] sm:$0xff] %vm549, %v2199
        $region72: #{transformer_forward.3} parent=59 // pred_fallthru
          _
        %s2201 = sand.u32 %s294, 1
        %s2202 = scalar_lea.sflag [#allocation3], %s2201
        %s2203 = sand.u32 %s294, 1
        %s2204 = smul.addr %s2203, 8
        %s2205 = scalar_lea.vmem [#allocation2], %s2204
        // Predicated region
        $region73: #{transformer_forward.3} parent=59 // pred_check
          %p2206 = pneg %p304
        $region74: #{transformer_forward.3} parent=59 // pred_check_branch
          %2208 = sbr.rel (%p2206) target = $region76
        $region75: #{transformer_forward.3} parent=59 // pred_region
          %s2210 = ssub.s32 128, 128
          %2211 = vsyncadd %s2202, %s2210
          %s2212 = smul.addr %s28, 128
          %s2213 = scalar_lea.hbm %s10, %s2212
          %s2215 = sshll.u32 %s2205, 4
          %s2216 = int_to_ptr.vmem [resolvable:$true] %s2215
          %2218 = dma.vmem_to_hbm [thread:$0]  %s2216, 128, %s2213, %s2202
        $region76: #{transformer_forward.3} parent=59 // pred_fallthru
          _
      $region60: #{transformer_forward.3} parent=5 // pred_fallthru
        _
      %p2219 = scmp.le.s32.totalorder 2, %s19
      // Predicated region
      $region77: #{transformer_forward.3} parent=5 // pred_check
        %p2220 = pneg %p2219
      $region78: #{transformer_forward.3} parent=5 // pred_check_branch
        %2222 = sbr.rel (%p2220) target = $region80
      $region79: #{transformer_forward.3} parent=5 // pred_region
        %s2223 = ssub.s32 %s19, 2
        // Predicated region
        $region81: #{transformer_forward.3} parent=79 // pred_check
          %p2224 = pneg %p310
        $region82: #{transformer_forward.3} parent=79 // pred_check_branch
          %2226 = sbr.rel (%p2224) target = $region84
        $region83: #{transformer_forward.3} parent=79 // pred_region
          %s2227 = sand.u32 %s295, 1
          %s2228 = scalar_lea.sflag [#allocation3], %s2227
          %s2229 = sand.u32 %s295, 1
          %s2230 = smul.addr %s2229, 8
          %s2231 = scalar_lea.vmem [#allocation2], %s2230
          %2232 = dma.done %s2228, 128
        $region84: #{transformer_forward.3} parent=79 // pred_fallthru
          _
      $region80: #{transformer_forward.3} parent=5 // pred_fallthru
        _
    $region6: #{transformer_forward.3} parent=1 // loop_footer
      %s23 = sadd.s32 1, %s19
    $region7: #{transformer_forward.3} parent=1 // loop_footer_branch
      %18 = sbr.rel target = $region3
    $region8: #{transformer_forward.3} parent=1 // loop_exit
      _
    %2233 = vsyncpa [#allocation3], 1
    %s2234 = scalar_lea.sflag [#allocation3], 1
    %2235 = vsyncpa %s2234, 1

</llo_original>
